<compile_context>
chip_gen: v7x
topology: tpu7x:2x2x1
jax: 0.10.0
libtpu: 0.0.40
codegen_flags: <defaults>
</compile_context>

<pallas_src>
import functools

import jax
import jax.numpy as jnp
from jax import lax
from jax.experimental import pallas as pl
from jax.experimental.pallas import tpu as pltpu


# ------------------------- fused 3-layer LSTM + FC kernel -------------------------
def _fused_lstm_fc_kernel(len_ref, x_ref,
                          wih0_ref, whh0_ref, b0_ref,
                          w1_ref, b1_ref,
                          w2_ref, b2_ref,
                          wfc_ref, bfc_ref,
                          out_ref,
                          h0_sc, c0_sc, h1_sc, c1_sc, h2_sc, c2_sc, gx0_buf,
                          *, slope, time_chunk):
    """Grid = (batch_blocks, T // Tc). One grid step = Tc timesteps through all 3 layers.
    h/c states and all recurrent weights stay VMEM-resident across the whole sequence."""
    tc = pl.program_id(1)
    Tc = time_chunk
    Bb, H = h0_sc.shape
    G = 4 * H
    cdt = wih0_ref.dtype                          # MXU operand dtype (bf16 in production)

    @pl.when(tc == 0)
    def _():
        for s in (h0_sc, c0_sc, h1_sc, c1_sc, h2_sc, c2_sc):
            s[...] = jnp.zeros_like(s)

    # ---- layer-0 input projection, hoisted over the whole time chunk --------------
    # One MXU pass with M = Tc*Bb instead of Tc tiny per-step dots; bias folded in.
    x2d = x_ref[0]                                # [Tc*Bb, E], row r = s*Bb + j
    gx0_buf[...] = (jnp.dot(x2d, wih0_ref[...], preferred_element_type=jnp.float32)
                    + b0_ref[...])

    # ---- per-lane affine constants: a SINGLE tanh covers all four gates ------------
    # PyTorch gate order is (i, f, g, o); g uses tanh, the rest sigmoid, and
    # sigmoid(x) = 0.5*tanh(0.5*x)+0.5.  Hoisted out of the recurrence.
    lane = lax.broadcasted_iota(jnp.int32, (1, G), 1)
    is_g = (lane >= 2 * H) & (lane < 3 * H)
    ab_const = jnp.where(is_g, 1.0, 0.5).astype(jnp.float32)     # alpha == beta
    off_const = jnp.where(is_g, 0.0, 0.5).astype(jnp.float32)

    len_v = len_ref[...]                          # [Bb, 1] int32, resident per batch block

    def cell(gates, h_prev, c_prev, mask):
        act = ab_const * jnp.tanh(ab_const * gates) + off_const
        i = act[:, 0 * H:1 * H]
        f = act[:, 1 * H:2 * H]
        g = act[:, 2 * H:3 * H]
        o = act[:, 3 * H:4 * H]
        c_new = f * c_prev + i * g
        h_new = o * jnp.tanh(c_new)
        # packed-sequence semantics: freeze samples whose sequence already ended
        h_out = jnp.where(mask, h_new, h_prev)
        c_out = jnp.where(mask, c_new, c_prev)
        return h_out, c_out

    def step(s, carry):
        h0, c0, h1, c1, h2, c2 = carry
        mask = (tc * Tc + s) < len_v                              # [Bb, 1] bool

        # layer 0: input part precomputed per chunk; only the recurrent dot remains
        row0 = pl.multiple_of(s * Bb, Bb)
        g0 = (gx0_buf[pl.ds(row0, Bb), :]
              + jnp.dot(h0.astype(cdt), whh0_ref[...],
                        preferred_element_type=jnp.float32))
        h0, c0 = cell(g0, h0, c0, mask)

        # layers 1/2: input + recurrent dots fused into ONE concat-K matmul each
        g1 = (jnp.dot(jnp.concatenate([h0, h1], axis=1).astype(cdt), w1_ref[...],
                      preferred_element_type=jnp.float32) + b1_ref[...])
        h1, c1 = cell(g1, h1, c1, mask)

        g2 = (jnp.dot(jnp.concatenate([h1, h2], axis=1).astype(cdt), w2_ref[...],
                      preferred_element_type=jnp.float32) + b2_ref[...])
        h2, c2 = cell(g2, h2, c2, mask)
        return (h0, c0, h1, c1, h2, c2)

    carry0 = (h0_sc[...], c0_sc[...], h1_sc[...], c1_sc[...], h2_sc[...], c2_sc[...])
    h0, c0, h1, c1, h2, c2 = lax.fori_loop(0, Tc, step, carry0, unroll=True)

    h0_sc[...], c0_sc[...] = h0, c0
    h1_sc[...], c1_sc[...] = h1, c1
    h2_sc[...], c2_sc[...] = h2, c2

    # ---- fused FC + LeakyReLU on hn[-1], stored exactly once per batch block -------
    @pl.when(tc == pl.num_programs(1) - 1)
    def _():
        y = (jnp.dot(h2.astype(cdt), wfc_ref[...], preferred_element_type=jnp.float32)
             + bfc_ref[...])
        out_ref[...] = jnp.where(y >= 0.0, y, slope * y).astype(out_ref.dtype)


# --------------------------------- pallas_call wrapper ---------------------------------
def fused_lstm_fc_pallas(lengths_b1, x_blk, packed, *, slope=0.01,
                         time_chunk=8, weight_buffer_count=1):
    """lengths_b1: [B,1] int32 (B = batch_blocks*Bb, Bb % 8 == 0).
    x_blk: [batch_blocks, T*Bb, E] input, rows ordered (t, j) within each block.
    packed: kernel-ready weights from pack_params()."""
    nb, TBb, E = x_blk.shape
    B = lengths_b1.shape[0]
    assert B % nb == 0
    Bb = B // nb
    assert Bb % 8 == 0, "per-block batch must be a multiple of 8"
    T = TBb // Bb
    Tc = time_chunk
    assert T % Tc == 0
    n_chunks = T // Tc
    G = packed["whh0"].shape[1]
    H = G // 4
    C = packed["wfc"].shape[1]

    def wspec(shape):
        # whole-array, grid-constant weight/bias block
        idx = lambda b, t: (0,) * len(shape)
        if weight_buffer_count is None:
            return pl.BlockSpec(shape, idx)
        # single-buffer the VMEM-resident weights: no revolving is needed for constant
        # blocks, and it halves their VMEM footprint (matters on v7x: 64 MiB physical).
        return pl.BlockSpec(shape, idx, pipeline_mode=pl.Buffered(weight_buffer_count))

    grid_spec = pltpu.PrefetchScalarGridSpec(
        num_scalar_prefetch=0,
        grid=(nb, n_chunks),
        in_specs=[
            pl.BlockSpec((Bb, 1), lambda b, t: (b, 0)),            # lengths (per batch block)
            pl.BlockSpec((1, Tc * Bb, E), lambda b, t: (b, t, 0)), # x, streamed per time chunk
            wspec((E, G)),                                         # W_ih layer 0
            wspec((H, G)),                                         # W_hh layer 0
            wspec((1, G)),                                         # bias layer 0
            wspec((2 * H, G)),                                     # [W_ih; W_hh] layer 1
            wspec((1, G)),                                         # bias layer 1
            wspec((2 * H, G)),                                     # [W_ih; W_hh] layer 2
            wspec((1, G)),                                         # bias layer 2
            wspec((H, C)),                                         # FC weight
            wspec((1, C)),                                         # FC bias
        ],
        out_specs=pl.BlockSpec((Bb, C), lambda b, t: (b, 0)),      # logits (resident over t)
        scratch_shapes=[pltpu.VMEM((Bb, H), jnp.float32)] * 6      # h0,c0,h1,c1,h2,c2
                       + [pltpu.VMEM((Tc * Bb, G), jnp.float32)],  # per-chunk layer-0 gates
    )

    # Explicit scoped-VMEM budget: resident weights + streamed x chunk + scratch + headroom.
    cd_item = jnp.dtype(packed["wih0"].dtype).itemsize
    Ep, Gp, Cp, Hp = max(E, 128), max(G, 128), max(C, 128), max(H, 128)
    est = (2 * Tc * Bb * Ep * cd_item                       # x chunk (double-buffered)
           + 2 * ((E + 5 * H) * Gp + H * Cp) * cd_item      # weights (worst case 2 buffers)
           + 2 * 8 * (3 * Gp + Cp) * 4                      # biases (sublane-padded, f32)
           + (6 * Bb * Hp + Tc * Bb * Gp) * 4               # h/c + per-chunk gate scratch
           + 4 * Bb * 128 * 4)                              # lengths + logits blocks
    vmem_limit = int(min(max(2 * est, 32 * 1024 * 1024), 120 * 1024 * 1024))

    return pl.pallas_call(
        functools.partial(_fused_lstm_fc_kernel, slope=slope, time_chunk=Tc),
        out_shape=jax.ShapeDtypeStruct((B, C), jnp.float32),
        grid_spec=grid_spec,
        compiler_params=pltpu.CompilerParams(
            dimension_semantics=("parallel", "arbitrary"),
            vmem_limit_bytes=vmem_limit),
    )(lengths_b1, x_blk,
      packed["wih0"], packed["whh0"], packed["b0"],
      packed["w1"], packed["b1"], packed["w2"], packed["b2"],
      packed["wfc"], packed["bfc"])


# ------------------------------- parameter creation -------------------------------
def init_params(key, embedding_size, hidden_size, num_classes, num_layers=3):
    """Deterministic PyTorch-style uniform(-1/sqrt(H), 1/sqrt(H)) init (f32 master weights)."""
    k = 1.0 / jnp.sqrt(jnp.float32(hidden_size))
    params = {"lstm": []}
    for layer in range(num_layers):
        in_dim = embedding_size if layer == 0 else hidden_size
        key, k1, k2, k3, k4 = jax.random.split(key, 5)
        w_ih = jax.random.uniform(k1, (4 * hidden_size, in_dim), jnp.float32, -k, k)
        w_hh = jax.random.uniform(k2, (4 * hidden_size, hidden_size), jnp.float32, -k, k)
        b_ih = jax.random.uniform(k3, (4 * hidden_size,), jnp.float32, -k, k)
        b_hh = jax.random.uniform(k4, (4 * hidden_size,), jnp.float32, -k, k)
        params["lstm"].append({
            "w_ih_t": jnp.transpose(w_ih),                       # [in, 4H]
            "w_hh_t": jnp.transpose(w_hh),                       # [H, 4H]
            "bias": (b_ih + b_hh).reshape(1, 4 * hidden_size),   # combined bias, f32
        })
    key, k1, k2 = jax.random.split(key, 3)
    w_fc = jax.random.uniform(k1, (num_classes, hidden_size), jnp.float32, -k, k)
    b_fc = jax.random.uniform(k2, (num_classes,), jnp.float32, -k, k)
    params["fc_w_t"] = jnp.transpose(w_fc)                       # [H, C]
    params["fc_b"] = b_fc.reshape(1, num_classes)
    return params


def pack_params(params, compute_dtype=jnp.bfloat16):
    """Kernel-ready weights: transposed, concat-K fused for layers 1/2, MXU operand dtype."""
    l0, l1, l2 = params["lstm"]
    cd = compute_dtype
    return {
        "wih0": l0["w_ih_t"].astype(cd),
        "whh0": l0["w_hh_t"].astype(cd),
        "b0": l0["bias"],
        "w1": jnp.concatenate([l1["w_ih_t"], l1["w_hh_t"]], axis=0).astype(cd),  # [2H, 4H]
        "b1": l1["bias"],
        "w2": jnp.concatenate([l2["w_ih_t"], l2["w_hh_t"]], axis=0).astype(cd),  # [2H, 4H]
        "b2": l2["bias"],
        "wfc": params["fc_w_t"].astype(cd),
        "bfc": params["fc_b"],
    }


# ------------------------------------ forward ------------------------------------
def deepfake_lstm_forward(params, x_bte, lengths, *, batch_blocks=1, time_chunk=8,
                          compute_dtype=jnp.bfloat16):
    """x_bte: [B, T, E] padded sequences, lengths: [B] valid lengths.
    Use batch_blocks >= 2 on v7x so the parallel batch axis feeds both TensorCores."""
    B, T, E = x_bte.shape
    # Pad batch so every batch block is a multiple of 8 sublanes (padded rows have length 0).
    Bb = -(-B // batch_blocks)
    Bb = -(-Bb // 8) * 8
    B_pad = Bb * batch_blocks
    # Pad time to a multiple of the chunk; padded steps are frozen by the length mask.
    Tc = max(1, min(time_chunk, T))
    T_pad = -(-T // Tc) * Tc

    x = x_bte.astype(jnp.float32)
    if B_pad != B or T_pad != T:
        x = jnp.pad(x, ((0, B_pad - B), (0, T_pad - T), (0, 0)))
    lengths_p = jnp.pad(lengths.astype(jnp.int32), (0, B_pad - B)).reshape(-1, 1)

    # Per-batch-block, time-major layout (row index = t*Bb + j), MXU operand dtype.
    # This replaces the old [T, B, 4H] f32 HBM intermediate with streaming x itself.
    x_blk = (x.reshape(batch_blocks, Bb, T_pad, E)
               .transpose(0, 2, 1, 3)
               .reshape(batch_blocks, T_pad * Bb, E)
               .astype(compute_dtype))
    packed = pack_params(params, compute_dtype)

    try:
        out = fused_lstm_fc_pallas(lengths_p, x_blk, packed, slope=0.01,
                                   time_chunk=Tc, weight_buffer_count=1)
    except Exception:
        # TODO(synk): pl.Buffered(1) / BlockSpec pipeline_mode unsupported on this jax
        # version; fall back to default double-buffered weights (identical semantics).
        out = fused_lstm_fc_pallas(lengths_p, x_blk, packed, slope=0.01,
                                   time_chunk=Tc, weight_buffer_count=None)
    return out[:B]


# -------------------------------- pure-JAX reference -------------------------------
def _ref_lstm_layer(x_bte, lengths, w_ih_t, w_hh_t, bias, operand_dtype):
    B, T, _ = x_bte.shape
    H = w_hh_t.shape[0]
    od = operand_dtype
    w_ih = w_ih_t.astype(od)
    w_hh = w_hh_t.astype(od)

    def step(carry, t):
        h, c = carry
        x_t = x_bte[:, t, :]
        gates = (jnp.dot(x_t.astype(od), w_ih, preferred_element_type=jnp.float32)
                 + jnp.dot(h.astype(od), w_hh, preferred_element_type=jnp.float32)
                 + bias)
        i = jax.nn.sigmoid(gates[:, :H])
        f = jax.nn.sigmoid(gates[:, H:2 * H])
        g = jnp.tanh(gates[:, 2 * H:3 * H])
        o = jax.nn.sigmoid(gates[:, 3 * H:])
        c_new = f * c + i * g
        h_new = o * jnp.tanh(c_new)
        mask = (t < lengths)[:, None]
        h = jnp.where(mask, h_new, h)
        c = jnp.where(mask, c_new, c)
        return (h, c), h

    init = (jnp.zeros((B, H), jnp.float32), jnp.zeros((B, H), jnp.float32))
    (h, _), hs = lax.scan(step, init, jnp.arange(T))
    return jnp.transpose(hs, (1, 0, 2)), h


def deepfake_lstm_reference(params, x_bte, lengths, operand_dtype=jnp.float32):
    """operand_dtype=float32 -> true f32 semantics; bfloat16 -> mimics the kernel's
    bf16 MXU operands (f32 accumulation) so the kernel can be checked tightly."""
    inp = x_bte.astype(jnp.float32)
    h_final = None
    for lp in params["lstm"]:
        inp, h_final = _ref_lstm_layer(inp, lengths, lp["w_ih_t"], lp["w_hh_t"],
                                       lp["bias"], operand_dtype)
    od = operand_dtype
    y = (jnp.dot(h_final.astype(od), params["fc_w_t"].astype(od),
                 preferred_element_type=jnp.float32) + params["fc_b"])
    return jnp.where(y >= 0, y, 0.01 * y)


# -------------------------------------- main ---------------------------------------
if __name__ == "__main__":
    B, T, E, H, C = 4, 8, 16, 32, 2

    key = jax.random.PRNGKey(0)
    key_x, key_p = jax.random.split(key)
    x = jax.random.normal(key_x, (B, T, E), jnp.float32)          # padded sequences
    lengths = jnp.array([8, 5, 3, 6], dtype=jnp.int32)            # valid lengths
    params = init_params(key_p, E, H, C, num_layers=3)

    out = jax.block_until_ready(
        deepfake_lstm_forward(params, x, lengths, batch_blocks=1, time_chunk=4))
    assert out.shape == (B, C)

    # Tight check vs a reference that mimics the kernel's bf16 matmul operands.
    ref_bf16 = jax.block_until_ready(
        deepfake_lstm_reference(params, x, lengths, operand_dtype=jnp.bfloat16))
    assert jnp.allclose(out, ref_bf16, atol=1e-2, rtol=1e-2), (out, ref_bf16)
    # Loose check vs the true f32 reference (bounds the bf16 quantization error).
    ref_f32 = jax.block_until_ready(deepfake_lstm_reference(params, x, lengths))
    assert jnp.allclose(out, ref_f32, atol=1e-1, rtol=1e-1), (out, ref_f32)

    # Second config: multi-block batch (v7x megacore path) + T not a multiple of the chunk.
    B2, T2 = 16, 10
    x2 = jax.random.normal(jax.random.PRNGKey(1), (B2, T2, E), jnp.float32)
    lengths2 = jax.random.randint(jax.random.PRNGKey(2), (B2,), 1, T2 + 1).astype(jnp.int32)
    out2 = jax.block_until_ready(
        deepfake_lstm_forward(params, x2, lengths2, batch_blocks=2, time_chunk=4))
    assert out2.shape == (B2, C)
    ref2_bf16 = jax.block_until_ready(
        deepfake_lstm_reference(params, x2, lengths2, operand_dtype=jnp.bfloat16))
    assert jnp.allclose(out2, ref2_bf16, atol=1e-2, rtol=1e-2), (out2, ref2_bf16)
    ref2_f32 = jax.block_until_ready(deepfake_lstm_reference(params, x2, lengths2))
    assert jnp.allclose(out2, ref2_f32, atol=1e-1, rtol=1e-1), (out2, ref2_f32)

    print("KERNEL_OK")
</pallas_src>

<mosaic_0001>
module attributes {stable_mosaic.version = 11 : i64} {
  func.func @_fused_lstm_fc_kernel(%arg0: i32, %arg1: i32, %arg2: memref<8x1xi32, #tpu.memory_space<vmem>>, %arg3: memref<1x32x16xbf16, #tpu.memory_space<vmem>>, %arg4: memref<16x128xbf16, #tpu.memory_space<vmem>>, %arg5: memref<32x128xbf16, #tpu.memory_space<vmem>>, %arg6: memref<1x128xf32, #tpu.memory_space<vmem>>, %arg7: memref<64x128xbf16, #tpu.memory_space<vmem>>, %arg8: memref<1x128xf32, #tpu.memory_space<vmem>>, %arg9: memref<64x128xbf16, #tpu.memory_space<vmem>>, %arg10: memref<1x128xf32, #tpu.memory_space<vmem>>, %arg11: memref<32x2xbf16, #tpu.memory_space<vmem>>, %arg12: memref<1x2xf32, #tpu.memory_space<vmem>>, %arg13: memref<8x2xf32, #tpu.memory_space<vmem>>, %arg14: memref<8x32xf32, #tpu.memory_space<vmem>>, %arg15: memref<8x32xf32, #tpu.memory_space<vmem>>, %arg16: memref<8x32xf32, #tpu.memory_space<vmem>>, %arg17: memref<8x32xf32, #tpu.memory_space<vmem>>, %arg18: memref<8x32xf32, #tpu.memory_space<vmem>>, %arg19: memref<8x32xf32, #tpu.memory_space<vmem>>, %arg20: memref<32x128xf32, #tpu.memory_space<vmem>>) attributes {dimension_semantics = [#tpu.dimension_semantics<parallel>, #tpu.dimension_semantics<arbitrary>], iteration_bounds = array<i64: 1, 2>, scalar_prefetch = 0 : i64, scratch_operands = 7 : i64, tpu.core_type = #tpu.core_type<tc>, window_params = [{transform_indices = @transform_0, window_bounds = array<i64: 8, 1>}, {transform_indices = @transform_1, window_bounds = array<i64: 1, 32, 16>}, {pipeline_mode = #tpu.pipeline_mode<synchronous>, transform_indices = @transform_2, window_bounds = array<i64: 16, 128>}, {pipeline_mode = #tpu.pipeline_mode<synchronous>, transform_indices = @transform_3, window_bounds = array<i64: 32, 128>}, {pipeline_mode = #tpu.pipeline_mode<synchronous>, transform_indices = @transform_4, window_bounds = array<i64: 1, 128>}, {pipeline_mode = #tpu.pipeline_mode<synchronous>, transform_indices = @transform_5, window_bounds = array<i64: 64, 128>}, {pipeline_mode = #tpu.pipeline_mode<synchronous>, transform_indices = @transform_6, window_bounds = array<i64: 1, 128>}, {pipeline_mode = #tpu.pipeline_mode<synchronous>, transform_indices = @transform_7, window_bounds = array<i64: 64, 128>}, {pipeline_mode = #tpu.pipeline_mode<synchronous>, transform_indices = @transform_8, window_bounds = array<i64: 1, 128>}, {pipeline_mode = #tpu.pipeline_mode<synchronous>, transform_indices = @transform_9, window_bounds = array<i64: 32, 2>}, {pipeline_mode = #tpu.pipeline_mode<synchronous>, transform_indices = @transform_10, window_bounds = array<i64: 1, 2>}, {transform_indices = @transform_11, window_bounds = array<i64: 8, 2>}]} {
    %c0_i32 = arith.constant 0 : i32
    %0 = arith.cmpi eq, %arg1, %c0_i32 : i32
    %1 = arith.extui %0 : i1 to i32
    %c0_i32_0 = arith.constant 0 : i32
    %2 = arith.cmpi ne, %1, %c0_i32_0 : i32
    scf.if %2 {
      %cst_105 = arith.constant 0.000000e+00 : f32
      %407 = vector.broadcast %cst_105 : f32 to vector<8x32xf32>
      %c0_106 = arith.constant 0 : index
      %c0_107 = arith.constant 0 : index
      %408 = vector.load %arg14[%c0_106, %c0_107] : memref<8x32xf32, #tpu.memory_space<vmem>>, vector<8x32xf32>
      tpu.vector_store %arg14[%c0_106, %c0_107], %407 {strides = array<i32>} : memref<8x32xf32, #tpu.memory_space<vmem>>, vector<8x32xf32>,
      %cst_108 = arith.constant 0.000000e+00 : f32
      %409 = vector.broadcast %cst_108 : f32 to vector<8x32xf32>
      %c0_109 = arith.constant 0 : index
      %c0_110 = arith.constant 0 : index
      %410 = vector.load %arg15[%c0_109, %c0_110] : memref<8x32xf32, #tpu.memory_space<vmem>>, vector<8x32xf32>
      tpu.vector_store %arg15[%c0_109, %c0_110], %409 {strides = array<i32>} : memref<8x32xf32, #tpu.memory_space<vmem>>, vector<8x32xf32>,
      %cst_111 = arith.constant 0.000000e+00 : f32
      %411 = vector.broadcast %cst_111 : f32 to vector<8x32xf32>
      %c0_112 = arith.constant 0 : index
      %c0_113 = arith.constant 0 : index
      %412 = vector.load %arg16[%c0_112, %c0_113] : memref<8x32xf32, #tpu.memory_space<vmem>>, vector<8x32xf32>
      tpu.vector_store %arg16[%c0_112, %c0_113], %411 {strides = array<i32>} : memref<8x32xf32, #tpu.memory_space<vmem>>, vector<8x32xf32>,
      %cst_114 = arith.constant 0.000000e+00 : f32
      %413 = vector.broadcast %cst_114 : f32 to vector<8x32xf32>
      %c0_115 = arith.constant 0 : index
      %c0_116 = arith.constant 0 : index
      %414 = vector.load %arg17[%c0_115, %c0_116] : memref<8x32xf32, #tpu.memory_space<vmem>>, vector<8x32xf32>
      tpu.vector_store %arg17[%c0_115, %c0_116], %413 {strides = array<i32>} : memref<8x32xf32, #tpu.memory_space<vmem>>, vector<8x32xf32>,
      %cst_117 = arith.constant 0.000000e+00 : f32
      %415 = vector.broadcast %cst_117 : f32 to vector<8x32xf32>
      %c0_118 = arith.constant 0 : index
      %c0_119 = arith.constant 0 : index
      %416 = vector.load %arg18[%c0_118, %c0_119] : memref<8x32xf32, #tpu.memory_space<vmem>>, vector<8x32xf32>
      tpu.vector_store %arg18[%c0_118, %c0_119], %415 {strides = array<i32>} : memref<8x32xf32, #tpu.memory_space<vmem>>, vector<8x32xf32>,
      %cst_120 = arith.constant 0.000000e+00 : f32
      %417 = vector.broadcast %cst_120 : f32 to vector<8x32xf32>
      %c0_121 = arith.constant 0 : index
      %c0_122 = arith.constant 0 : index
      %418 = vector.load %arg19[%c0_121, %c0_122] : memref<8x32xf32, #tpu.memory_space<vmem>>, vector<8x32xf32>
      tpu.vector_store %arg19[%c0_121, %c0_122], %417 {strides = array<i32>} : memref<8x32xf32, #tpu.memory_space<vmem>>, vector<8x32xf32>,
    } else {
    }
    %c0 = arith.constant 0 : index
    %c0_1 = arith.constant 0 : index
    %c0_2 = arith.constant 0 : index
    %3 = vector.load %arg3[%c0, %c0_1, %c0_2] : memref<1x32x16xbf16, #tpu.memory_space<vmem>>, vector<1x32x16xbf16>
    %4 = vector.shape_cast %3 : vector<1x32x16xbf16> to vector<32x16xbf16>
    %c0_3 = arith.constant 0 : index
    %c0_4 = arith.constant 0 : index
    %5 = vector.load %arg4[%c0_3, %c0_4] : memref<16x128xbf16, #tpu.memory_space<vmem>>, vector<16x128xbf16>
    %cst = arith.constant dense<0.000000e+00> : vector<32x128xf32>
    %6 = tpu.matmul %4, %5, %cst {dimension_numbers = #tpu.dot_dimension_numbers<[1], [0], [0], [1], [0, 0, 1, 1], [], []>} : vector<32x16xbf16>, vector<16x128xbf16>, vector<32x128xf32> -> vector<32x128xf32>
    %c0_5 = arith.constant 0 : index
    %c0_6 = arith.constant 0 : index
    %7 = vector.load %arg6[%c0_5, %c0_6] : memref<1x128xf32, #tpu.memory_space<vmem>>, vector<1x128xf32>
    %8 = vector.broadcast %7 : vector<1x128xf32> to vector<32x128xf32>
    %9 = arith.addf %6, %8 : vector<32x128xf32>
    %c0_7 = arith.constant 0 : index
    %c0_8 = arith.constant 0 : index
    %10 = vector.load %arg20[%c0_7, %c0_8] : memref<32x128xf32, #tpu.memory_space<vmem>>, vector<32x128xf32>
    tpu.vector_store %arg20[%c0_7, %c0_8], %9 {strides = array<i32>} : memref<32x128xf32, #tpu.memory_space<vmem>>, vector<32x128xf32>,
    %11 = tpu.iota {dimensions = array<i32: 1>} : vector<1x128xi32>
    %c64_i32 = arith.constant 64 : i32
    %12 = vector.broadcast %c64_i32 : i32 to vector<1x128xi32>
    %13 = arith.cmpi sge, %11, %12 : vector<1x128xi32>
    %c96_i32 = arith.constant 96 : i32
    %14 = vector.broadcast %c96_i32 : i32 to vector<1x128xi32>
    %15 = arith.cmpi slt, %11, %14 : vector<1x128xi32>
    %16 = arith.andi %13, %15 : vector<1x128xi1>
    %cst_9 = arith.constant 1.000000e+00 : f32
    %cst_10 = arith.constant 5.000000e-01 : f32
    %17 = vector.broadcast %cst_9 : f32 to vector<1x128xf32>
    %18 = vector.broadcast %cst_10 : f32 to vector<1x128xf32>
    %19 = arith.select %16, %17, %18 : vector<1x128xi1>, vector<1x128xf32>
    %cst_11 = arith.constant 0.000000e+00 : f32
    %cst_12 = arith.constant 5.000000e-01 : f32
    %20 = vector.broadcast %cst_11 : f32 to vector<1x128xf32>
    %21 = vector.broadcast %cst_12 : f32 to vector<1x128xf32>
    %22 = arith.select %16, %20, %21 : vector<1x128xi1>, vector<1x128xf32>
    %c0_13 = arith.constant 0 : index
    %c0_14 = arith.constant 0 : index
    %23 = vector.load %arg2[%c0_13, %c0_14] : memref<8x1xi32, #tpu.memory_space<vmem>>, vector<8x1xi32>
    %c0_15 = arith.constant 0 : index
    %c0_16 = arith.constant 0 : index
    %24 = vector.load %arg14[%c0_15, %c0_16] : memref<8x32xf32, #tpu.memory_space<vmem>>, vector<8x32xf32>
    %c0_17 = arith.constant 0 : index
    %c0_18 = arith.constant 0 : index
    %25 = vector.load %arg15[%c0_17, %c0_18] : memref<8x32xf32, #tpu.memory_space<vmem>>, vector<8x32xf32>
    %c0_19 = arith.constant 0 : index
    %c0_20 = arith.constant 0 : index
    %26 = vector.load %arg16[%c0_19, %c0_20] : memref<8x32xf32, #tpu.memory_space<vmem>>, vector<8x32xf32>
    %c0_21 = arith.constant 0 : index
    %c0_22 = arith.constant 0 : index
    %27 = vector.load %arg17[%c0_21, %c0_22] : memref<8x32xf32, #tpu.memory_space<vmem>>, vector<8x32xf32>
    %c0_23 = arith.constant 0 : index
    %c0_24 = arith.constant 0 : index
    %28 = vector.load %arg18[%c0_23, %c0_24] : memref<8x32xf32, #tpu.memory_space<vmem>>, vector<8x32xf32>
    %c0_25 = arith.constant 0 : index
    %c0_26 = arith.constant 0 : index
    %29 = vector.load %arg19[%c0_25, %c0_26] : memref<8x32xf32, #tpu.memory_space<vmem>>, vector<8x32xf32>
    %c0_i32_27 = arith.constant 0 : i32
    %c4_i32 = arith.constant 4 : i32
    %30 = arith.muli %arg1, %c4_i32 : i32
    %31 = arith.addi %30, %c0_i32_27 : i32
    %32 = vector.broadcast %31 : i32 to vector<8x1xi32>
    %33 = arith.cmpi slt, %32, %23 : vector<8x1xi32>
    %c8_i32 = arith.constant 8 : i32
    %34 = arith.muli %c0_i32_27, %c8_i32 : i32
    %35 = tpu.assume_multiple %34, 8 : i32
    %36 = arith.index_cast %35 : i32 to index
    %c0_28 = arith.constant 0 : index
    %37 = vector.load %arg20[%36, %c0_28] : memref<32x128xf32, #tpu.memory_space<vmem>>, vector<8x128xf32>
    %38 = arith.truncf %24 : vector<8x32xf32> to vector<8x32xbf16>
    %c0_29 = arith.constant 0 : index
    %c0_30 = arith.constant 0 : index
    %39 = vector.load %arg5[%c0_29, %c0_30] : memref<32x128xbf16, #tpu.memory_space<vmem>>, vector<32x128xbf16>
    %cst_31 = arith.constant dense<0.000000e+00> : vector<8x128xf32>
    %40 = tpu.matmul %38, %39, %cst_31 {dimension_numbers = #tpu.dot_dimension_numbers<[1], [0], [0], [1], [0, 0, 1, 1], [], []>} : vector<8x32xbf16>, vector<32x128xbf16>, vector<8x128xf32> -> vector<8x128xf32>
    %41 = arith.addf %37, %40 : vector<8x128xf32>
    %42 = vector.broadcast %19 : vector<1x128xf32> to vector<8x128xf32>
    %43 = arith.mulf %42, %41 : vector<8x128xf32>
    %44 = math.tanh %43 : vector<8x128xf32>
    %45 = vector.broadcast %19 : vector<1x128xf32> to vector<8x128xf32>
    %46 = arith.mulf %45, %44 : vector<8x128xf32>
    %47 = vector.broadcast %22 : vector<1x128xf32> to vector<8x128xf32>
    %48 = arith.addf %46, %47 : vector<8x128xf32>
    %49 = vector.extract_strided_slice %48 {offsets = [0, 0], sizes = [8, 32], strides = [1, 1]} : vector<8x128xf32> to vector<8x32xf32>
    %50 = vector.extract_strided_slice %48 {offsets = [0, 32], sizes = [8, 32], strides = [1, 1]} : vector<8x128xf32> to vector<8x32xf32>
    %51 = vector.extract_strided_slice %48 {offsets = [0, 64], sizes = [8, 32], strides = [1, 1]} : vector<8x128xf32> to vector<8x32xf32>
    %52 = vector.extract_strided_slice %48 {offsets = [0, 96], sizes = [8, 32], strides = [1, 1]} : vector<8x128xf32> to vector<8x32xf32>
    %53 = arith.mulf %50, %25 : vector<8x32xf32>
    %54 = arith.mulf %49, %51 : vector<8x32xf32>
    %55 = arith.addf %53, %54 : vector<8x32xf32>
    %56 = math.tanh %55 : vector<8x32xf32>
    %57 = arith.mulf %52, %56 : vector<8x32xf32>
    %58 = vector.shape_cast %33 : vector<8x1xi1> to vector<8x1xi1>
    %59 = vector.broadcast %58 : vector<8x1xi1> to vector<8x32xi1>
    %60 = arith.select %59, %57, %24 : vector<8x32xi1>, vector<8x32xf32>
    %61 = vector.shape_cast %33 : vector<8x1xi1> to vector<8x1xi1>
    %62 = vector.broadcast %61 : vector<8x1xi1> to vector<8x32xi1>
    %63 = arith.select %62, %55, %25 : vector<8x32xi1>, vector<8x32xf32>
    %64 = tpu.concatenate %60, %26 in 1 : vector<8x32xf32>, vector<8x32xf32> -> vector<8x64xf32>
    %65 = arith.truncf %64 : vector<8x64xf32> to vector<8x64xbf16>
    %c0_32 = arith.constant 0 : index
    %c0_33 = arith.constant 0 : index
    %66 = vector.load %arg7[%c0_32, %c0_33] : memref<64x128xbf16, #tpu.memory_space<vmem>>, vector<64x128xbf16>
    %cst_34 = arith.constant dense<0.000000e+00> : vector<8x128xf32>
    %67 = tpu.matmul %65, %66, %cst_34 {dimension_numbers = #tpu.dot_dimension_numbers<[1], [0], [0], [1], [0, 0, 1, 1], [], []>} : vector<8x64xbf16>, vector<64x128xbf16>, vector<8x128xf32> -> vector<8x128xf32>
    %c0_35 = arith.constant 0 : index
    %c0_36 = arith.constant 0 : index
    %68 = vector.load %arg8[%c0_35, %c0_36] : memref<1x128xf32, #tpu.memory_space<vmem>>, vector<1x128xf32>
    %69 = vector.broadcast %68 : vector<1x128xf32> to vector<8x128xf32>
    %70 = arith.addf %67, %69 : vector<8x128xf32>
    %71 = vector.broadcast %19 : vector<1x128xf32> to vector<8x128xf32>
    %72 = arith.mulf %71, %70 : vector<8x128xf32>
    %73 = math.tanh %72 : vector<8x128xf32>
    %74 = vector.broadcast %19 : vector<1x128xf32> to vector<8x128xf32>
    %75 = arith.mulf %74, %73 : vector<8x128xf32>
    %76 = vector.broadcast %22 : vector<1x128xf32> to vector<8x128xf32>
    %77 = arith.addf %75, %76 : vector<8x128xf32>
    %78 = vector.extract_strided_slice %77 {offsets = [0, 0], sizes = [8, 32], strides = [1, 1]} : vector<8x128xf32> to vector<8x32xf32>
    %79 = vector.extract_strided_slice %77 {offsets = [0, 32], sizes = [8, 32], strides = [1, 1]} : vector<8x128xf32> to vector<8x32xf32>
    %80 = vector.extract_strided_slice %77 {offsets = [0, 64], sizes = [8, 32], strides = [1, 1]} : vector<8x128xf32> to vector<8x32xf32>
    %81 = vector.extract_strided_slice %77 {offsets = [0, 96], sizes = [8, 32], strides = [1, 1]} : vector<8x128xf32> to vector<8x32xf32>
    %82 = arith.mulf %79, %27 : vector<8x32xf32>
    %83 = arith.mulf %78, %80 : vector<8x32xf32>
    %84 = arith.addf %82, %83 : vector<8x32xf32>
    %85 = math.tanh %84 : vector<8x32xf32>
    %86 = arith.mulf %81, %85 : vector<8x32xf32>
    %87 = vector.shape_cast %33 : vector<8x1xi1> to vector<8x1xi1>
    %88 = vector.broadcast %87 : vector<8x1xi1> to vector<8x32xi1>
    %89 = arith.select %88, %86, %26 : vector<8x32xi1>, vector<8x32xf32>
    %90 = vector.shape_cast %33 : vector<8x1xi1> to vector<8x1xi1>
    %91 = vector.broadcast %90 : vector<8x1xi1> to vector<8x32xi1>
    %92 = arith.select %91, %84, %27 : vector<8x32xi1>, vector<8x32xf32>
    %93 = tpu.concatenate %89, %28 in 1 : vector<8x32xf32>, vector<8x32xf32> -> vector<8x64xf32>
    %94 = arith.truncf %93 : vector<8x64xf32> to vector<8x64xbf16>
    %c0_37 = arith.constant 0 : index
    %c0_38 = arith.constant 0 : index
    %95 = vector.load %arg9[%c0_37, %c0_38] : memref<64x128xbf16, #tpu.memory_space<vmem>>, vector<64x128xbf16>
    %cst_39 = arith.constant dense<0.000000e+00> : vector<8x128xf32>
    %96 = tpu.matmul %94, %95, %cst_39 {dimension_numbers = #tpu.dot_dimension_numbers<[1], [0], [0], [1], [0, 0, 1, 1], [], []>} : vector<8x64xbf16>, vector<64x128xbf16>, vector<8x128xf32> -> vector<8x128xf32>
    %c0_40 = arith.constant 0 : index
    %c0_41 = arith.constant 0 : index
    %97 = vector.load %arg10[%c0_40, %c0_41] : memref<1x128xf32, #tpu.memory_space<vmem>>, vector<1x128xf32>
    %98 = vector.broadcast %97 : vector<1x128xf32> to vector<8x128xf32>
    %99 = arith.addf %96, %98 : vector<8x128xf32>
    %100 = vector.broadcast %19 : vector<1x128xf32> to vector<8x128xf32>
    %101 = arith.mulf %100, %99 : vector<8x128xf32>
    %102 = math.tanh %101 : vector<8x128xf32>
    %103 = vector.broadcast %19 : vector<1x128xf32> to vector<8x128xf32>
    %104 = arith.mulf %103, %102 : vector<8x128xf32>
    %105 = vector.broadcast %22 : vector<1x128xf32> to vector<8x128xf32>
    %106 = arith.addf %104, %105 : vector<8x128xf32>
    %107 = vector.extract_strided_slice %106 {offsets = [0, 0], sizes = [8, 32], strides = [1, 1]} : vector<8x128xf32> to vector<8x32xf32>
    %108 = vector.extract_strided_slice %106 {offsets = [0, 32], sizes = [8, 32], strides = [1, 1]} : vector<8x128xf32> to vector<8x32xf32>
    %109 = vector.extract_strided_slice %106 {offsets = [0, 64], sizes = [8, 32], strides = [1, 1]} : vector<8x128xf32> to vector<8x32xf32>
    %110 = vector.extract_strided_slice %106 {offsets = [0, 96], sizes = [8, 32], strides = [1, 1]} : vector<8x128xf32> to vector<8x32xf32>
    %111 = arith.mulf %108, %29 : vector<8x32xf32>
    %112 = arith.mulf %107, %109 : vector<8x32xf32>
    %113 = arith.addf %111, %112 : vector<8x32xf32>
    %114 = math.tanh %113 : vector<8x32xf32>
    %115 = arith.mulf %110, %114 : vector<8x32xf32>
    %116 = vector.shape_cast %33 : vector<8x1xi1> to vector<8x1xi1>
    %117 = vector.broadcast %116 : vector<8x1xi1> to vector<8x32xi1>
    %118 = arith.select %117, %115, %28 : vector<8x32xi1>, vector<8x32xf32>
    %119 = vector.shape_cast %33 : vector<8x1xi1> to vector<8x1xi1>
    %120 = vector.broadcast %119 : vector<8x1xi1> to vector<8x32xi1>
    %121 = arith.select %120, %113, %29 : vector<8x32xi1>, vector<8x32xf32>
    %c1_i32 = arith.constant 1 : i32
    %c4_i32_42 = arith.constant 4 : i32
    %122 = arith.muli %arg1, %c4_i32_42 : i32
    %123 = arith.addi %122, %c1_i32 : i32
    %124 = vector.broadcast %123 : i32 to vector<8x1xi32>
    %125 = arith.cmpi slt, %124, %23 : vector<8x1xi32>
    %c8_i32_43 = arith.constant 8 : i32
    %126 = arith.muli %c1_i32, %c8_i32_43 : i32
    %127 = tpu.assume_multiple %126, 8 : i32
    %128 = arith.index_cast %127 : i32 to index
    %c0_44 = arith.constant 0 : index
    %129 = vector.load %arg20[%128, %c0_44] : memref<32x128xf32, #tpu.memory_space<vmem>>, vector<8x128xf32>
    %130 = arith.truncf %60 : vector<8x32xf32> to vector<8x32xbf16>
    %c0_45 = arith.constant 0 : index
    %c0_46 = arith.constant 0 : index
    %131 = vector.load %arg5[%c0_45, %c0_46] : memref<32x128xbf16, #tpu.memory_space<vmem>>, vector<32x128xbf16>
    %cst_47 = arith.constant dense<0.000000e+00> : vector<8x128xf32>
    %132 = tpu.matmul %130, %131, %cst_47 {dimension_numbers = #tpu.dot_dimension_numbers<[1], [0], [0], [1], [0, 0, 1, 1], [], []>} : vector<8x32xbf16>, vector<32x128xbf16>, vector<8x128xf32> -> vector<8x128xf32>
    %133 = arith.addf %129, %132 : vector<8x128xf32>
    %134 = vector.broadcast %19 : vector<1x128xf32> to vector<8x128xf32>
    %135 = arith.mulf %134, %133 : vector<8x128xf32>
    %136 = math.tanh %135 : vector<8x128xf32>
    %137 = vector.broadcast %19 : vector<1x128xf32> to vector<8x128xf32>
    %138 = arith.mulf %137, %136 : vector<8x128xf32>
    %139 = vector.broadcast %22 : vector<1x128xf32> to vector<8x128xf32>
    %140 = arith.addf %138, %139 : vector<8x128xf32>
    %141 = vector.extract_strided_slice %140 {offsets = [0, 0], sizes = [8, 32], strides = [1, 1]} : vector<8x128xf32> to vector<8x32xf32>
    %142 = vector.extract_strided_slice %140 {offsets = [0, 32], sizes = [8, 32], strides = [1, 1]} : vector<8x128xf32> to vector<8x32xf32>
    %143 = vector.extract_strided_slice %140 {offsets = [0, 64], sizes = [8, 32], strides = [1, 1]} : vector<8x128xf32> to vector<8x32xf32>
    %144 = vector.extract_strided_slice %140 {offsets = [0, 96], sizes = [8, 32], strides = [1, 1]} : vector<8x128xf32> to vector<8x32xf32>
    %145 = arith.mulf %142, %63 : vector<8x32xf32>
    %146 = arith.mulf %141, %143 : vector<8x32xf32>
    %147 = arith.addf %145, %146 : vector<8x32xf32>
    %148 = math.tanh %147 : vector<8x32xf32>
    %149 = arith.mulf %144, %148 : vector<8x32xf32>
    %150 = vector.shape_cast %125 : vector<8x1xi1> to vector<8x1xi1>
    %151 = vector.broadcast %150 : vector<8x1xi1> to vector<8x32xi1>
    %152 = arith.select %151, %149, %60 : vector<8x32xi1>, vector<8x32xf32>
    %153 = vector.shape_cast %125 : vector<8x1xi1> to vector<8x1xi1>
    %154 = vector.broadcast %153 : vector<8x1xi1> to vector<8x32xi1>
    %155 = arith.select %154, %147, %63 : vector<8x32xi1>, vector<8x32xf32>
    %156 = tpu.concatenate %152, %89 in 1 : vector<8x32xf32>, vector<8x32xf32> -> vector<8x64xf32>
    %157 = arith.truncf %156 : vector<8x64xf32> to vector<8x64xbf16>
    %c0_48 = arith.constant 0 : index
    %c0_49 = arith.constant 0 : index
    %158 = vector.load %arg7[%c0_48, %c0_49] : memref<64x128xbf16, #tpu.memory_space<vmem>>, vector<64x128xbf16>
    %cst_50 = arith.constant dense<0.000000e+00> : vector<8x128xf32>
    %159 = tpu.matmul %157, %158, %cst_50 {dimension_numbers = #tpu.dot_dimension_numbers<[1], [0], [0], [1], [0, 0, 1, 1], [], []>} : vector<8x64xbf16>, vector<64x128xbf16>, vector<8x128xf32> -> vector<8x128xf32>
    %c0_51 = arith.constant 0 : index
    %c0_52 = arith.constant 0 : index
    %160 = vector.load %arg8[%c0_51, %c0_52] : memref<1x128xf32, #tpu.memory_space<vmem>>, vector<1x128xf32>
    %161 = vector.broadcast %160 : vector<1x128xf32> to vector<8x128xf32>
    %162 = arith.addf %159, %161 : vector<8x128xf32>
    %163 = vector.broadcast %19 : vector<1x128xf32> to vector<8x128xf32>
    %164 = arith.mulf %163, %162 : vector<8x128xf32>
    %165 = math.tanh %164 : vector<8x128xf32>
    %166 = vector.broadcast %19 : vector<1x128xf32> to vector<8x128xf32>
    %167 = arith.mulf %166, %165 : vector<8x128xf32>
    %168 = vector.broadcast %22 : vector<1x128xf32> to vector<8x128xf32>
    %169 = arith.addf %167, %168 : vector<8x128xf32>
    %170 = vector.extract_strided_slice %169 {offsets = [0, 0], sizes = [8, 32], strides = [1, 1]} : vector<8x128xf32> to vector<8x32xf32>
    %171 = vector.extract_strided_slice %169 {offsets = [0, 32], sizes = [8, 32], strides = [1, 1]} : vector<8x128xf32> to vector<8x32xf32>
    %172 = vector.extract_strided_slice %169 {offsets = [0, 64], sizes = [8, 32], strides = [1, 1]} : vector<8x128xf32> to vector<8x32xf32>
    %173 = vector.extract_strided_slice %169 {offsets = [0, 96], sizes = [8, 32], strides = [1, 1]} : vector<8x128xf32> to vector<8x32xf32>
    %174 = arith.mulf %171, %92 : vector<8x32xf32>
    %175 = arith.mulf %170, %172 : vector<8x32xf32>
    %176 = arith.addf %174, %175 : vector<8x32xf32>
    %177 = math.tanh %176 : vector<8x32xf32>
    %178 = arith.mulf %173, %177 : vector<8x32xf32>
    %179 = vector.shape_cast %125 : vector<8x1xi1> to vector<8x1xi1>
    %180 = vector.broadcast %179 : vector<8x1xi1> to vector<8x32xi1>
    %181 = arith.select %180, %178, %89 : vector<8x32xi1>, vector<8x32xf32>
    %182 = vector.shape_cast %125 : vector<8x1xi1> to vector<8x1xi1>
    %183 = vector.broadcast %182 : vector<8x1xi1> to vector<8x32xi1>
    %184 = arith.select %183, %176, %92 : vector<8x32xi1>, vector<8x32xf32>
    %185 = tpu.concatenate %181, %118 in 1 : vector<8x32xf32>, vector<8x32xf32> -> vector<8x64xf32>
    %186 = arith.truncf %185 : vector<8x64xf32> to vector<8x64xbf16>
    %c0_53 = arith.constant 0 : index
    %c0_54 = arith.constant 0 : index
    %187 = vector.load %arg9[%c0_53, %c0_54] : memref<64x128xbf16, #tpu.memory_space<vmem>>, vector<64x128xbf16>
    %cst_55 = arith.constant dense<0.000000e+00> : vector<8x128xf32>
    %188 = tpu.matmul %186, %187, %cst_55 {dimension_numbers = #tpu.dot_dimension_numbers<[1], [0], [0], [1], [0, 0, 1, 1], [], []>} : vector<8x64xbf16>, vector<64x128xbf16>, vector<8x128xf32> -> vector<8x128xf32>
    %c0_56 = arith.constant 0 : index
    %c0_57 = arith.constant 0 : index
    %189 = vector.load %arg10[%c0_56, %c0_57] : memref<1x128xf32, #tpu.memory_space<vmem>>, vector<1x128xf32>
    %190 = vector.broadcast %189 : vector<1x128xf32> to vector<8x128xf32>
    %191 = arith.addf %188, %190 : vector<8x128xf32>
    %192 = vector.broadcast %19 : vector<1x128xf32> to vector<8x128xf32>
    %193 = arith.mulf %192, %191 : vector<8x128xf32>
    %194 = math.tanh %193 : vector<8x128xf32>
    %195 = vector.broadcast %19 : vector<1x128xf32> to vector<8x128xf32>
    %196 = arith.mulf %195, %194 : vector<8x128xf32>
    %197 = vector.broadcast %22 : vector<1x128xf32> to vector<8x128xf32>
    %198 = arith.addf %196, %197 : vector<8x128xf32>
    %199 = vector.extract_strided_slice %198 {offsets = [0, 0], sizes = [8, 32], strides = [1, 1]} : vector<8x128xf32> to vector<8x32xf32>
    %200 = vector.extract_strided_slice %198 {offsets = [0, 32], sizes = [8, 32], strides = [1, 1]} : vector<8x128xf32> to vector<8x32xf32>
    %201 = vector.extract_strided_slice %198 {offsets = [0, 64], sizes = [8, 32], strides = [1, 1]} : vector<8x128xf32> to vector<8x32xf32>
    %202 = vector.extract_strided_slice %198 {offsets = [0, 96], sizes = [8, 32], strides = [1, 1]} : vector<8x128xf32> to vector<8x32xf32>
    %203 = arith.mulf %200, %121 : vector<8x32xf32>
    %204 = arith.mulf %199, %201 : vector<8x32xf32>
    %205 = arith.addf %203, %204 : vector<8x32xf32>
    %206 = math.tanh %205 : vector<8x32xf32>
    %207 = arith.mulf %202, %206 : vector<8x32xf32>
    %208 = vector.shape_cast %125 : vector<8x1xi1> to vector<8x1xi1>
    %209 = vector.broadcast %208 : vector<8x1xi1> to vector<8x32xi1>
    %210 = arith.select %209, %207, %118 : vector<8x32xi1>, vector<8x32xf32>
    %211 = vector.shape_cast %125 : vector<8x1xi1> to vector<8x1xi1>
    %212 = vector.broadcast %211 : vector<8x1xi1> to vector<8x32xi1>
    %213 = arith.select %212, %205, %121 : vector<8x32xi1>, vector<8x32xf32>
    %c2_i32 = arith.constant 2 : i32
    %c4_i32_58 = arith.constant 4 : i32
    %214 = arith.muli %arg1, %c4_i32_58 : i32
    %215 = arith.addi %214, %c2_i32 : i32
    %216 = vector.broadcast %215 : i32 to vector<8x1xi32>
    %217 = arith.cmpi slt, %216, %23 : vector<8x1xi32>
    %c8_i32_59 = arith.constant 8 : i32
    %218 = arith.muli %c2_i32, %c8_i32_59 : i32
    %219 = tpu.assume_multiple %218, 8 : i32
    %220 = arith.index_cast %219 : i32 to index
    %c0_60 = arith.constant 0 : index
    %221 = vector.load %arg20[%220, %c0_60] : memref<32x128xf32, #tpu.memory_space<vmem>>, vector<8x128xf32>
    %222 = arith.truncf %152 : vector<8x32xf32> to vector<8x32xbf16>
    %c0_61 = arith.constant 0 : index
    %c0_62 = arith.constant 0 : index
    %223 = vector.load %arg5[%c0_61, %c0_62] : memref<32x128xbf16, #tpu.memory_space<vmem>>, vector<32x128xbf16>
    %cst_63 = arith.constant dense<0.000000e+00> : vector<8x128xf32>
    %224 = tpu.matmul %222, %223, %cst_63 {dimension_numbers = #tpu.dot_dimension_numbers<[1], [0], [0], [1], [0, 0, 1, 1], [], []>} : vector<8x32xbf16>, vector<32x128xbf16>, vector<8x128xf32> -> vector<8x128xf32>
    %225 = arith.addf %221, %224 : vector<8x128xf32>
    %226 = vector.broadcast %19 : vector<1x128xf32> to vector<8x128xf32>
    %227 = arith.mulf %226, %225 : vector<8x128xf32>
    %228 = math.tanh %227 : vector<8x128xf32>
    %229 = vector.broadcast %19 : vector<1x128xf32> to vector<8x128xf32>
    %230 = arith.mulf %229, %228 : vector<8x128xf32>
    %231 = vector.broadcast %22 : vector<1x128xf32> to vector<8x128xf32>
    %232 = arith.addf %230, %231 : vector<8x128xf32>
    %233 = vector.extract_strided_slice %232 {offsets = [0, 0], sizes = [8, 32], strides = [1, 1]} : vector<8x128xf32> to vector<8x32xf32>
    %234 = vector.extract_strided_slice %232 {offsets = [0, 32], sizes = [8, 32], strides = [1, 1]} : vector<8x128xf32> to vector<8x32xf32>
    %235 = vector.extract_strided_slice %232 {offsets = [0, 64], sizes = [8, 32], strides = [1, 1]} : vector<8x128xf32> to vector<8x32xf32>
    %236 = vector.extract_strided_slice %232 {offsets = [0, 96], sizes = [8, 32], strides = [1, 1]} : vector<8x128xf32> to vector<8x32xf32>
    %237 = arith.mulf %234, %155 : vector<8x32xf32>
    %238 = arith.mulf %233, %235 : vector<8x32xf32>
    %239 = arith.addf %237, %238 : vector<8x32xf32>
    %240 = math.tanh %239 : vector<8x32xf32>
    %241 = arith.mulf %236, %240 : vector<8x32xf32>
    %242 = vector.shape_cast %217 : vector<8x1xi1> to vector<8x1xi1>
    %243 = vector.broadcast %242 : vector<8x1xi1> to vector<8x32xi1>
    %244 = arith.select %243, %241, %152 : vector<8x32xi1>, vector<8x32xf32>
    %245 = vector.shape_cast %217 : vector<8x1xi1> to vector<8x1xi1>
    %246 = vector.broadcast %245 : vector<8x1xi1> to vector<8x32xi1>
    %247 = arith.select %246, %239, %155 : vector<8x32xi1>, vector<8x32xf32>
    %248 = tpu.concatenate %244, %181 in 1 : vector<8x32xf32>, vector<8x32xf32> -> vector<8x64xf32>
    %249 = arith.truncf %248 : vector<8x64xf32> to vector<8x64xbf16>
    %c0_64 = arith.constant 0 : index
    %c0_65 = arith.constant 0 : index
    %250 = vector.load %arg7[%c0_64, %c0_65] : memref<64x128xbf16, #tpu.memory_space<vmem>>, vector<64x128xbf16>
    %cst_66 = arith.constant dense<0.000000e+00> : vector<8x128xf32>
    %251 = tpu.matmul %249, %250, %cst_66 {dimension_numbers = #tpu.dot_dimension_numbers<[1], [0], [0], [1], [0, 0, 1, 1], [], []>} : vector<8x64xbf16>, vector<64x128xbf16>, vector<8x128xf32> -> vector<8x128xf32>
    %c0_67 = arith.constant 0 : index
    %c0_68 = arith.constant 0 : index
    %252 = vector.load %arg8[%c0_67, %c0_68] : memref<1x128xf32, #tpu.memory_space<vmem>>, vector<1x128xf32>
    %253 = vector.broadcast %252 : vector<1x128xf32> to vector<8x128xf32>
    %254 = arith.addf %251, %253 : vector<8x128xf32>
    %255 = vector.broadcast %19 : vector<1x128xf32> to vector<8x128xf32>
    %256 = arith.mulf %255, %254 : vector<8x128xf32>
    %257 = math.tanh %256 : vector<8x128xf32>
    %258 = vector.broadcast %19 : vector<1x128xf32> to vector<8x128xf32>
    %259 = arith.mulf %258, %257 : vector<8x128xf32>
    %260 = vector.broadcast %22 : vector<1x128xf32> to vector<8x128xf32>
    %261 = arith.addf %259, %260 : vector<8x128xf32>
    %262 = vector.extract_strided_slice %261 {offsets = [0, 0], sizes = [8, 32], strides = [1, 1]} : vector<8x128xf32> to vector<8x32xf32>
    %263 = vector.extract_strided_slice %261 {offsets = [0, 32], sizes = [8, 32], strides = [1, 1]} : vector<8x128xf32> to vector<8x32xf32>
    %264 = vector.extract_strided_slice %261 {offsets = [0, 64], sizes = [8, 32], strides = [1, 1]} : vector<8x128xf32> to vector<8x32xf32>
    %265 = vector.extract_strided_slice %261 {offsets = [0, 96], sizes = [8, 32], strides = [1, 1]} : vector<8x128xf32> to vector<8x32xf32>
    %266 = arith.mulf %263, %184 : vector<8x32xf32>
    %267 = arith.mulf %262, %264 : vector<8x32xf32>
    %268 = arith.addf %266, %267 : vector<8x32xf32>
    %269 = math.tanh %268 : vector<8x32xf32>
    %270 = arith.mulf %265, %269 : vector<8x32xf32>
    %271 = vector.shape_cast %217 : vector<8x1xi1> to vector<8x1xi1>
    %272 = vector.broadcast %271 : vector<8x1xi1> to vector<8x32xi1>
    %273 = arith.select %272, %270, %181 : vector<8x32xi1>, vector<8x32xf32>
    %274 = vector.shape_cast %217 : vector<8x1xi1> to vector<8x1xi1>
    %275 = vector.broadcast %274 : vector<8x1xi1> to vector<8x32xi1>
    %276 = arith.select %275, %268, %184 : vector<8x32xi1>, vector<8x32xf32>
    %277 = tpu.concatenate %273, %210 in 1 : vector<8x32xf32>, vector<8x32xf32> -> vector<8x64xf32>
    %278 = arith.truncf %277 : vector<8x64xf32> to vector<8x64xbf16>
    %c0_69 = arith.constant 0 : index
    %c0_70 = arith.constant 0 : index
    %279 = vector.load %arg9[%c0_69, %c0_70] : memref<64x128xbf16, #tpu.memory_space<vmem>>, vector<64x128xbf16>
    %cst_71 = arith.constant dense<0.000000e+00> : vector<8x128xf32>
    %280 = tpu.matmul %278, %279, %cst_71 {dimension_numbers = #tpu.dot_dimension_numbers<[1], [0], [0], [1], [0, 0, 1, 1], [], []>} : vector<8x64xbf16>, vector<64x128xbf16>, vector<8x128xf32> -> vector<8x128xf32>
    %c0_72 = arith.constant 0 : index
    %c0_73 = arith.constant 0 : index
    %281 = vector.load %arg10[%c0_72, %c0_73] : memref<1x128xf32, #tpu.memory_space<vmem>>, vector<1x128xf32>
    %282 = vector.broadcast %281 : vector<1x128xf32> to vector<8x128xf32>
    %283 = arith.addf %280, %282 : vector<8x128xf32>
    %284 = vector.broadcast %19 : vector<1x128xf32> to vector<8x128xf32>
    %285 = arith.mulf %284, %283 : vector<8x128xf32>
    %286 = math.tanh %285 : vector<8x128xf32>
    %287 = vector.broadcast %19 : vector<1x128xf32> to vector<8x128xf32>
    %288 = arith.mulf %287, %286 : vector<8x128xf32>
    %289 = vector.broadcast %22 : vector<1x128xf32> to vector<8x128xf32>
    %290 = arith.addf %288, %289 : vector<8x128xf32>
    %291 = vector.extract_strided_slice %290 {offsets = [0, 0], sizes = [8, 32], strides = [1, 1]} : vector<8x128xf32> to vector<8x32xf32>
    %292 = vector.extract_strided_slice %290 {offsets = [0, 32], sizes = [8, 32], strides = [1, 1]} : vector<8x128xf32> to vector<8x32xf32>
    %293 = vector.extract_strided_slice %290 {offsets = [0, 64], sizes = [8, 32], strides = [1, 1]} : vector<8x128xf32> to vector<8x32xf32>
    %294 = vector.extract_strided_slice %290 {offsets = [0, 96], sizes = [8, 32], strides = [1, 1]} : vector<8x128xf32> to vector<8x32xf32>
    %295 = arith.mulf %292, %213 : vector<8x32xf32>
    %296 = arith.mulf %291, %293 : vector<8x32xf32>
    %297 = arith.addf %295, %296 : vector<8x32xf32>
    %298 = math.tanh %297 : vector<8x32xf32>
    %299 = arith.mulf %294, %298 : vector<8x32xf32>
    %300 = vector.shape_cast %217 : vector<8x1xi1> to vector<8x1xi1>
    %301 = vector.broadcast %300 : vector<8x1xi1> to vector<8x32xi1>
    %302 = arith.select %301, %299, %210 : vector<8x32xi1>, vector<8x32xf32>
    %303 = vector.shape_cast %217 : vector<8x1xi1> to vector<8x1xi1>
    %304 = vector.broadcast %303 : vector<8x1xi1> to vector<8x32xi1>
    %305 = arith.select %304, %297, %213 : vector<8x32xi1>, vector<8x32xf32>
    %c3_i32 = arith.constant 3 : i32
    %c4_i32_74 = arith.constant 4 : i32
    %306 = arith.muli %arg1, %c4_i32_74 : i32
    %307 = arith.addi %306, %c3_i32 : i32
    %308 = vector.broadcast %307 : i32 to vector<8x1xi32>
    %309 = arith.cmpi slt, %308, %23 : vector<8x1xi32>
    %c8_i32_75 = arith.constant 8 : i32
    %310 = arith.muli %c3_i32, %c8_i32_75 : i32
    %311 = tpu.assume_multiple %310, 8 : i32
    %312 = arith.index_cast %311 : i32 to index
    %c0_76 = arith.constant 0 : index
    %313 = vector.load %arg20[%312, %c0_76] : memref<32x128xf32, #tpu.memory_space<vmem>>, vector<8x128xf32>
    %314 = arith.truncf %244 : vector<8x32xf32> to vector<8x32xbf16>
    %c0_77 = arith.constant 0 : index
    %c0_78 = arith.constant 0 : index
    %315 = vector.load %arg5[%c0_77, %c0_78] : memref<32x128xbf16, #tpu.memory_space<vmem>>, vector<32x128xbf16>
    %cst_79 = arith.constant dense<0.000000e+00> : vector<8x128xf32>
    %316 = tpu.matmul %314, %315, %cst_79 {dimension_numbers = #tpu.dot_dimension_numbers<[1], [0], [0], [1], [0, 0, 1, 1], [], []>} : vector<8x32xbf16>, vector<32x128xbf16>, vector<8x128xf32> -> vector<8x128xf32>
    %317 = arith.addf %313, %316 : vector<8x128xf32>
    %318 = vector.broadcast %19 : vector<1x128xf32> to vector<8x128xf32>
    %319 = arith.mulf %318, %317 : vector<8x128xf32>
    %320 = math.tanh %319 : vector<8x128xf32>
    %321 = vector.broadcast %19 : vector<1x128xf32> to vector<8x128xf32>
    %322 = arith.mulf %321, %320 : vector<8x128xf32>
    %323 = vector.broadcast %22 : vector<1x128xf32> to vector<8x128xf32>
    %324 = arith.addf %322, %323 : vector<8x128xf32>
    %325 = vector.extract_strided_slice %324 {offsets = [0, 0], sizes = [8, 32], strides = [1, 1]} : vector<8x128xf32> to vector<8x32xf32>
    %326 = vector.extract_strided_slice %324 {offsets = [0, 32], sizes = [8, 32], strides = [1, 1]} : vector<8x128xf32> to vector<8x32xf32>
    %327 = vector.extract_strided_slice %324 {offsets = [0, 64], sizes = [8, 32], strides = [1, 1]} : vector<8x128xf32> to vector<8x32xf32>
    %328 = vector.extract_strided_slice %324 {offsets = [0, 96], sizes = [8, 32], strides = [1, 1]} : vector<8x128xf32> to vector<8x32xf32>
    %329 = arith.mulf %326, %247 : vector<8x32xf32>
    %330 = arith.mulf %325, %327 : vector<8x32xf32>
    %331 = arith.addf %329, %330 : vector<8x32xf32>
    %332 = math.tanh %331 : vector<8x32xf32>
    %333 = arith.mulf %328, %332 : vector<8x32xf32>
    %334 = vector.shape_cast %309 : vector<8x1xi1> to vector<8x1xi1>
    %335 = vector.broadcast %334 : vector<8x1xi1> to vector<8x32xi1>
    %336 = arith.select %335, %333, %244 : vector<8x32xi1>, vector<8x32xf32>
    %337 = vector.shape_cast %309 : vector<8x1xi1> to vector<8x1xi1>
    %338 = vector.broadcast %337 : vector<8x1xi1> to vector<8x32xi1>
    %339 = arith.select %338, %331, %247 : vector<8x32xi1>, vector<8x32xf32>
    %340 = tpu.concatenate %336, %273 in 1 : vector<8x32xf32>, vector<8x32xf32> -> vector<8x64xf32>
    %341 = arith.truncf %340 : vector<8x64xf32> to vector<8x64xbf16>
    %c0_80 = arith.constant 0 : index
    %c0_81 = arith.constant 0 : index
    %342 = vector.load %arg7[%c0_80, %c0_81] : memref<64x128xbf16, #tpu.memory_space<vmem>>, vector<64x128xbf16>
    %cst_82 = arith.constant dense<0.000000e+00> : vector<8x128xf32>
    %343 = tpu.matmul %341, %342, %cst_82 {dimension_numbers = #tpu.dot_dimension_numbers<[1], [0], [0], [1], [0, 0, 1, 1], [], []>} : vector<8x64xbf16>, vector<64x128xbf16>, vector<8x128xf32> -> vector<8x128xf32>
    %c0_83 = arith.constant 0 : index
    %c0_84 = arith.constant 0 : index
    %344 = vector.load %arg8[%c0_83, %c0_84] : memref<1x128xf32, #tpu.memory_space<vmem>>, vector<1x128xf32>
    %345 = vector.broadcast %344 : vector<1x128xf32> to vector<8x128xf32>
    %346 = arith.addf %343, %345 : vector<8x128xf32>
    %347 = vector.broadcast %19 : vector<1x128xf32> to vector<8x128xf32>
    %348 = arith.mulf %347, %346 : vector<8x128xf32>
    %349 = math.tanh %348 : vector<8x128xf32>
    %350 = vector.broadcast %19 : vector<1x128xf32> to vector<8x128xf32>
    %351 = arith.mulf %350, %349 : vector<8x128xf32>
    %352 = vector.broadcast %22 : vector<1x128xf32> to vector<8x128xf32>
    %353 = arith.addf %351, %352 : vector<8x128xf32>
    %354 = vector.extract_strided_slice %353 {offsets = [0, 0], sizes = [8, 32], strides = [1, 1]} : vector<8x128xf32> to vector<8x32xf32>
    %355 = vector.extract_strided_slice %353 {offsets = [0, 32], sizes = [8, 32], strides = [1, 1]} : vector<8x128xf32> to vector<8x32xf32>
    %356 = vector.extract_strided_slice %353 {offsets = [0, 64], sizes = [8, 32], strides = [1, 1]} : vector<8x128xf32> to vector<8x32xf32>
    %357 = vector.extract_strided_slice %353 {offsets = [0, 96], sizes = [8, 32], strides = [1, 1]} : vector<8x128xf32> to vector<8x32xf32>
    %358 = arith.mulf %355, %276 : vector<8x32xf32>
    %359 = arith.mulf %354, %356 : vector<8x32xf32>
    %360 = arith.addf %358, %359 : vector<8x32xf32>
    %361 = math.tanh %360 : vector<8x32xf32>
    %362 = arith.mulf %357, %361 : vector<8x32xf32>
    %363 = vector.shape_cast %309 : vector<8x1xi1> to vector<8x1xi1>
    %364 = vector.broadcast %363 : vector<8x1xi1> to vector<8x32xi1>
    %365 = arith.select %364, %362, %273 : vector<8x32xi1>, vector<8x32xf32>
    %366 = vector.shape_cast %309 : vector<8x1xi1> to vector<8x1xi1>
    %367 = vector.broadcast %366 : vector<8x1xi1> to vector<8x32xi1>
    %368 = arith.select %367, %360, %276 : vector<8x32xi1>, vector<8x32xf32>
    %369 = tpu.concatenate %365, %302 in 1 : vector<8x32xf32>, vector<8x32xf32> -> vector<8x64xf32>
    %370 = arith.truncf %369 : vector<8x64xf32> to vector<8x64xbf16>
    %c0_85 = arith.constant 0 : index
    %c0_86 = arith.constant 0 : index
    %371 = vector.load %arg9[%c0_85, %c0_86] : memref<64x128xbf16, #tpu.memory_space<vmem>>, vector<64x128xbf16>
    %cst_87 = arith.constant dense<0.000000e+00> : vector<8x128xf32>
    %372 = tpu.matmul %370, %371, %cst_87 {dimension_numbers = #tpu.dot_dimension_numbers<[1], [0], [0], [1], [0, 0, 1, 1], [], []>} : vector<8x64xbf16>, vector<64x128xbf16>, vector<8x128xf32> -> vector<8x128xf32>
    %c0_88 = arith.constant 0 : index
    %c0_89 = arith.constant 0 : index
    %373 = vector.load %arg10[%c0_88, %c0_89] : memref<1x128xf32, #tpu.memory_space<vmem>>, vector<1x128xf32>
    %374 = vector.broadcast %373 : vector<1x128xf32> to vector<8x128xf32>
    %375 = arith.addf %372, %374 : vector<8x128xf32>
    %376 = vector.broadcast %19 : vector<1x128xf32> to vector<8x128xf32>
    %377 = arith.mulf %376, %375 : vector<8x128xf32>
    %378 = math.tanh %377 : vector<8x128xf32>
    %379 = vector.broadcast %19 : vector<1x128xf32> to vector<8x128xf32>
    %380 = arith.mulf %379, %378 : vector<8x128xf32>
    %381 = vector.broadcast %22 : vector<1x128xf32> to vector<8x128xf32>
    %382 = arith.addf %380, %381 : vector<8x128xf32>
    %383 = vector.extract_strided_slice %382 {offsets = [0, 0], sizes = [8, 32], strides = [1, 1]} : vector<8x128xf32> to vector<8x32xf32>
    %384 = vector.extract_strided_slice %382 {offsets = [0, 32], sizes = [8, 32], strides = [1, 1]} : vector<8x128xf32> to vector<8x32xf32>
    %385 = vector.extract_strided_slice %382 {offsets = [0, 64], sizes = [8, 32], strides = [1, 1]} : vector<8x128xf32> to vector<8x32xf32>
    %386 = vector.extract_strided_slice %382 {offsets = [0, 96], sizes = [8, 32], strides = [1, 1]} : vector<8x128xf32> to vector<8x32xf32>
    %387 = arith.mulf %384, %305 : vector<8x32xf32>
    %388 = arith.mulf %383, %385 : vector<8x32xf32>
    %389 = arith.addf %387, %388 : vector<8x32xf32>
    %390 = math.tanh %389 : vector<8x32xf32>
    %391 = arith.mulf %386, %390 : vector<8x32xf32>
    %392 = vector.shape_cast %309 : vector<8x1xi1> to vector<8x1xi1>
    %393 = vector.broadcast %392 : vector<8x1xi1> to vector<8x32xi1>
    %394 = arith.select %393, %391, %302 : vector<8x32xi1>, vector<8x32xf32>
    %395 = vector.shape_cast %309 : vector<8x1xi1> to vector<8x1xi1>
    %396 = vector.broadcast %395 : vector<8x1xi1> to vector<8x32xi1>
    %397 = arith.select %396, %389, %305 : vector<8x32xi1>, vector<8x32xf32>
    %c4_i32_90 = arith.constant 4 : i32
    %c0_91 = arith.constant 0 : index
    %c0_92 = arith.constant 0 : index
    %398 = vector.load %arg14[%c0_91, %c0_92] : memref<8x32xf32, #tpu.memory_space<vmem>>, vector<8x32xf32>
    tpu.vector_store %arg14[%c0_91, %c0_92], %336 {strides = array<i32>} : memref<8x32xf32, #tpu.memory_space<vmem>>, vector<8x32xf32>,
    %c0_93 = arith.constant 0 : index
    %c0_94 = arith.constant 0 : index
    %399 = vector.load %arg15[%c0_93, %c0_94] : memref<8x32xf32, #tpu.memory_space<vmem>>, vector<8x32xf32>
    tpu.vector_store %arg15[%c0_93, %c0_94], %339 {strides = array<i32>} : memref<8x32xf32, #tpu.memory_space<vmem>>, vector<8x32xf32>,
    %c0_95 = arith.constant 0 : index
    %c0_96 = arith.constant 0 : index
    %400 = vector.load %arg16[%c0_95, %c0_96] : memref<8x32xf32, #tpu.memory_space<vmem>>, vector<8x32xf32>
    tpu.vector_store %arg16[%c0_95, %c0_96], %365 {strides = array<i32>} : memref<8x32xf32, #tpu.memory_space<vmem>>, vector<8x32xf32>,
    %c0_97 = arith.constant 0 : index
    %c0_98 = arith.constant 0 : index
    %401 = vector.load %arg17[%c0_97, %c0_98] : memref<8x32xf32, #tpu.memory_space<vmem>>, vector<8x32xf32>
    tpu.vector_store %arg17[%c0_97, %c0_98], %368 {strides = array<i32>} : memref<8x32xf32, #tpu.memory_space<vmem>>, vector<8x32xf32>,
    %c0_99 = arith.constant 0 : index
    %c0_100 = arith.constant 0 : index
    %402 = vector.load %arg18[%c0_99, %c0_100] : memref<8x32xf32, #tpu.memory_space<vmem>>, vector<8x32xf32>
    tpu.vector_store %arg18[%c0_99, %c0_100], %394 {strides = array<i32>} : memref<8x32xf32, #tpu.memory_space<vmem>>, vector<8x32xf32>,
    %c0_101 = arith.constant 0 : index
    %c0_102 = arith.constant 0 : index
    %403 = vector.load %arg19[%c0_101, %c0_102] : memref<8x32xf32, #tpu.memory_space<vmem>>, vector<8x32xf32>
    tpu.vector_store %arg19[%c0_101, %c0_102], %397 {strides = array<i32>} : memref<8x32xf32, #tpu.memory_space<vmem>>, vector<8x32xf32>,
    %c1_i32_103 = arith.constant 1 : i32
    %404 = arith.cmpi eq, %arg1, %c1_i32_103 : i32
    %405 = arith.extui %404 : i1 to i32
    %c0_i32_104 = arith.constant 0 : i32
    %406 = arith.cmpi ne, %405, %c0_i32_104 : i32
    scf.if %406 {
      %407 = arith.truncf %394 : vector<8x32xf32> to vector<8x32xbf16>
      %c0_105 = arith.constant 0 : index
      %c0_106 = arith.constant 0 : index
      %408 = vector.load %arg11[%c0_105, %c0_106] : memref<32x2xbf16, #tpu.memory_space<vmem>>, vector<32x2xbf16>
      %cst_107 = arith.constant dense<0.000000e+00> : vector<8x2xf32>
      %409 = tpu.matmul %407, %408, %cst_107 {dimension_numbers = #tpu.dot_dimension_numbers<[1], [0], [0], [1], [0, 0, 1, 1], [], []>} : vector<8x32xbf16>, vector<32x2xbf16>, vector<8x2xf32> -> vector<8x2xf32>
      %c0_108 = arith.constant 0 : index
      %c0_109 = arith.constant 0 : index
      %410 = vector.load %arg12[%c0_108, %c0_109] : memref<1x2xf32, #tpu.memory_space<vmem>>, vector<1x2xf32>
      %411 = vector.broadcast %410 : vector<1x2xf32> to vector<8x2xf32>
      %412 = arith.addf %409, %411 : vector<8x2xf32>
      %cst_110 = arith.constant 0.000000e+00 : f32
      %413 = vector.broadcast %cst_110 : f32 to vector<8x2xf32>
      %414 = arith.cmpf oge, %412, %413 : vector<8x2xf32>
      %cst_111 = arith.constant 0.00999999977 : f32
      %415 = vector.broadcast %cst_111 : f32 to vector<8x2xf32>
      %416 = arith.mulf %415, %412 : vector<8x2xf32>
      %417 = arith.select %414, %412, %416 : vector<8x2xi1>, vector<8x2xf32>
      %c0_112 = arith.constant 0 : index
      %c0_113 = arith.constant 0 : index
      %418 = vector.load %arg13[%c0_112, %c0_113] : memref<8x2xf32, #tpu.memory_space<vmem>>, vector<8x2xf32>
      tpu.vector_store %arg13[%c0_112, %c0_113], %417 {strides = array<i32>} : memref<8x2xf32, #tpu.memory_space<vmem>>, vector<8x2xf32>,
    } else {
    }
    return
  }
  func.func @transform_0(%arg0: i32, %arg1: i32) -> (i32, i32) {
    %c0_i32 = arith.constant 0 : i32
    %c0_i32_0 = arith.constant 0 : i32
    return %arg0, %c0_i32 : i32, i32
  }
  func.func @transform_1(%arg0: i32, %arg1: i32) -> (i32, i32, i32) {
    %c0_i32 = arith.constant 0 : i32
    %c0_i32_0 = arith.constant 0 : i32
    return %arg0, %arg1, %c0_i32 : i32, i32, i32
  }
  func.func @transform_2(%arg0: i32, %arg1: i32) -> (i32, i32) {
    %c0_i32 = arith.constant 0 : i32
    %c0_i32_0 = arith.constant 0 : i32
    %c0_i32_1 = arith.constant 0 : i32
    return %c0_i32, %c0_i32_0 : i32, i32
  }
  func.func @transform_3(%arg0: i32, %arg1: i32) -> (i32, i32) {
    %c0_i32 = arith.constant 0 : i32
    %c0_i32_0 = arith.constant 0 : i32
    %c0_i32_1 = arith.constant 0 : i32
    return %c0_i32, %c0_i32_0 : i32, i32
  }
  func.func @transform_4(%arg0: i32, %arg1: i32) -> (i32, i32) {
    %c0_i32 = arith.constant 0 : i32
    %c0_i32_0 = arith.constant 0 : i32
    %c0_i32_1 = arith.constant 0 : i32
    return %c0_i32, %c0_i32_0 : i32, i32
  }
  func.func @transform_5(%arg0: i32, %arg1: i32) -> (i32, i32) {
    %c0_i32 = arith.constant 0 : i32
    %c0_i32_0 = arith.constant 0 : i32
    %c0_i32_1 = arith.constant 0 : i32
    return %c0_i32, %c0_i32_0 : i32, i32
  }
  func.func @transform_6(%arg0: i32, %arg1: i32) -> (i32, i32) {
    %c0_i32 = arith.constant 0 : i32
    %c0_i32_0 = arith.constant 0 : i32
    %c0_i32_1 = arith.constant 0 : i32
    return %c0_i32, %c0_i32_0 : i32, i32
  }
  func.func @transform_7(%arg0: i32, %arg1: i32) -> (i32, i32) {
    %c0_i32 = arith.constant 0 : i32
    %c0_i32_0 = arith.constant 0 : i32
    %c0_i32_1 = arith.constant 0 : i32
    return %c0_i32, %c0_i32_0 : i32, i32
  }
  func.func @transform_8(%arg0: i32, %arg1: i32) -> (i32, i32) {
    %c0_i32 = arith.constant 0 : i32
    %c0_i32_0 = arith.constant 0 : i32
    %c0_i32_1 = arith.constant 0 : i32
    return %c0_i32, %c0_i32_0 : i32, i32
  }
  func.func @transform_9(%arg0: i32, %arg1: i32) -> (i32, i32) {
    %c0_i32 = arith.constant 0 : i32
    %c0_i32_0 = arith.constant 0 : i32
    %c0_i32_1 = arith.constant 0 : i32
    return %c0_i32, %c0_i32_0 : i32, i32
  }
  func.func @transform_10(%arg0: i32, %arg1: i32) -> (i32, i32) {
    %c0_i32 = arith.constant 0 : i32
    %c0_i32_0 = arith.constant 0 : i32
    %c0_i32_1 = arith.constant 0 : i32
    return %c0_i32, %c0_i32_0 : i32, i32
  }
  func.func @transform_11(%arg0: i32, %arg1: i32) -> (i32, i32) {
    %c0_i32 = arith.constant 0 : i32
    %c0_i32_0 = arith.constant 0 : i32
    return %arg0, %c0_i32 : i32, i32
  }
}

module attributes {stable_mosaic.version = 11 : i64} {
  func.func @_fused_lstm_fc_kernel(%arg0: i32, %arg1: i32, %arg2: memref<8x1xi32, #tpu.memory_space<vmem>>, %arg3: memref<1x32x16xbf16, #tpu.memory_space<vmem>>, %arg4: memref<16x128xbf16, #tpu.memory_space<vmem>>, %arg5: memref<32x128xbf16, #tpu.memory_space<vmem>>, %arg6: memref<1x128xf32, #tpu.memory_space<vmem>>, %arg7: memref<64x128xbf16, #tpu.memory_space<vmem>>, %arg8: memref<1x128xf32, #tpu.memory_space<vmem>>, %arg9: memref<64x128xbf16, #tpu.memory_space<vmem>>, %arg10: memref<1x128xf32, #tpu.memory_space<vmem>>, %arg11: memref<32x2xbf16, #tpu.memory_space<vmem>>, %arg12: memref<1x2xf32, #tpu.memory_space<vmem>>, %arg13: memref<8x2xf32, #tpu.memory_space<vmem>>, %arg14: memref<8x32xf32, #tpu.memory_space<vmem>>, %arg15: memref<8x32xf32, #tpu.memory_space<vmem>>, %arg16: memref<8x32xf32, #tpu.memory_space<vmem>>, %arg17: memref<8x32xf32, #tpu.memory_space<vmem>>, %arg18: memref<8x32xf32, #tpu.memory_space<vmem>>, %arg19: memref<8x32xf32, #tpu.memory_space<vmem>>, %arg20: memref<32x128xf32, #tpu.memory_space<vmem>>) attributes {dimension_semantics = [#tpu.dimension_semantics<parallel>, #tpu.dimension_semantics<arbitrary>], iteration_bounds = array<i64: 1, 2>, scalar_prefetch = 0 : i64, scratch_operands = 7 : i64, tpu.core_type = #tpu.core_type<tc>, window_params = [{transform_indices = @transform_0, window_bounds = array<i64: 8, 1>}, {transform_indices = @transform_1, window_bounds = array<i64: 1, 32, 16>}, {pipeline_mode = #tpu.pipeline_mode<synchronous>, transform_indices = @transform_2, window_bounds = array<i64: 16, 128>}, {pipeline_mode = #tpu.pipeline_mode<synchronous>, transform_indices = @transform_3, window_bounds = array<i64: 32, 128>}, {pipeline_mode = #tpu.pipeline_mode<synchronous>, transform_indices = @transform_4, window_bounds = array<i64: 1, 128>}, {pipeline_mode = #tpu.pipeline_mode<synchronous>, transform_indices = @transform_5, window_bounds = array<i64: 64, 128>}, {pipeline_mode = #tpu.pipeline_mode<synchronous>, transform_indices = @transform_6, window_bounds = array<i64: 1, 128>}, {pipeline_mode = #tpu.pipeline_mode<synchronous>, transform_indices = @transform_7, window_bounds = array<i64: 64, 128>}, {pipeline_mode = #tpu.pipeline_mode<synchronous>, transform_indices = @transform_8, window_bounds = array<i64: 1, 128>}, {pipeline_mode = #tpu.pipeline_mode<synchronous>, transform_indices = @transform_9, window_bounds = array<i64: 32, 2>}, {pipeline_mode = #tpu.pipeline_mode<synchronous>, transform_indices = @transform_10, window_bounds = array<i64: 1, 2>}, {transform_indices = @transform_11, window_bounds = array<i64: 8, 2>}]} {
    %c0_i32 = arith.constant 0 : i32
    %0 = arith.cmpi eq, %arg1, %c0_i32 : i32
    %1 = arith.extui %0 : i1 to i32
    %c0_i32_0 = arith.constant 0 : i32
    %2 = arith.cmpi ne, %1, %c0_i32_0 : i32
    scf.if %2 {
      %cst_105 = arith.constant 0.000000e+00 : f32
      %407 = vector.broadcast %cst_105 : f32 to vector<8x32xf32>
      %c0_106 = arith.constant 0 : index
      %c0_107 = arith.constant 0 : index
      %408 = vector.load %arg14[%c0_106, %c0_107] : memref<8x32xf32, #tpu.memory_space<vmem>>, vector<8x32xf32>
      tpu.vector_store %arg14[%c0_106, %c0_107], %407 {strides = array<i32>} : memref<8x32xf32, #tpu.memory_space<vmem>>, vector<8x32xf32>,
      %cst_108 = arith.constant 0.000000e+00 : f32
      %409 = vector.broadcast %cst_108 : f32 to vector<8x32xf32>
      %c0_109 = arith.constant 0 : index
      %c0_110 = arith.constant 0 : index
      %410 = vector.load %arg15[%c0_109, %c0_110] : memref<8x32xf32, #tpu.memory_space<vmem>>, vector<8x32xf32>
      tpu.vector_store %arg15[%c0_109, %c0_110], %409 {strides = array<i32>} : memref<8x32xf32, #tpu.memory_space<vmem>>, vector<8x32xf32>,
      %cst_111 = arith.constant 0.000000e+00 : f32
      %411 = vector.broadcast %cst_111 : f32 to vector<8x32xf32>
      %c0_112 = arith.constant 0 : index
      %c0_113 = arith.constant 0 : index
      %412 = vector.load %arg16[%c0_112, %c0_113] : memref<8x32xf32, #tpu.memory_space<vmem>>, vector<8x32xf32>
      tpu.vector_store %arg16[%c0_112, %c0_113], %411 {strides = array<i32>} : memref<8x32xf32, #tpu.memory_space<vmem>>, vector<8x32xf32>,
      %cst_114 = arith.constant 0.000000e+00 : f32
      %413 = vector.broadcast %cst_114 : f32 to vector<8x32xf32>
      %c0_115 = arith.constant 0 : index
      %c0_116 = arith.constant 0 : index
      %414 = vector.load %arg17[%c0_115, %c0_116] : memref<8x32xf32, #tpu.memory_space<vmem>>, vector<8x32xf32>
      tpu.vector_store %arg17[%c0_115, %c0_116], %413 {strides = array<i32>} : memref<8x32xf32, #tpu.memory_space<vmem>>, vector<8x32xf32>,
      %cst_117 = arith.constant 0.000000e+00 : f32
      %415 = vector.broadcast %cst_117 : f32 to vector<8x32xf32>
      %c0_118 = arith.constant 0 : index
      %c0_119 = arith.constant 0 : index
      %416 = vector.load %arg18[%c0_118, %c0_119] : memref<8x32xf32, #tpu.memory_space<vmem>>, vector<8x32xf32>
      tpu.vector_store %arg18[%c0_118, %c0_119], %415 {strides = array<i32>} : memref<8x32xf32, #tpu.memory_space<vmem>>, vector<8x32xf32>,
      %cst_120 = arith.constant 0.000000e+00 : f32
      %417 = vector.broadcast %cst_120 : f32 to vector<8x32xf32>
      %c0_121 = arith.constant 0 : index
      %c0_122 = arith.constant 0 : index
      %418 = vector.load %arg19[%c0_121, %c0_122] : memref<8x32xf32, #tpu.memory_space<vmem>>, vector<8x32xf32>
      tpu.vector_store %arg19[%c0_121, %c0_122], %417 {strides = array<i32>} : memref<8x32xf32, #tpu.memory_space<vmem>>, vector<8x32xf32>,
    } else {
    }
    %c0 = arith.constant 0 : index
    %c0_1 = arith.constant 0 : index
    %c0_2 = arith.constant 0 : index
    %3 = vector.load %arg3[%c0, %c0_1, %c0_2] : memref<1x32x16xbf16, #tpu.memory_space<vmem>>, vector<1x32x16xbf16>
    %4 = vector.shape_cast %3 : vector<1x32x16xbf16> to vector<32x16xbf16>
    %c0_3 = arith.constant 0 : index
    %c0_4 = arith.constant 0 : index
    %5 = vector.load %arg4[%c0_3, %c0_4] : memref<16x128xbf16, #tpu.memory_space<vmem>>, vector<16x128xbf16>
    %cst = arith.constant dense<0.000000e+00> : vector<32x128xf32>
    %6 = tpu.matmul %4, %5, %cst {dimension_numbers = #tpu.dot_dimension_numbers<[1], [0], [0], [1], [0, 0, 1, 1], [], []>} : vector<32x16xbf16>, vector<16x128xbf16>, vector<32x128xf32> -> vector<32x128xf32>
    %c0_5 = arith.constant 0 : index
    %c0_6 = arith.constant 0 : index
    %7 = vector.load %arg6[%c0_5, %c0_6] : memref<1x128xf32, #tpu.memory_space<vmem>>, vector<1x128xf32>
    %8 = vector.broadcast %7 : vector<1x128xf32> to vector<32x128xf32>
    %9 = arith.addf %6, %8 : vector<32x128xf32>
    %c0_7 = arith.constant 0 : index
    %c0_8 = arith.constant 0 : index
    %10 = vector.load %arg20[%c0_7, %c0_8] : memref<32x128xf32, #tpu.memory_space<vmem>>, vector<32x128xf32>
    tpu.vector_store %arg20[%c0_7, %c0_8], %9 {strides = array<i32>} : memref<32x128xf32, #tpu.memory_space<vmem>>, vector<32x128xf32>,
    %11 = tpu.iota {dimensions = array<i32: 1>} : vector<1x128xi32>
    %c64_i32 = arith.constant 64 : i32
    %12 = vector.broadcast %c64_i32 : i32 to vector<1x128xi32>
    %13 = arith.cmpi sge, %11, %12 : vector<1x128xi32>
    %c96_i32 = arith.constant 96 : i32
    %14 = vector.broadcast %c96_i32 : i32 to vector<1x128xi32>
    %15 = arith.cmpi slt, %11, %14 : vector<1x128xi32>
    %16 = arith.andi %13, %15 : vector<1x128xi1>
    %cst_9 = arith.constant 1.000000e+00 : f32
    %cst_10 = arith.constant 5.000000e-01 : f32
    %17 = vector.broadcast %cst_9 : f32 to vector<1x128xf32>
    %18 = vector.broadcast %cst_10 : f32 to vector<1x128xf32>
    %19 = arith.select %16, %17, %18 : vector<1x128xi1>, vector<1x128xf32>
    %cst_11 = arith.constant 0.000000e+00 : f32
    %cst_12 = arith.constant 5.000000e-01 : f32
    %20 = vector.broadcast %cst_11 : f32 to vector<1x128xf32>
    %21 = vector.broadcast %cst_12 : f32 to vector<1x128xf32>
    %22 = arith.select %16, %20, %21 : vector<1x128xi1>, vector<1x128xf32>
    %c0_13 = arith.constant 0 : index
    %c0_14 = arith.constant 0 : index
    %23 = vector.load %arg2[%c0_13, %c0_14] : memref<8x1xi32, #tpu.memory_space<vmem>>, vector<8x1xi32>
    %c0_15 = arith.constant 0 : index
    %c0_16 = arith.constant 0 : index
    %24 = vector.load %arg14[%c0_15, %c0_16] : memref<8x32xf32, #tpu.memory_space<vmem>>, vector<8x32xf32>
    %c0_17 = arith.constant 0 : index
    %c0_18 = arith.constant 0 : index
    %25 = vector.load %arg15[%c0_17, %c0_18] : memref<8x32xf32, #tpu.memory_space<vmem>>, vector<8x32xf32>
    %c0_19 = arith.constant 0 : index
    %c0_20 = arith.constant 0 : index
    %26 = vector.load %arg16[%c0_19, %c0_20] : memref<8x32xf32, #tpu.memory_space<vmem>>, vector<8x32xf32>
    %c0_21 = arith.constant 0 : index
    %c0_22 = arith.constant 0 : index
    %27 = vector.load %arg17[%c0_21, %c0_22] : memref<8x32xf32, #tpu.memory_space<vmem>>, vector<8x32xf32>
    %c0_23 = arith.constant 0 : index
    %c0_24 = arith.constant 0 : index
    %28 = vector.load %arg18[%c0_23, %c0_24] : memref<8x32xf32, #tpu.memory_space<vmem>>, vector<8x32xf32>
    %c0_25 = arith.constant 0 : index
    %c0_26 = arith.constant 0 : index
    %29 = vector.load %arg19[%c0_25, %c0_26] : memref<8x32xf32, #tpu.memory_space<vmem>>, vector<8x32xf32>
    %c0_i32_27 = arith.constant 0 : i32
    %c4_i32 = arith.constant 4 : i32
    %30 = arith.muli %arg1, %c4_i32 : i32
    %31 = arith.addi %30, %c0_i32_27 : i32
    %32 = vector.broadcast %31 : i32 to vector<8x1xi32>
    %33 = arith.cmpi slt, %32, %23 : vector<8x1xi32>
    %c8_i32 = arith.constant 8 : i32
    %34 = arith.muli %c0_i32_27, %c8_i32 : i32
    %35 = tpu.assume_multiple %34, 8 : i32
    %36 = arith.index_cast %35 : i32 to index
    %c0_28 = arith.constant 0 : index
    %37 = vector.load %arg20[%36, %c0_28] : memref<32x128xf32, #tpu.memory_space<vmem>>, vector<8x128xf32>
    %38 = arith.truncf %24 : vector<8x32xf32> to vector<8x32xbf16>
    %c0_29 = arith.constant 0 : index
    %c0_30 = arith.constant 0 : index
    %39 = vector.load %arg5[%c0_29, %c0_30] : memref<32x128xbf16, #tpu.memory_space<vmem>>, vector<32x128xbf16>
    %cst_31 = arith.constant dense<0.000000e+00> : vector<8x128xf32>
    %40 = tpu.matmul %38, %39, %cst_31 {dimension_numbers = #tpu.dot_dimension_numbers<[1], [0], [0], [1], [0, 0, 1, 1], [], []>} : vector<8x32xbf16>, vector<32x128xbf16>, vector<8x128xf32> -> vector<8x128xf32>
    %41 = arith.addf %37, %40 : vector<8x128xf32>
    %42 = vector.broadcast %19 : vector<1x128xf32> to vector<8x128xf32>
    %43 = arith.mulf %42, %41 : vector<8x128xf32>
    %44 = math.tanh %43 : vector<8x128xf32>
    %45 = vector.broadcast %19 : vector<1x128xf32> to vector<8x128xf32>
    %46 = arith.mulf %45, %44 : vector<8x128xf32>
    %47 = vector.broadcast %22 : vector<1x128xf32> to vector<8x128xf32>
    %48 = arith.addf %46, %47 : vector<8x128xf32>
    %49 = vector.extract_strided_slice %48 {offsets = [0, 0], sizes = [8, 32], strides = [1, 1]} : vector<8x128xf32> to vector<8x32xf32>
    %50 = vector.extract_strided_slice %48 {offsets = [0, 32], sizes = [8, 32], strides = [1, 1]} : vector<8x128xf32> to vector<8x32xf32>
    %51 = vector.extract_strided_slice %48 {offsets = [0, 64], sizes = [8, 32], strides = [1, 1]} : vector<8x128xf32> to vector<8x32xf32>
    %52 = vector.extract_strided_slice %48 {offsets = [0, 96], sizes = [8, 32], strides = [1, 1]} : vector<8x128xf32> to vector<8x32xf32>
    %53 = arith.mulf %50, %25 : vector<8x32xf32>
    %54 = arith.mulf %49, %51 : vector<8x32xf32>
    %55 = arith.addf %53, %54 : vector<8x32xf32>
    %56 = math.tanh %55 : vector<8x32xf32>
    %57 = arith.mulf %52, %56 : vector<8x32xf32>
    %58 = vector.shape_cast %33 : vector<8x1xi1> to vector<8x1xi1>
    %59 = vector.broadcast %58 : vector<8x1xi1> to vector<8x32xi1>
    %60 = arith.select %59, %57, %24 : vector<8x32xi1>, vector<8x32xf32>
    %61 = vector.shape_cast %33 : vector<8x1xi1> to vector<8x1xi1>
    %62 = vector.broadcast %61 : vector<8x1xi1> to vector<8x32xi1>
    %63 = arith.select %62, %55, %25 : vector<8x32xi1>, vector<8x32xf32>
    %64 = tpu.concatenate %60, %26 in 1 : vector<8x32xf32>, vector<8x32xf32> -> vector<8x64xf32>
    %65 = arith.truncf %64 : vector<8x64xf32> to vector<8x64xbf16>
    %c0_32 = arith.constant 0 : index
    %c0_33 = arith.constant 0 : index
    %66 = vector.load %arg7[%c0_32, %c0_33] : memref<64x128xbf16, #tpu.memory_space<vmem>>, vector<64x128xbf16>
    %cst_34 = arith.constant dense<0.000000e+00> : vector<8x128xf32>
    %67 = tpu.matmul %65, %66, %cst_34 {dimension_numbers = #tpu.dot_dimension_numbers<[1], [0], [0], [1], [0, 0, 1, 1], [], []>} : vector<8x64xbf16>, vector<64x128xbf16>, vector<8x128xf32> -> vector<8x128xf32>
    %c0_35 = arith.constant 0 : index
    %c0_36 = arith.constant 0 : index
    %68 = vector.load %arg8[%c0_35, %c0_36] : memref<1x128xf32, #tpu.memory_space<vmem>>, vector<1x128xf32>
    %69 = vector.broadcast %68 : vector<1x128xf32> to vector<8x128xf32>
    %70 = arith.addf %67, %69 : vector<8x128xf32>
    %71 = vector.broadcast %19 : vector<1x128xf32> to vector<8x128xf32>
    %72 = arith.mulf %71, %70 : vector<8x128xf32>
    %73 = math.tanh %72 : vector<8x128xf32>
    %74 = vector.broadcast %19 : vector<1x128xf32> to vector<8x128xf32>
    %75 = arith.mulf %74, %73 : vector<8x128xf32>
    %76 = vector.broadcast %22 : vector<1x128xf32> to vector<8x128xf32>
    %77 = arith.addf %75, %76 : vector<8x128xf32>
    %78 = vector.extract_strided_slice %77 {offsets = [0, 0], sizes = [8, 32], strides = [1, 1]} : vector<8x128xf32> to vector<8x32xf32>
    %79 = vector.extract_strided_slice %77 {offsets = [0, 32], sizes = [8, 32], strides = [1, 1]} : vector<8x128xf32> to vector<8x32xf32>
    %80 = vector.extract_strided_slice %77 {offsets = [0, 64], sizes = [8, 32], strides = [1, 1]} : vector<8x128xf32> to vector<8x32xf32>
    %81 = vector.extract_strided_slice %77 {offsets = [0, 96], sizes = [8, 32], strides = [1, 1]} : vector<8x128xf32> to vector<8x32xf32>
    %82 = arith.mulf %79, %27 : vector<8x32xf32>
    %83 = arith.mulf %78, %80 : vector<8x32xf32>
    %84 = arith.addf %82, %83 : vector<8x32xf32>
    %85 = math.tanh %84 : vector<8x32xf32>
    %86 = arith.mulf %81, %85 : vector<8x32xf32>
    %87 = vector.shape_cast %33 : vector<8x1xi1> to vector<8x1xi1>
    %88 = vector.broadcast %87 : vector<8x1xi1> to vector<8x32xi1>
    %89 = arith.select %88, %86, %26 : vector<8x32xi1>, vector<8x32xf32>
    %90 = vector.shape_cast %33 : vector<8x1xi1> to vector<8x1xi1>
    %91 = vector.broadcast %90 : vector<8x1xi1> to vector<8x32xi1>
    %92 = arith.select %91, %84, %27 : vector<8x32xi1>, vector<8x32xf32>
    %93 = tpu.concatenate %89, %28 in 1 : vector<8x32xf32>, vector<8x32xf32> -> vector<8x64xf32>
    %94 = arith.truncf %93 : vector<8x64xf32> to vector<8x64xbf16>
    %c0_37 = arith.constant 0 : index
    %c0_38 = arith.constant 0 : index
    %95 = vector.load %arg9[%c0_37, %c0_38] : memref<64x128xbf16, #tpu.memory_space<vmem>>, vector<64x128xbf16>
    %cst_39 = arith.constant dense<0.000000e+00> : vector<8x128xf32>
    %96 = tpu.matmul %94, %95, %cst_39 {dimension_numbers = #tpu.dot_dimension_numbers<[1], [0], [0], [1], [0, 0, 1, 1], [], []>} : vector<8x64xbf16>, vector<64x128xbf16>, vector<8x128xf32> -> vector<8x128xf32>
    %c0_40 = arith.constant 0 : index
    %c0_41 = arith.constant 0 : index
    %97 = vector.load %arg10[%c0_40, %c0_41] : memref<1x128xf32, #tpu.memory_space<vmem>>, vector<1x128xf32>
    %98 = vector.broadcast %97 : vector<1x128xf32> to vector<8x128xf32>
    %99 = arith.addf %96, %98 : vector<8x128xf32>
    %100 = vector.broadcast %19 : vector<1x128xf32> to vector<8x128xf32>
    %101 = arith.mulf %100, %99 : vector<8x128xf32>
    %102 = math.tanh %101 : vector<8x128xf32>
    %103 = vector.broadcast %19 : vector<1x128xf32> to vector<8x128xf32>
    %104 = arith.mulf %103, %102 : vector<8x128xf32>
    %105 = vector.broadcast %22 : vector<1x128xf32> to vector<8x128xf32>
    %106 = arith.addf %104, %105 : vector<8x128xf32>
    %107 = vector.extract_strided_slice %106 {offsets = [0, 0], sizes = [8, 32], strides = [1, 1]} : vector<8x128xf32> to vector<8x32xf32>
    %108 = vector.extract_strided_slice %106 {offsets = [0, 32], sizes = [8, 32], strides = [1, 1]} : vector<8x128xf32> to vector<8x32xf32>
    %109 = vector.extract_strided_slice %106 {offsets = [0, 64], sizes = [8, 32], strides = [1, 1]} : vector<8x128xf32> to vector<8x32xf32>
    %110 = vector.extract_strided_slice %106 {offsets = [0, 96], sizes = [8, 32], strides = [1, 1]} : vector<8x128xf32> to vector<8x32xf32>
    %111 = arith.mulf %108, %29 : vector<8x32xf32>
    %112 = arith.mulf %107, %109 : vector<8x32xf32>
    %113 = arith.addf %111, %112 : vector<8x32xf32>
    %114 = math.tanh %113 : vector<8x32xf32>
    %115 = arith.mulf %110, %114 : vector<8x32xf32>
    %116 = vector.shape_cast %33 : vector<8x1xi1> to vector<8x1xi1>
    %117 = vector.broadcast %116 : vector<8x1xi1> to vector<8x32xi1>
    %118 = arith.select %117, %115, %28 : vector<8x32xi1>, vector<8x32xf32>
    %119 = vector.shape_cast %33 : vector<8x1xi1> to vector<8x1xi1>
    %120 = vector.broadcast %119 : vector<8x1xi1> to vector<8x32xi1>
    %121 = arith.select %120, %113, %29 : vector<8x32xi1>, vector<8x32xf32>
    %c1_i32 = arith.constant 1 : i32
    %c4_i32_42 = arith.constant 4 : i32
    %122 = arith.muli %arg1, %c4_i32_42 : i32
    %123 = arith.addi %122, %c1_i32 : i32
    %124 = vector.broadcast %123 : i32 to vector<8x1xi32>
    %125 = arith.cmpi slt, %124, %23 : vector<8x1xi32>
    %c8_i32_43 = arith.constant 8 : i32
    %126 = arith.muli %c1_i32, %c8_i32_43 : i32
    %127 = tpu.assume_multiple %126, 8 : i32
    %128 = arith.index_cast %127 : i32 to index
    %c0_44 = arith.constant 0 : index
    %129 = vector.load %arg20[%128, %c0_44] : memref<32x128xf32, #tpu.memory_space<vmem>>, vector<8x128xf32>
    %130 = arith.truncf %60 : vector<8x32xf32> to vector<8x32xbf16>
    %c0_45 = arith.constant 0 : index
    %c0_46 = arith.constant 0 : index
    %131 = vector.load %arg5[%c0_45, %c0_46] : memref<32x128xbf16, #tpu.memory_space<vmem>>, vector<32x128xbf16>
    %cst_47 = arith.constant dense<0.000000e+00> : vector<8x128xf32>
    %132 = tpu.matmul %130, %131, %cst_47 {dimension_numbers = #tpu.dot_dimension_numbers<[1], [0], [0], [1], [0, 0, 1, 1], [], []>} : vector<8x32xbf16>, vector<32x128xbf16>, vector<8x128xf32> -> vector<8x128xf32>
    %133 = arith.addf %129, %132 : vector<8x128xf32>
    %134 = vector.broadcast %19 : vector<1x128xf32> to vector<8x128xf32>
    %135 = arith.mulf %134, %133 : vector<8x128xf32>
    %136 = math.tanh %135 : vector<8x128xf32>
    %137 = vector.broadcast %19 : vector<1x128xf32> to vector<8x128xf32>
    %138 = arith.mulf %137, %136 : vector<8x128xf32>
    %139 = vector.broadcast %22 : vector<1x128xf32> to vector<8x128xf32>
    %140 = arith.addf %138, %139 : vector<8x128xf32>
    %141 = vector.extract_strided_slice %140 {offsets = [0, 0], sizes = [8, 32], strides = [1, 1]} : vector<8x128xf32> to vector<8x32xf32>
    %142 = vector.extract_strided_slice %140 {offsets = [0, 32], sizes = [8, 32], strides = [1, 1]} : vector<8x128xf32> to vector<8x32xf32>
    %143 = vector.extract_strided_slice %140 {offsets = [0, 64], sizes = [8, 32], strides = [1, 1]} : vector<8x128xf32> to vector<8x32xf32>
    %144 = vector.extract_strided_slice %140 {offsets = [0, 96], sizes = [8, 32], strides = [1, 1]} : vector<8x128xf32> to vector<8x32xf32>
    %145 = arith.mulf %142, %63 : vector<8x32xf32>
    %146 = arith.mulf %141, %143 : vector<8x32xf32>
    %147 = arith.addf %145, %146 : vector<8x32xf32>
    %148 = math.tanh %147 : vector<8x32xf32>
    %149 = arith.mulf %144, %148 : vector<8x32xf32>
    %150 = vector.shape_cast %125 : vector<8x1xi1> to vector<8x1xi1>
    %151 = vector.broadcast %150 : vector<8x1xi1> to vector<8x32xi1>
    %152 = arith.select %151, %149, %60 : vector<8x32xi1>, vector<8x32xf32>
    %153 = vector.shape_cast %125 : vector<8x1xi1> to vector<8x1xi1>
    %154 = vector.broadcast %153 : vector<8x1xi1> to vector<8x32xi1>
    %155 = arith.select %154, %147, %63 : vector<8x32xi1>, vector<8x32xf32>
    %156 = tpu.concatenate %152, %89 in 1 : vector<8x32xf32>, vector<8x32xf32> -> vector<8x64xf32>
    %157 = arith.truncf %156 : vector<8x64xf32> to vector<8x64xbf16>
    %c0_48 = arith.constant 0 : index
    %c0_49 = arith.constant 0 : index
    %158 = vector.load %arg7[%c0_48, %c0_49] : memref<64x128xbf16, #tpu.memory_space<vmem>>, vector<64x128xbf16>
    %cst_50 = arith.constant dense<0.000000e+00> : vector<8x128xf32>
    %159 = tpu.matmul %157, %158, %cst_50 {dimension_numbers = #tpu.dot_dimension_numbers<[1], [0], [0], [1], [0, 0, 1, 1], [], []>} : vector<8x64xbf16>, vector<64x128xbf16>, vector<8x128xf32> -> vector<8x128xf32>
    %c0_51 = arith.constant 0 : index
    %c0_52 = arith.constant 0 : index
    %160 = vector.load %arg8[%c0_51, %c0_52] : memref<1x128xf32, #tpu.memory_space<vmem>>, vector<1x128xf32>
    %161 = vector.broadcast %160 : vector<1x128xf32> to vector<8x128xf32>
    %162 = arith.addf %159, %161 : vector<8x128xf32>
    %163 = vector.broadcast %19 : vector<1x128xf32> to vector<8x128xf32>
    %164 = arith.mulf %163, %162 : vector<8x128xf32>
    %165 = math.tanh %164 : vector<8x128xf32>
    %166 = vector.broadcast %19 : vector<1x128xf32> to vector<8x128xf32>
    %167 = arith.mulf %166, %165 : vector<8x128xf32>
    %168 = vector.broadcast %22 : vector<1x128xf32> to vector<8x128xf32>
    %169 = arith.addf %167, %168 : vector<8x128xf32>
    %170 = vector.extract_strided_slice %169 {offsets = [0, 0], sizes = [8, 32], strides = [1, 1]} : vector<8x128xf32> to vector<8x32xf32>
    %171 = vector.extract_strided_slice %169 {offsets = [0, 32], sizes = [8, 32], strides = [1, 1]} : vector<8x128xf32> to vector<8x32xf32>
    %172 = vector.extract_strided_slice %169 {offsets = [0, 64], sizes = [8, 32], strides = [1, 1]} : vector<8x128xf32> to vector<8x32xf32>
    %173 = vector.extract_strided_slice %169 {offsets = [0, 96], sizes = [8, 32], strides = [1, 1]} : vector<8x128xf32> to vector<8x32xf32>
    %174 = arith.mulf %171, %92 : vector<8x32xf32>
    %175 = arith.mulf %170, %172 : vector<8x32xf32>
    %176 = arith.addf %174, %175 : vector<8x32xf32>
    %177 = math.tanh %176 : vector<8x32xf32>
    %178 = arith.mulf %173, %177 : vector<8x32xf32>
    %179 = vector.shape_cast %125 : vector<8x1xi1> to vector<8x1xi1>
    %180 = vector.broadcast %179 : vector<8x1xi1> to vector<8x32xi1>
    %181 = arith.select %180, %178, %89 : vector<8x32xi1>, vector<8x32xf32>
    %182 = vector.shape_cast %125 : vector<8x1xi1> to vector<8x1xi1>
    %183 = vector.broadcast %182 : vector<8x1xi1> to vector<8x32xi1>
    %184 = arith.select %183, %176, %92 : vector<8x32xi1>, vector<8x32xf32>
    %185 = tpu.concatenate %181, %118 in 1 : vector<8x32xf32>, vector<8x32xf32> -> vector<8x64xf32>
    %186 = arith.truncf %185 : vector<8x64xf32> to vector<8x64xbf16>
    %c0_53 = arith.constant 0 : index
    %c0_54 = arith.constant 0 : index
    %187 = vector.load %arg9[%c0_53, %c0_54] : memref<64x128xbf16, #tpu.memory_space<vmem>>, vector<64x128xbf16>
    %cst_55 = arith.constant dense<0.000000e+00> : vector<8x128xf32>
    %188 = tpu.matmul %186, %187, %cst_55 {dimension_numbers = #tpu.dot_dimension_numbers<[1], [0], [0], [1], [0, 0, 1, 1], [], []>} : vector<8x64xbf16>, vector<64x128xbf16>, vector<8x128xf32> -> vector<8x128xf32>
    %c0_56 = arith.constant 0 : index
    %c0_57 = arith.constant 0 : index
    %189 = vector.load %arg10[%c0_56, %c0_57] : memref<1x128xf32, #tpu.memory_space<vmem>>, vector<1x128xf32>
    %190 = vector.broadcast %189 : vector<1x128xf32> to vector<8x128xf32>
    %191 = arith.addf %188, %190 : vector<8x128xf32>
    %192 = vector.broadcast %19 : vector<1x128xf32> to vector<8x128xf32>
    %193 = arith.mulf %192, %191 : vector<8x128xf32>
    %194 = math.tanh %193 : vector<8x128xf32>
    %195 = vector.broadcast %19 : vector<1x128xf32> to vector<8x128xf32>
    %196 = arith.mulf %195, %194 : vector<8x128xf32>
    %197 = vector.broadcast %22 : vector<1x128xf32> to vector<8x128xf32>
    %198 = arith.addf %196, %197 : vector<8x128xf32>
    %199 = vector.extract_strided_slice %198 {offsets = [0, 0], sizes = [8, 32], strides = [1, 1]} : vector<8x128xf32> to vector<8x32xf32>
    %200 = vector.extract_strided_slice %198 {offsets = [0, 32], sizes = [8, 32], strides = [1, 1]} : vector<8x128xf32> to vector<8x32xf32>
    %201 = vector.extract_strided_slice %198 {offsets = [0, 64], sizes = [8, 32], strides = [1, 1]} : vector<8x128xf32> to vector<8x32xf32>
    %202 = vector.extract_strided_slice %198 {offsets = [0, 96], sizes = [8, 32], strides = [1, 1]} : vector<8x128xf32> to vector<8x32xf32>
    %203 = arith.mulf %200, %121 : vector<8x32xf32>
    %204 = arith.mulf %199, %201 : vector<8x32xf32>
    %205 = arith.addf %203, %204 : vector<8x32xf32>
    %206 = math.tanh %205 : vector<8x32xf32>
    %207 = arith.mulf %202, %206 : vector<8x32xf32>
    %208 = vector.shape_cast %125 : vector<8x1xi1> to vector<8x1xi1>
    %209 = vector.broadcast %208 : vector<8x1xi1> to vector<8x32xi1>
    %210 = arith.select %209, %207, %118 : vector<8x32xi1>, vector<8x32xf32>
    %211 = vector.shape_cast %125 : vector<8x1xi1> to vector<8x1xi1>
    %212 = vector.broadcast %211 : vector<8x1xi1> to vector<8x32xi1>
    %213 = arith.select %212, %205, %121 : vector<8x32xi1>, vector<8x32xf32>
    %c2_i32 = arith.constant 2 : i32
    %c4_i32_58 = arith.constant 4 : i32
    %214 = arith.muli %arg1, %c4_i32_58 : i32
    %215 = arith.addi %214, %c2_i32 : i32
    %216 = vector.broadcast %215 : i32 to vector<8x1xi32>
    %217 = arith.cmpi slt, %216, %23 : vector<8x1xi32>
    %c8_i32_59 = arith.constant 8 : i32
    %218 = arith.muli %c2_i32, %c8_i32_59 : i32
    %219 = tpu.assume_multiple %218, 8 : i32
    %220 = arith.index_cast %219 : i32 to index
    %c0_60 = arith.constant 0 : index
    %221 = vector.load %arg20[%220, %c0_60] : memref<32x128xf32, #tpu.memory_space<vmem>>, vector<8x128xf32>
    %222 = arith.truncf %152 : vector<8x32xf32> to vector<8x32xbf16>
    %c0_61 = arith.constant 0 : index
    %c0_62 = arith.constant 0 : index
    %223 = vector.load %arg5[%c0_61, %c0_62] : memref<32x128xbf16, #tpu.memory_space<vmem>>, vector<32x128xbf16>
    %cst_63 = arith.constant dense<0.000000e+00> : vector<8x128xf32>
    %224 = tpu.matmul %222, %223, %cst_63 {dimension_numbers = #tpu.dot_dimension_numbers<[1], [0], [0], [1], [0, 0, 1, 1], [], []>} : vector<8x32xbf16>, vector<32x128xbf16>, vector<8x128xf32> -> vector<8x128xf32>
    %225 = arith.addf %221, %224 : vector<8x128xf32>
    %226 = vector.broadcast %19 : vector<1x128xf32> to vector<8x128xf32>
    %227 = arith.mulf %226, %225 : vector<8x128xf32>
    %228 = math.tanh %227 : vector<8x128xf32>
    %229 = vector.broadcast %19 : vector<1x128xf32> to vector<8x128xf32>
    %230 = arith.mulf %229, %228 : vector<8x128xf32>
    %231 = vector.broadcast %22 : vector<1x128xf32> to vector<8x128xf32>
    %232 = arith.addf %230, %231 : vector<8x128xf32>
    %233 = vector.extract_strided_slice %232 {offsets = [0, 0], sizes = [8, 32], strides = [1, 1]} : vector<8x128xf32> to vector<8x32xf32>
    %234 = vector.extract_strided_slice %232 {offsets = [0, 32], sizes = [8, 32], strides = [1, 1]} : vector<8x128xf32> to vector<8x32xf32>
    %235 = vector.extract_strided_slice %232 {offsets = [0, 64], sizes = [8, 32], strides = [1, 1]} : vector<8x128xf32> to vector<8x32xf32>
    %236 = vector.extract_strided_slice %232 {offsets = [0, 96], sizes = [8, 32], strides = [1, 1]} : vector<8x128xf32> to vector<8x32xf32>
    %237 = arith.mulf %234, %155 : vector<8x32xf32>
    %238 = arith.mulf %233, %235 : vector<8x32xf32>
    %239 = arith.addf %237, %238 : vector<8x32xf32>
    %240 = math.tanh %239 : vector<8x32xf32>
    %241 = arith.mulf %236, %240 : vector<8x32xf32>
    %242 = vector.shape_cast %217 : vector<8x1xi1> to vector<8x1xi1>
    %243 = vector.broadcast %242 : vector<8x1xi1> to vector<8x32xi1>
    %244 = arith.select %243, %241, %152 : vector<8x32xi1>, vector<8x32xf32>
    %245 = vector.shape_cast %217 : vector<8x1xi1> to vector<8x1xi1>
    %246 = vector.broadcast %245 : vector<8x1xi1> to vector<8x32xi1>
    %247 = arith.select %246, %239, %155 : vector<8x32xi1>, vector<8x32xf32>
    %248 = tpu.concatenate %244, %181 in 1 : vector<8x32xf32>, vector<8x32xf32> -> vector<8x64xf32>
    %249 = arith.truncf %248 : vector<8x64xf32> to vector<8x64xbf16>
    %c0_64 = arith.constant 0 : index
    %c0_65 = arith.constant 0 : index
    %250 = vector.load %arg7[%c0_64, %c0_65] : memref<64x128xbf16, #tpu.memory_space<vmem>>, vector<64x128xbf16>
    %cst_66 = arith.constant dense<0.000000e+00> : vector<8x128xf32>
    %251 = tpu.matmul %249, %250, %cst_66 {dimension_numbers = #tpu.dot_dimension_numbers<[1], [0], [0], [1], [0, 0, 1, 1], [], []>} : vector<8x64xbf16>, vector<64x128xbf16>, vector<8x128xf32> -> vector<8x128xf32>
    %c0_67 = arith.constant 0 : index
    %c0_68 = arith.constant 0 : index
    %252 = vector.load %arg8[%c0_67, %c0_68] : memref<1x128xf32, #tpu.memory_space<vmem>>, vector<1x128xf32>
    %253 = vector.broadcast %252 : vector<1x128xf32> to vector<8x128xf32>
    %254 = arith.addf %251, %253 : vector<8x128xf32>
    %255 = vector.broadcast %19 : vector<1x128xf32> to vector<8x128xf32>
    %256 = arith.mulf %255, %254 : vector<8x128xf32>
    %257 = math.tanh %256 : vector<8x128xf32>
    %258 = vector.broadcast %19 : vector<1x128xf32> to vector<8x128xf32>
    %259 = arith.mulf %258, %257 : vector<8x128xf32>
    %260 = vector.broadcast %22 : vector<1x128xf32> to vector<8x128xf32>
    %261 = arith.addf %259, %260 : vector<8x128xf32>
    %262 = vector.extract_strided_slice %261 {offsets = [0, 0], sizes = [8, 32], strides = [1, 1]} : vector<8x128xf32> to vector<8x32xf32>
    %263 = vector.extract_strided_slice %261 {offsets = [0, 32], sizes = [8, 32], strides = [1, 1]} : vector<8x128xf32> to vector<8x32xf32>
    %264 = vector.extract_strided_slice %261 {offsets = [0, 64], sizes = [8, 32], strides = [1, 1]} : vector<8x128xf32> to vector<8x32xf32>
    %265 = vector.extract_strided_slice %261 {offsets = [0, 96], sizes = [8, 32], strides = [1, 1]} : vector<8x128xf32> to vector<8x32xf32>
    %266 = arith.mulf %263, %184 : vector<8x32xf32>
    %267 = arith.mulf %262, %264 : vector<8x32xf32>
    %268 = arith.addf %266, %267 : vector<8x32xf32>
    %269 = math.tanh %268 : vector<8x32xf32>
    %270 = arith.mulf %265, %269 : vector<8x32xf32>
    %271 = vector.shape_cast %217 : vector<8x1xi1> to vector<8x1xi1>
    %272 = vector.broadcast %271 : vector<8x1xi1> to vector<8x32xi1>
    %273 = arith.select %272, %270, %181 : vector<8x32xi1>, vector<8x32xf32>
    %274 = vector.shape_cast %217 : vector<8x1xi1> to vector<8x1xi1>
    %275 = vector.broadcast %274 : vector<8x1xi1> to vector<8x32xi1>
    %276 = arith.select %275, %268, %184 : vector<8x32xi1>, vector<8x32xf32>
    %277 = tpu.concatenate %273, %210 in 1 : vector<8x32xf32>, vector<8x32xf32> -> vector<8x64xf32>
    %278 = arith.truncf %277 : vector<8x64xf32> to vector<8x64xbf16>
    %c0_69 = arith.constant 0 : index
    %c0_70 = arith.constant 0 : index
    %279 = vector.load %arg9[%c0_69, %c0_70] : memref<64x128xbf16, #tpu.memory_space<vmem>>, vector<64x128xbf16>
    %cst_71 = arith.constant dense<0.000000e+00> : vector<8x128xf32>
    %280 = tpu.matmul %278, %279, %cst_71 {dimension_numbers = #tpu.dot_dimension_numbers<[1], [0], [0], [1], [0, 0, 1, 1], [], []>} : vector<8x64xbf16>, vector<64x128xbf16>, vector<8x128xf32> -> vector<8x128xf32>
    %c0_72 = arith.constant 0 : index
    %c0_73 = arith.constant 0 : index
    %281 = vector.load %arg10[%c0_72, %c0_73] : memref<1x128xf32, #tpu.memory_space<vmem>>, vector<1x128xf32>
    %282 = vector.broadcast %281 : vector<1x128xf32> to vector<8x128xf32>
    %283 = arith.addf %280, %282 : vector<8x128xf32>
    %284 = vector.broadcast %19 : vector<1x128xf32> to vector<8x128xf32>
    %285 = arith.mulf %284, %283 : vector<8x128xf32>
    %286 = math.tanh %285 : vector<8x128xf32>
    %287 = vector.broadcast %19 : vector<1x128xf32> to vector<8x128xf32>
    %288 = arith.mulf %287, %286 : vector<8x128xf32>
    %289 = vector.broadcast %22 : vector<1x128xf32> to vector<8x128xf32>
    %290 = arith.addf %288, %289 : vector<8x128xf32>
    %291 = vector.extract_strided_slice %290 {offsets = [0, 0], sizes = [8, 32], strides = [1, 1]} : vector<8x128xf32> to vector<8x32xf32>
    %292 = vector.extract_strided_slice %290 {offsets = [0, 32], sizes = [8, 32], strides = [1, 1]} : vector<8x128xf32> to vector<8x32xf32>
    %293 = vector.extract_strided_slice %290 {offsets = [0, 64], sizes = [8, 32], strides = [1, 1]} : vector<8x128xf32> to vector<8x32xf32>
    %294 = vector.extract_strided_slice %290 {offsets = [0, 96], sizes = [8, 32], strides = [1, 1]} : vector<8x128xf32> to vector<8x32xf32>
    %295 = arith.mulf %292, %213 : vector<8x32xf32>
    %296 = arith.mulf %291, %293 : vector<8x32xf32>
    %297 = arith.addf %295, %296 : vector<8x32xf32>
    %298 = math.tanh %297 : vector<8x32xf32>
    %299 = arith.mulf %294, %298 : vector<8x32xf32>
    %300 = vector.shape_cast %217 : vector<8x1xi1> to vector<8x1xi1>
    %301 = vector.broadcast %300 : vector<8x1xi1> to vector<8x32xi1>
    %302 = arith.select %301, %299, %210 : vector<8x32xi1>, vector<8x32xf32>
    %303 = vector.shape_cast %217 : vector<8x1xi1> to vector<8x1xi1>
    %304 = vector.broadcast %303 : vector<8x1xi1> to vector<8x32xi1>
    %305 = arith.select %304, %297, %213 : vector<8x32xi1>, vector<8x32xf32>
    %c3_i32 = arith.constant 3 : i32
    %c4_i32_74 = arith.constant 4 : i32
    %306 = arith.muli %arg1, %c4_i32_74 : i32
    %307 = arith.addi %306, %c3_i32 : i32
    %308 = vector.broadcast %307 : i32 to vector<8x1xi32>
    %309 = arith.cmpi slt, %308, %23 : vector<8x1xi32>
    %c8_i32_75 = arith.constant 8 : i32
    %310 = arith.muli %c3_i32, %c8_i32_75 : i32
    %311 = tpu.assume_multiple %310, 8 : i32
    %312 = arith.index_cast %311 : i32 to index
    %c0_76 = arith.constant 0 : index
    %313 = vector.load %arg20[%312, %c0_76] : memref<32x128xf32, #tpu.memory_space<vmem>>, vector<8x128xf32>
    %314 = arith.truncf %244 : vector<8x32xf32> to vector<8x32xbf16>
    %c0_77 = arith.constant 0 : index
    %c0_78 = arith.constant 0 : index
    %315 = vector.load %arg5[%c0_77, %c0_78] : memref<32x128xbf16, #tpu.memory_space<vmem>>, vector<32x128xbf16>
    %cst_79 = arith.constant dense<0.000000e+00> : vector<8x128xf32>
    %316 = tpu.matmul %314, %315, %cst_79 {dimension_numbers = #tpu.dot_dimension_numbers<[1], [0], [0], [1], [0, 0, 1, 1], [], []>} : vector<8x32xbf16>, vector<32x128xbf16>, vector<8x128xf32> -> vector<8x128xf32>
    %317 = arith.addf %313, %316 : vector<8x128xf32>
    %318 = vector.broadcast %19 : vector<1x128xf32> to vector<8x128xf32>
    %319 = arith.mulf %318, %317 : vector<8x128xf32>
    %320 = math.tanh %319 : vector<8x128xf32>
    %321 = vector.broadcast %19 : vector<1x128xf32> to vector<8x128xf32>
    %322 = arith.mulf %321, %320 : vector<8x128xf32>
    %323 = vector.broadcast %22 : vector<1x128xf32> to vector<8x128xf32>
    %324 = arith.addf %322, %323 : vector<8x128xf32>
    %325 = vector.extract_strided_slice %324 {offsets = [0, 0], sizes = [8, 32], strides = [1, 1]} : vector<8x128xf32> to vector<8x32xf32>
    %326 = vector.extract_strided_slice %324 {offsets = [0, 32], sizes = [8, 32], strides = [1, 1]} : vector<8x128xf32> to vector<8x32xf32>
    %327 = vector.extract_strided_slice %324 {offsets = [0, 64], sizes = [8, 32], strides = [1, 1]} : vector<8x128xf32> to vector<8x32xf32>
    %328 = vector.extract_strided_slice %324 {offsets = [0, 96], sizes = [8, 32], strides = [1, 1]} : vector<8x128xf32> to vector<8x32xf32>
    %329 = arith.mulf %326, %247 : vector<8x32xf32>
    %330 = arith.mulf %325, %327 : vector<8x32xf32>
    %331 = arith.addf %329, %330 : vector<8x32xf32>
    %332 = math.tanh %331 : vector<8x32xf32>
    %333 = arith.mulf %328, %332 : vector<8x32xf32>
    %334 = vector.shape_cast %309 : vector<8x1xi1> to vector<8x1xi1>
    %335 = vector.broadcast %334 : vector<8x1xi1> to vector<8x32xi1>
    %336 = arith.select %335, %333, %244 : vector<8x32xi1>, vector<8x32xf32>
    %337 = vector.shape_cast %309 : vector<8x1xi1> to vector<8x1xi1>
    %338 = vector.broadcast %337 : vector<8x1xi1> to vector<8x32xi1>
    %339 = arith.select %338, %331, %247 : vector<8x32xi1>, vector<8x32xf32>
    %340 = tpu.concatenate %336, %273 in 1 : vector<8x32xf32>, vector<8x32xf32> -> vector<8x64xf32>
    %341 = arith.truncf %340 : vector<8x64xf32> to vector<8x64xbf16>
    %c0_80 = arith.constant 0 : index
    %c0_81 = arith.constant 0 : index
    %342 = vector.load %arg7[%c0_80, %c0_81] : memref<64x128xbf16, #tpu.memory_space<vmem>>, vector<64x128xbf16>
    %cst_82 = arith.constant dense<0.000000e+00> : vector<8x128xf32>
    %343 = tpu.matmul %341, %342, %cst_82 {dimension_numbers = #tpu.dot_dimension_numbers<[1], [0], [0], [1], [0, 0, 1, 1], [], []>} : vector<8x64xbf16>, vector<64x128xbf16>, vector<8x128xf32> -> vector<8x128xf32>
    %c0_83 = arith.constant 0 : index
    %c0_84 = arith.constant 0 : index
    %344 = vector.load %arg8[%c0_83, %c0_84] : memref<1x128xf32, #tpu.memory_space<vmem>>, vector<1x128xf32>
    %345 = vector.broadcast %344 : vector<1x128xf32> to vector<8x128xf32>
    %346 = arith.addf %343, %345 : vector<8x128xf32>
    %347 = vector.broadcast %19 : vector<1x128xf32> to vector<8x128xf32>
    %348 = arith.mulf %347, %346 : vector<8x128xf32>
    %349 = math.tanh %348 : vector<8x128xf32>
    %350 = vector.broadcast %19 : vector<1x128xf32> to vector<8x128xf32>
    %351 = arith.mulf %350, %349 : vector<8x128xf32>
    %352 = vector.broadcast %22 : vector<1x128xf32> to vector<8x128xf32>
    %353 = arith.addf %351, %352 : vector<8x128xf32>
    %354 = vector.extract_strided_slice %353 {offsets = [0, 0], sizes = [8, 32], strides = [1, 1]} : vector<8x128xf32> to vector<8x32xf32>
    %355 = vector.extract_strided_slice %353 {offsets = [0, 32], sizes = [8, 32], strides = [1, 1]} : vector<8x128xf32> to vector<8x32xf32>
    %356 = vector.extract_strided_slice %353 {offsets = [0, 64], sizes = [8, 32], strides = [1, 1]} : vector<8x128xf32> to vector<8x32xf32>
    %357 = vector.extract_strided_slice %353 {offsets = [0, 96], sizes = [8, 32], strides = [1, 1]} : vector<8x128xf32> to vector<8x32xf32>
    %358 = arith.mulf %355, %276 : vector<8x32xf32>
    %359 = arith.mulf %354, %356 : vector<8x32xf32>
    %360 = arith.addf %358, %359 : vector<8x32xf32>
    %361 = math.tanh %360 : vector<8x32xf32>
    %362 = arith.mulf %357, %361 : vector<8x32xf32>
    %363 = vector.shape_cast %309 : vector<8x1xi1> to vector<8x1xi1>
    %364 = vector.broadcast %363 : vector<8x1xi1> to vector<8x32xi1>
    %365 = arith.select %364, %362, %273 : vector<8x32xi1>, vector<8x32xf32>
    %366 = vector.shape_cast %309 : vector<8x1xi1> to vector<8x1xi1>
    %367 = vector.broadcast %366 : vector<8x1xi1> to vector<8x32xi1>
    %368 = arith.select %367, %360, %276 : vector<8x32xi1>, vector<8x32xf32>
    %369 = tpu.concatenate %365, %302 in 1 : vector<8x32xf32>, vector<8x32xf32> -> vector<8x64xf32>
    %370 = arith.truncf %369 : vector<8x64xf32> to vector<8x64xbf16>
    %c0_85 = arith.constant 0 : index
    %c0_86 = arith.constant 0 : index
    %371 = vector.load %arg9[%c0_85, %c0_86] : memref<64x128xbf16, #tpu.memory_space<vmem>>, vector<64x128xbf16>
    %cst_87 = arith.constant dense<0.000000e+00> : vector<8x128xf32>
    %372 = tpu.matmul %370, %371, %cst_87 {dimension_numbers = #tpu.dot_dimension_numbers<[1], [0], [0], [1], [0, 0, 1, 1], [], []>} : vector<8x64xbf16>, vector<64x128xbf16>, vector<8x128xf32> -> vector<8x128xf32>
    %c0_88 = arith.constant 0 : index
    %c0_89 = arith.constant 0 : index
    %373 = vector.load %arg10[%c0_88, %c0_89] : memref<1x128xf32, #tpu.memory_space<vmem>>, vector<1x128xf32>
    %374 = vector.broadcast %373 : vector<1x128xf32> to vector<8x128xf32>
    %375 = arith.addf %372, %374 : vector<8x128xf32>
    %376 = vector.broadcast %19 : vector<1x128xf32> to vector<8x128xf32>
    %377 = arith.mulf %376, %375 : vector<8x128xf32>
    %378 = math.tanh %377 : vector<8x128xf32>
    %379 = vector.broadcast %19 : vector<1x128xf32> to vector<8x128xf32>
    %380 = arith.mulf %379, %378 : vector<8x128xf32>
    %381 = vector.broadcast %22 : vector<1x128xf32> to vector<8x128xf32>
    %382 = arith.addf %380, %381 : vector<8x128xf32>
    %383 = vector.extract_strided_slice %382 {offsets = [0, 0], sizes = [8, 32], strides = [1, 1]} : vector<8x128xf32> to vector<8x32xf32>
    %384 = vector.extract_strided_slice %382 {offsets = [0, 32], sizes = [8, 32], strides = [1, 1]} : vector<8x128xf32> to vector<8x32xf32>
    %385 = vector.extract_strided_slice %382 {offsets = [0, 64], sizes = [8, 32], strides = [1, 1]} : vector<8x128xf32> to vector<8x32xf32>
    %386 = vector.extract_strided_slice %382 {offsets = [0, 96], sizes = [8, 32], strides = [1, 1]} : vector<8x128xf32> to vector<8x32xf32>
    %387 = arith.mulf %384, %305 : vector<8x32xf32>
    %388 = arith.mulf %383, %385 : vector<8x32xf32>
    %389 = arith.addf %387, %388 : vector<8x32xf32>
    %390 = math.tanh %389 : vector<8x32xf32>
    %391 = arith.mulf %386, %390 : vector<8x32xf32>
    %392 = vector.shape_cast %309 : vector<8x1xi1> to vector<8x1xi1>
    %393 = vector.broadcast %392 : vector<8x1xi1> to vector<8x32xi1>
    %394 = arith.select %393, %391, %302 : vector<8x32xi1>, vector<8x32xf32>
    %395 = vector.shape_cast %309 : vector<8x1xi1> to vector<8x1xi1>
    %396 = vector.broadcast %395 : vector<8x1xi1> to vector<8x32xi1>
    %397 = arith.select %396, %389, %305 : vector<8x32xi1>, vector<8x32xf32>
    %c4_i32_90 = arith.constant 4 : i32
    %c0_91 = arith.constant 0 : index
    %c0_92 = arith.constant 0 : index
    %398 = vector.load %arg14[%c0_91, %c0_92] : memref<8x32xf32, #tpu.memory_space<vmem>>, vector<8x32xf32>
    tpu.vector_store %arg14[%c0_91, %c0_92], %336 {strides = array<i32>} : memref<8x32xf32, #tpu.memory_space<vmem>>, vector<8x32xf32>,
    %c0_93 = arith.constant 0 : index
    %c0_94 = arith.constant 0 : index
    %399 = vector.load %arg15[%c0_93, %c0_94] : memref<8x32xf32, #tpu.memory_space<vmem>>, vector<8x32xf32>
    tpu.vector_store %arg15[%c0_93, %c0_94], %339 {strides = array<i32>} : memref<8x32xf32, #tpu.memory_space<vmem>>, vector<8x32xf32>,
    %c0_95 = arith.constant 0 : index
    %c0_96 = arith.constant 0 : index
    %400 = vector.load %arg16[%c0_95, %c0_96] : memref<8x32xf32, #tpu.memory_space<vmem>>, vector<8x32xf32>
    tpu.vector_store %arg16[%c0_95, %c0_96], %365 {strides = array<i32>} : memref<8x32xf32, #tpu.memory_space<vmem>>, vector<8x32xf32>,
    %c0_97 = arith.constant 0 : index
    %c0_98 = arith.constant 0 : index
    %401 = vector.load %arg17[%c0_97, %c0_98] : memref<8x32xf32, #tpu.memory_space<vmem>>, vector<8x32xf32>
    tpu.vector_store %arg17[%c0_97, %c0_98], %368 {strides = array<i32>} : memref<8x32xf32, #tpu.memory_space<vmem>>, vector<8x32xf32>,
    %c0_99 = arith.constant 0 : index
    %c0_100 = arith.constant 0 : index
    %402 = vector.load %arg18[%c0_99, %c0_100] : memref<8x32xf32, #tpu.memory_space<vmem>>, vector<8x32xf32>
    tpu.vector_store %arg18[%c0_99, %c0_100], %394 {strides = array<i32>} : memref<8x32xf32, #tpu.memory_space<vmem>>, vector<8x32xf32>,
    %c0_101 = arith.constant 0 : index
    %c0_102 = arith.constant 0 : index
    %403 = vector.load %arg19[%c0_101, %c0_102] : memref<8x32xf32, #tpu.memory_space<vmem>>, vector<8x32xf32>
    tpu.vector_store %arg19[%c0_101, %c0_102], %397 {strides = array<i32>} : memref<8x32xf32, #tpu.memory_space<vmem>>, vector<8x32xf32>,
    %c1_i32_103 = arith.constant 1 : i32
    %404 = arith.cmpi eq, %arg1, %c1_i32_103 : i32
    %405 = arith.extui %404 : i1 to i32
    %c0_i32_104 = arith.constant 0 : i32
    %406 = arith.cmpi ne, %405, %c0_i32_104 : i32
    scf.if %406 {
      %407 = arith.truncf %394 : vector<8x32xf32> to vector<8x32xbf16>
      %c0_105 = arith.constant 0 : index
      %c0_106 = arith.constant 0 : index
      %408 = vector.load %arg11[%c0_105, %c0_106] : memref<32x2xbf16, #tpu.memory_space<vmem>>, vector<32x2xbf16>
      %cst_107 = arith.constant dense<0.000000e+00> : vector<8x2xf32>
      %409 = tpu.matmul %407, %408, %cst_107 {dimension_numbers = #tpu.dot_dimension_numbers<[1], [0], [0], [1], [0, 0, 1, 1], [], []>} : vector<8x32xbf16>, vector<32x2xbf16>, vector<8x2xf32> -> vector<8x2xf32>
      %c0_108 = arith.constant 0 : index
      %c0_109 = arith.constant 0 : index
      %410 = vector.load %arg12[%c0_108, %c0_109] : memref<1x2xf32, #tpu.memory_space<vmem>>, vector<1x2xf32>
      %411 = vector.broadcast %410 : vector<1x2xf32> to vector<8x2xf32>
      %412 = arith.addf %409, %411 : vector<8x2xf32>
      %cst_110 = arith.constant 0.000000e+00 : f32
      %413 = vector.broadcast %cst_110 : f32 to vector<8x2xf32>
      %414 = arith.cmpf oge, %412, %413 : vector<8x2xf32>
      %cst_111 = arith.constant 0.00999999977 : f32
      %415 = vector.broadcast %cst_111 : f32 to vector<8x2xf32>
      %416 = arith.mulf %415, %412 : vector<8x2xf32>
      %417 = arith.select %414, %412, %416 : vector<8x2xi1>, vector<8x2xf32>
      %c0_112 = arith.constant 0 : index
      %c0_113 = arith.constant 0 : index
      %418 = vector.load %arg13[%c0_112, %c0_113] : memref<8x2xf32, #tpu.memory_space<vmem>>, vector<8x2xf32>
      tpu.vector_store %arg13[%c0_112, %c0_113], %417 {strides = array<i32>} : memref<8x2xf32, #tpu.memory_space<vmem>>, vector<8x2xf32>,
    } else {
    }
    return
  }
  func.func @transform_0(%arg0: i32, %arg1: i32) -> (i32, i32) {
    %c0_i32 = arith.constant 0 : i32
    %c0_i32_0 = arith.constant 0 : i32
    return %arg0, %c0_i32 : i32, i32
  }
  func.func @transform_1(%arg0: i32, %arg1: i32) -> (i32, i32, i32) {
    %c0_i32 = arith.constant 0 : i32
    %c0_i32_0 = arith.constant 0 : i32
    return %arg0, %arg1, %c0_i32 : i32, i32, i32
  }
  func.func @transform_2(%arg0: i32, %arg1: i32) -> (i32, i32) {
    %c0_i32 = arith.constant 0 : i32
    %c0_i32_0 = arith.constant 0 : i32
    %c0_i32_1 = arith.constant 0 : i32
    return %c0_i32, %c0_i32_0 : i32, i32
  }
  func.func @transform_3(%arg0: i32, %arg1: i32) -> (i32, i32) {
    %c0_i32 = arith.constant 0 : i32
    %c0_i32_0 = arith.constant 0 : i32
    %c0_i32_1 = arith.constant 0 : i32
    return %c0_i32, %c0_i32_0 : i32, i32
  }
  func.func @transform_4(%arg0: i32, %arg1: i32) -> (i32, i32) {
    %c0_i32 = arith.constant 0 : i32
    %c0_i32_0 = arith.constant 0 : i32
    %c0_i32_1 = arith.constant 0 : i32
    return %c0_i32, %c0_i32_0 : i32, i32
  }
  func.func @transform_5(%arg0: i32, %arg1: i32) -> (i32, i32) {
    %c0_i32 = arith.constant 0 : i32
    %c0_i32_0 = arith.constant 0 : i32
    %c0_i32_1 = arith.constant 0 : i32
    return %c0_i32, %c0_i32_0 : i32, i32
  }
  func.func @transform_6(%arg0: i32, %arg1: i32) -> (i32, i32) {
    %c0_i32 = arith.constant 0 : i32
    %c0_i32_0 = arith.constant 0 : i32
    %c0_i32_1 = arith.constant 0 : i32
    return %c0_i32, %c0_i32_0 : i32, i32
  }
  func.func @transform_7(%arg0: i32, %arg1: i32) -> (i32, i32) {
    %c0_i32 = arith.constant 0 : i32
    %c0_i32_0 = arith.constant 0 : i32
    %c0_i32_1 = arith.constant 0 : i32
    return %c0_i32, %c0_i32_0 : i32, i32
  }
  func.func @transform_8(%arg0: i32, %arg1: i32) -> (i32, i32) {
    %c0_i32 = arith.constant 0 : i32
    %c0_i32_0 = arith.constant 0 : i32
    %c0_i32_1 = arith.constant 0 : i32
    return %c0_i32, %c0_i32_0 : i32, i32
  }
  func.func @transform_9(%arg0: i32, %arg1: i32) -> (i32, i32) {
    %c0_i32 = arith.constant 0 : i32
    %c0_i32_0 = arith.constant 0 : i32
    %c0_i32_1 = arith.constant 0 : i32
    return %c0_i32, %c0_i32_0 : i32, i32
  }
  func.func @transform_10(%arg0: i32, %arg1: i32) -> (i32, i32) {
    %c0_i32 = arith.constant 0 : i32
    %c0_i32_0 = arith.constant 0 : i32
    %c0_i32_1 = arith.constant 0 : i32
    return %c0_i32, %c0_i32_0 : i32, i32
  }
  func.func @transform_11(%arg0: i32, %arg1: i32) -> (i32, i32) {
    %c0_i32 = arith.constant 0 : i32
    %c0_i32_0 = arith.constant 0 : i32
    return %arg0, %c0_i32 : i32, i32
  }
}

</mosaic_0001>

<llo_original>
// kernel: tpu_custom_call.1
$region0: #{tpu_custom_call.1}
  #allocation0 [shape = 'u32[]', space=smem, size = 0x4, offset = 0x4, fixed_abs, tag = 'smem constant byte address 0x4 - core index']
  #allocation1 [shape = 'u32[144,128]{1,0:T(1,128)}', space=vmem, size = 0x12000, scoped, tag = 'internal scratch']
  #allocation2 [shape = 'f32[8,32]{1,0:T(8,128)}', space=vmem, size = 0x1000, scoped, tag = 'scratch operand']
  #allocation3 [shape = 'f32[8,32]{1,0:T(8,128)}', space=vmem, size = 0x1000, scoped, tag = 'scratch operand']
  #allocation4 [shape = 'f32[8,32]{1,0:T(8,128)}', space=vmem, size = 0x1000, scoped, tag = 'scratch operand']
  #allocation5 [shape = 'f32[8,32]{1,0:T(8,128)}', space=vmem, size = 0x1000, scoped, tag = 'scratch operand']
  #allocation6 [shape = 'f32[8,32]{1,0:T(8,128)}', space=vmem, size = 0x1000, scoped, tag = 'scratch operand']
  #allocation7 [shape = 'f32[8,32]{1,0:T(8,128)}', space=vmem, size = 0x1000, scoped, tag = 'scratch operand']
  #allocation8 [shape = 'f32[32,128]{1,0:T(8,128)}', space=vmem, size = 0x4000, scoped, tag = 'scratch operand']
  %s0 = inlined_call_operand.vmem [shape: s32[8,1], index: 0, kind: input, shape index: {}]
  %s1 = inlined_call_operand.vmem [shape: bf16[1,64,16], index: 1, kind: input, shape index: {}]
  %s2 = inlined_call_operand.vmem [shape: bf16[16,128], index: 2, kind: input, shape index: {}]
  %s3 = inlined_call_operand.hbm [shape: bf16[32,128], index: 3, kind: input, shape index: {}]
  %s4 = inlined_call_operand.vmem [shape: f32[1,128], index: 4, kind: input, shape index: {}]
  %s5 = inlined_call_operand.vmem [shape: bf16[64,128], index: 5, kind: input, shape index: {}]
  %s6 = inlined_call_operand.vmem [shape: f32[1,128], index: 6, kind: input, shape index: {}]
  %s7 = inlined_call_operand.vmem [shape: bf16[64,128], index: 7, kind: input, shape index: {}]
  %s8 = inlined_call_operand.vmem [shape: f32[1,128], index: 8, kind: input, shape index: {}]
  %s9 = inlined_call_operand.vmem [shape: bf16[32,2], index: 9, kind: input, shape index: {}]
  %s10 = inlined_call_operand.vmem [shape: f32[1,2], index: 10, kind: input, shape index: {}]
  %s11 = inlined_call_operand.vmem [shape: f32[8,2], index: 11, kind: output, shape index: {}]
  %s12 = sld [smem:[#allocation0]]
  $region89: #{tpu_custom_call.1} parent=0
    _
  %s14 = ssub.s32 1, %s12
  %s15 = scalar_select 0, %s14, %s12
  $region1: #{tpu_custom_call.1} parent=0
    #allocation9 [shape = 'u8[8192]{0}', space=vmem, size = 0x2000, scoped, tag = 'input window, operand 3, single buffered']
    #allocation10 [shape = 's32[2]{0}', space=sflag, size = 0x8, scoped, tag = 'scoped memory for tpu_custom_call.1']
    %16 = vsyncpa [#allocation10], 0
    loop: start=0, step=1, limit=4
    $region2: #{tpu_custom_call.1} parent=1 // loop_pre_header
      _
    $region3: #{tpu_custom_call.1} parent=1 // loop_header
      %s18 = sphi 0, %s22
      %p19 = scmp.ge.s32.totalorder %s18, 4
      %s25 = sphi 0, %s37
      %s26 = sphi 0, %s33
      %s27 = sphi 0, %s25
      %s28 = sphi 0, %s26
      %s29 = sphi 0, %s27
      %s30 = sphi 0, %s28
      %s40 = sphi 0, %s42
      %s43 = sphi 0, %s40
      %s44 = sphi 0, %s43
      %s60 = sphi 0, %s44
      %s68 = sphi 0, %s70
      %s71 = sphi 0, %s68
      %s72 = sphi 0, %s71
      %s88 = sphi 0, %s72
      %s92 = sphi 0, %s92
      %s94 = sphi 0, %s92
      %s95 = sphi 0, %s94
      %s109 = sphi 0, %s95
      %s113 = sphi 0, %s113
      %s115 = sphi 0, %s113
      %s116 = sphi 0, %s115
      %s130 = sphi 0, %s116
      %s134 = sphi 0, %s134
      %s136 = sphi 0, %s134
      %s137 = sphi 0, %s136
      %s151 = sphi 0, %s137
      %s155 = sphi 0, %s155
      %s157 = sphi 0, %s155
      %s158 = sphi 0, %s157
      %s172 = sphi 0, %s158
      %s176 = sphi 0, %s176
      %s178 = sphi 0, %s176
      %s179 = sphi 0, %s178
      %s193 = sphi 0, %s179
      %s197 = sphi 0, %s197
      %s199 = sphi 0, %s197
      %s200 = sphi 0, %s199
      %s214 = sphi 0, %s200
      %s218 = sphi 0, %s218
      %s220 = sphi 0, %s218
      %s221 = sphi 0, %s220
      %s235 = sphi 0, %s221
      %s239 = sphi 0, %s239
      %s241 = sphi 0, %s239
      %s242 = sphi 0, %s241
      %s256 = sphi 0, %s242
      %s260 = sphi 0, %s260
      %s262 = sphi 0, %s260
      %s263 = sphi 0, %s262
      %s277 = sphi 0, %s263
      %s283 = sphi 0, %s285
      %s286 = sphi 0, %s283
      %s287 = sphi 0, %s286
      %s303 = sphi 0, %s287
    $region4: #{tpu_custom_call.1} parent=1 // loop_header_branch
      %21 = sbr.rel (%p19) target = $region8
    $region5: #{tpu_custom_call.1} parent=1 // loop_body
      %s23 = ssub.s32 %s18, 1
      %s24 = ssub.s32 %s18, 2
      %s31 = sadd.s32 1, %s26
      %p32 = scmp.ge.s32.totalorder %s31, 2
      %s33 = scalar_select %p32, 0, %s31
      %s34 = sadd.s32 1, %s25
      %s35 = scalar_select %p32, %s34, %s25
      %p36 = scmp.ge.s32.totalorder %s35, 1
      %s37 = scalar_select %p36, 0, %s35
      %s38 = ssub.s32 %s25, %s37
      %p39 = scmp.eq.s32.totalorder %s38, 0
      %s41 = sadd.s32 %s40, 1
      %s42 = scalar_select %p39, %s40, %s41
      %p45 = pneg %p39
      %p46 = scmp.eq.s32.totalorder %s18, 1
      %p47 = por %p45, %p46
      %p48 = scmp.ne.s32.totalorder %s40, %s43
      %p49 = scmp.eq.s32.totalorder %s18, 0
      %p50 = por %p48, %p49
      %p51 = scmp.ne.s32.totalorder %s40, %s43
      %p52 = scmp.eq.s32.totalorder %s23, 1
      %p53 = por %p51, %p52
      %p54 = scmp.ne.s32.totalorder %s43, %s44
      %p55 = scmp.eq.s32.totalorder %s23, 0
      %p56 = por %p54, %p55
      %p57 = scmp.ne.s32.totalorder %s43, %s44
      %p58 = scmp.eq.s32.totalorder %s24, 1
      %p59 = por %p57, %p58
      %p61 = scmp.ne.s32.totalorder %s44, %s60
      %p62 = scmp.eq.s32.totalorder %s24, 0
      %p63 = por %p61, %p62
      %s64 = ssub.s32 %s25, %s37
      %s65 = ssub.s32 %s26, %s33
      %s66 = sor.u32 %s64, %s65
      %p67 = scmp.eq.s32.totalorder %s66, 0
      %s69 = sadd.s32 %s68, 1
      %s70 = scalar_select %p67, %s68, %s69
      %p73 = pneg %p67
      %p74 = scmp.eq.s32.totalorder %s18, 1
      %p75 = por %p73, %p74
      %p76 = scmp.ne.s32.totalorder %s68, %s71
      %p77 = scmp.eq.s32.totalorder %s18, 0
      %p78 = por %p76, %p77
      %p79 = scmp.ne.s32.totalorder %s68, %s71
      %p80 = scmp.eq.s32.totalorder %s23, 1
      %p81 = por %p79, %p80
      %p82 = scmp.ne.s32.totalorder %s71, %s72
      %p83 = scmp.eq.s32.totalorder %s23, 0
      %p84 = por %p82, %p83
      %p85 = scmp.ne.s32.totalorder %s71, %s72
      %p86 = scmp.eq.s32.totalorder %s24, 1
      %p87 = por %p85, %p86
      %p89 = scmp.ne.s32.totalorder %s72, %s88
      %p90 = scmp.eq.s32.totalorder %s24, 0
      %p91 = por %p89, %p90
      %s93 = sadd.s32 %s92, 1
      %p96 = scmp.eq.s32.totalorder %s18, 1
      %p97 = scmp.ne.s32.totalorder %s92, %s94
      %p98 = scmp.eq.s32.totalorder %s18, 0
      %p99 = por %p97, %p98
      %p100 = scmp.ne.s32.totalorder %s92, %s94
      %p101 = scmp.eq.s32.totalorder %s23, 1
      %p102 = por %p100, %p101
      %p103 = scmp.ne.s32.totalorder %s94, %s95
      %p104 = scmp.eq.s32.totalorder %s23, 0
      %p105 = por %p103, %p104
      %p106 = scmp.ne.s32.totalorder %s94, %s95
      %p107 = scmp.eq.s32.totalorder %s24, 1
      %p108 = por %p106, %p107
      %p110 = scmp.ne.s32.totalorder %s95, %s109
      %p111 = scmp.eq.s32.totalorder %s24, 0
      %p112 = por %p110, %p111
      %s114 = sadd.s32 %s113, 1
      %p117 = scmp.eq.s32.totalorder %s18, 1
      %p118 = scmp.ne.s32.totalorder %s113, %s115
      %p119 = scmp.eq.s32.totalorder %s18, 0
      %p120 = por %p118, %p119
      %p121 = scmp.ne.s32.totalorder %s113, %s115
      %p122 = scmp.eq.s32.totalorder %s23, 1
      %p123 = por %p121, %p122
      %p124 = scmp.ne.s32.totalorder %s115, %s116
      %p125 = scmp.eq.s32.totalorder %s23, 0
      %p126 = por %p124, %p125
      %p127 = scmp.ne.s32.totalorder %s115, %s116
      %p128 = scmp.eq.s32.totalorder %s24, 1
      %p129 = por %p127, %p128
      %p131 = scmp.ne.s32.totalorder %s116, %s130
      %p132 = scmp.eq.s32.totalorder %s24, 0
      %p133 = por %p131, %p132
      %s135 = sadd.s32 %s134, 1
      %p138 = scmp.eq.s32.totalorder %s18, 1
      %p139 = scmp.ne.s32.totalorder %s134, %s136
      %p140 = scmp.eq.s32.totalorder %s18, 0
      %p141 = por %p139, %p140
      %p142 = scmp.ne.s32.totalorder %s134, %s136
      %p143 = scmp.eq.s32.totalorder %s23, 1
      %p144 = por %p142, %p143
      %p145 = scmp.ne.s32.totalorder %s136, %s137
      %p146 = scmp.eq.s32.totalorder %s23, 0
      %p147 = por %p145, %p146
      %p148 = scmp.ne.s32.totalorder %s136, %s137
      %p149 = scmp.eq.s32.totalorder %s24, 1
      %p150 = por %p148, %p149
      %p152 = scmp.ne.s32.totalorder %s137, %s151
      %p153 = scmp.eq.s32.totalorder %s24, 0
      %p154 = por %p152, %p153
      %s156 = sadd.s32 %s155, 1
      %p159 = scmp.eq.s32.totalorder %s18, 1
      %p160 = scmp.ne.s32.totalorder %s155, %s157
      %p161 = scmp.eq.s32.totalorder %s18, 0
      %p162 = por %p160, %p161
      %p163 = scmp.ne.s32.totalorder %s155, %s157
      %p164 = scmp.eq.s32.totalorder %s23, 1
      %p165 = por %p163, %p164
      %p166 = scmp.ne.s32.totalorder %s157, %s158
      %p167 = scmp.eq.s32.totalorder %s23, 0
      %p168 = por %p166, %p167
      %p169 = scmp.ne.s32.totalorder %s157, %s158
      %p170 = scmp.eq.s32.totalorder %s24, 1
      %p171 = por %p169, %p170
      %p173 = scmp.ne.s32.totalorder %s158, %s172
      %p174 = scmp.eq.s32.totalorder %s24, 0
      %p175 = por %p173, %p174
      %s177 = sadd.s32 %s176, 1
      %p180 = scmp.eq.s32.totalorder %s18, 1
      %p181 = scmp.ne.s32.totalorder %s176, %s178
      %p182 = scmp.eq.s32.totalorder %s18, 0
      %p183 = por %p181, %p182
      %p184 = scmp.ne.s32.totalorder %s176, %s178
      %p185 = scmp.eq.s32.totalorder %s23, 1
      %p186 = por %p184, %p185
      %p187 = scmp.ne.s32.totalorder %s178, %s179
      %p188 = scmp.eq.s32.totalorder %s23, 0
      %p189 = por %p187, %p188
      %p190 = scmp.ne.s32.totalorder %s178, %s179
      %p191 = scmp.eq.s32.totalorder %s24, 1
      %p192 = por %p190, %p191
      %p194 = scmp.ne.s32.totalorder %s179, %s193
      %p195 = scmp.eq.s32.totalorder %s24, 0
      %p196 = por %p194, %p195
      %s198 = sadd.s32 %s197, 1
      %p201 = scmp.eq.s32.totalorder %s18, 1
      %p202 = scmp.ne.s32.totalorder %s197, %s199
      %p203 = scmp.eq.s32.totalorder %s18, 0
      %p204 = por %p202, %p203
      %p205 = scmp.ne.s32.totalorder %s197, %s199
      %p206 = scmp.eq.s32.totalorder %s23, 1
      %p207 = por %p205, %p206
      %p208 = scmp.ne.s32.totalorder %s199, %s200
      %p209 = scmp.eq.s32.totalorder %s23, 0
      %p210 = por %p208, %p209
      %p211 = scmp.ne.s32.totalorder %s199, %s200
      %p212 = scmp.eq.s32.totalorder %s24, 1
      %p213 = por %p211, %p212
      %p215 = scmp.ne.s32.totalorder %s200, %s214
      %p216 = scmp.eq.s32.totalorder %s24, 0
      %p217 = por %p215, %p216
      %s219 = sadd.s32 %s218, 1
      %p222 = scmp.eq.s32.totalorder %s18, 1
      %p223 = scmp.ne.s32.totalorder %s218, %s220
      %p224 = scmp.eq.s32.totalorder %s18, 0
      %p225 = por %p223, %p224
      %p226 = scmp.ne.s32.totalorder %s218, %s220
      %p227 = scmp.eq.s32.totalorder %s23, 1
      %p228 = por %p226, %p227
      %p229 = scmp.ne.s32.totalorder %s220, %s221
      %p230 = scmp.eq.s32.totalorder %s23, 0
      %p231 = por %p229, %p230
      %p232 = scmp.ne.s32.totalorder %s220, %s221
      %p233 = scmp.eq.s32.totalorder %s24, 1
      %p234 = por %p232, %p233
      %p236 = scmp.ne.s32.totalorder %s221, %s235
      %p237 = scmp.eq.s32.totalorder %s24, 0
      %p238 = por %p236, %p237
      %s240 = sadd.s32 %s239, 1
      %p243 = scmp.eq.s32.totalorder %s18, 1
      %p244 = scmp.ne.s32.totalorder %s239, %s241
      %p245 = scmp.eq.s32.totalorder %s18, 0
      %p246 = por %p244, %p245
      %p247 = scmp.ne.s32.totalorder %s239, %s241
      %p248 = scmp.eq.s32.totalorder %s23, 1
      %p249 = por %p247, %p248
      %p250 = scmp.ne.s32.totalorder %s241, %s242
      %p251 = scmp.eq.s32.totalorder %s23, 0
      %p252 = por %p250, %p251
      %p253 = scmp.ne.s32.totalorder %s241, %s242
      %p254 = scmp.eq.s32.totalorder %s24, 1
      %p255 = por %p253, %p254
      %p257 = scmp.ne.s32.totalorder %s242, %s256
      %p258 = scmp.eq.s32.totalorder %s24, 0
      %p259 = por %p257, %p258
      %s261 = sadd.s32 %s260, 1
      %p264 = scmp.eq.s32.totalorder %s18, 1
      %p265 = scmp.ne.s32.totalorder %s260, %s262
      %p266 = scmp.eq.s32.totalorder %s18, 0
      %p267 = por %p265, %p266
      %p268 = scmp.ne.s32.totalorder %s260, %s262
      %p269 = scmp.eq.s32.totalorder %s23, 1
      %p270 = por %p268, %p269
      %p271 = scmp.ne.s32.totalorder %s262, %s263
      %p272 = scmp.eq.s32.totalorder %s23, 0
      %p273 = por %p271, %p272
      %p274 = scmp.ne.s32.totalorder %s262, %s263
      %p275 = scmp.eq.s32.totalorder %s24, 1
      %p276 = por %p274, %p275
      %p278 = scmp.ne.s32.totalorder %s263, %s277
      %p279 = scmp.eq.s32.totalorder %s24, 0
      %p280 = por %p278, %p279
      %s281 = ssub.s32 %s25, %s37
      %p282 = scmp.eq.s32.totalorder %s281, 0
      %s284 = sadd.s32 %s283, 1
      %s285 = scalar_select %p282, %s283, %s284
      %p288 = pneg %p282
      %p289 = scmp.eq.s32.totalorder %s18, 1
      %p290 = por %p288, %p289
      %p291 = scmp.ne.s32.totalorder %s283, %s286
      %p292 = scmp.eq.s32.totalorder %s18, 0
      %p293 = por %p291, %p292
      %p294 = scmp.ne.s32.totalorder %s283, %s286
      %p295 = scmp.eq.s32.totalorder %s23, 1
      %p296 = por %p294, %p295
      %p297 = scmp.ne.s32.totalorder %s286, %s287
      %p298 = scmp.eq.s32.totalorder %s23, 0
      %p299 = por %p297, %p298
      %p300 = scmp.ne.s32.totalorder %s286, %s287
      %p301 = scmp.eq.s32.totalorder %s24, 1
      %p302 = por %p300, %p301
      %p304 = scmp.ne.s32.totalorder %s287, %s303
      %p305 = scmp.eq.s32.totalorder %s24, 0
      %p306 = por %p304, %p305
      %p307 = scmp.le.s32.totalorder 1, %s18
      %p308 = scmp.lt.s32.totalorder %s18, 3
      %p309 = pnand %p307, %p308
      %p310 = pneg %p309
      // Predicated region
      $region9: #{tpu_custom_call.1} parent=5 // pred_check
        _
      $region10: #{tpu_custom_call.1} parent=5 // pred_check_branch
        %312 = sbr.rel (%p309) target = $region12
      $region11: #{tpu_custom_call.1} parent=5 // pred_region
        %s313 = ssub.s32 %s18, 1
        // Predicated region
        $region13: #{tpu_custom_call.1} parent=11 // pred_check
          %p314 = pneg %p56
        $region14: #{tpu_custom_call.1} parent=11 // pred_check_branch
          %316 = sbr.rel (%p314) target = $region16
        $region15: #{tpu_custom_call.1} parent=11 // pred_region
          %p317 = scmp.lt.s32.totalorder %s27, 0
          %s318 = scalar_select %p317, %s27, 0
          %s319 = smul.addr %s318, 8
          %s320 = scalar_lea.vmem %s0, %s319
        $region16: #{tpu_custom_call.1} parent=11 // pred_fallthru
          _
        // Predicated region
        $region17: #{tpu_custom_call.1} parent=11 // pred_check
          %p321 = pneg %p105
        $region18: #{tpu_custom_call.1} parent=11 // pred_check_branch
          %323 = sbr.rel (%p321) target = $region20
        $region19: #{tpu_custom_call.1} parent=11 // pred_region
          _
        $region20: #{tpu_custom_call.1} parent=11 // pred_fallthru
          _
        // Predicated region
        $region21: #{tpu_custom_call.1} parent=11 // pred_check
          %p324 = pneg %p126
        $region22: #{tpu_custom_call.1} parent=11 // pred_check_branch
          %326 = sbr.rel (%p324) target = $region24
        $region23: #{tpu_custom_call.1} parent=11 // pred_region
          %s328 = ssub.s32 256, 256
          %329 = vsyncadd [#allocation10], %s328
          %s330 = sshll.u32 [#allocation9], 4
          %s331 = int_to_ptr.vmem [resolvable:$true] %s330
          %336 = dma.hbm_to_vmem [thread:$0]  %s3, 256, %s331, [#allocation10], 64, 64, 4
        $region24: #{tpu_custom_call.1} parent=11 // pred_fallthru
          _
        // Predicated region
        $region25: #{tpu_custom_call.1} parent=11 // pred_check
          %p337 = pneg %p147
        $region26: #{tpu_custom_call.1} parent=11 // pred_check_branch
          %339 = sbr.rel (%p337) target = $region28
        $region27: #{tpu_custom_call.1} parent=11 // pred_region
          _
        $region28: #{tpu_custom_call.1} parent=11 // pred_fallthru
          _
        // Predicated region
        $region29: #{tpu_custom_call.1} parent=11 // pred_check
          %p340 = pneg %p168
        $region30: #{tpu_custom_call.1} parent=11 // pred_check_branch
          %342 = sbr.rel (%p340) target = $region32
        $region31: #{tpu_custom_call.1} parent=11 // pred_region
          _
        $region32: #{tpu_custom_call.1} parent=11 // pred_fallthru
          _
        // Predicated region
        $region33: #{tpu_custom_call.1} parent=11 // pred_check
          %p343 = pneg %p189
        $region34: #{tpu_custom_call.1} parent=11 // pred_check_branch
          %345 = sbr.rel (%p343) target = $region36
        $region35: #{tpu_custom_call.1} parent=11 // pred_region
          _
        $region36: #{tpu_custom_call.1} parent=11 // pred_fallthru
          _
        // Predicated region
        $region37: #{tpu_custom_call.1} parent=11 // pred_check
          %p346 = pneg %p210
        $region38: #{tpu_custom_call.1} parent=11 // pred_check_branch
          %348 = sbr.rel (%p346) target = $region40
        $region39: #{tpu_custom_call.1} parent=11 // pred_region
          _
        $region40: #{tpu_custom_call.1} parent=11 // pred_fallthru
          _
        // Predicated region
        $region41: #{tpu_custom_call.1} parent=11 // pred_check
          %p349 = pneg %p231
        $region42: #{tpu_custom_call.1} parent=11 // pred_check_branch
          %351 = sbr.rel (%p349) target = $region44
        $region43: #{tpu_custom_call.1} parent=11 // pred_region
          _
        $region44: #{tpu_custom_call.1} parent=11 // pred_fallthru
          _
        // Predicated region
        $region45: #{tpu_custom_call.1} parent=11 // pred_check
          %p352 = pneg %p252
        $region46: #{tpu_custom_call.1} parent=11 // pred_check_branch
          %354 = sbr.rel (%p352) target = $region48
        $region47: #{tpu_custom_call.1} parent=11 // pred_region
          _
        $region48: #{tpu_custom_call.1} parent=11 // pred_fallthru
          _
        // Predicated region
        $region49: #{tpu_custom_call.1} parent=11 // pred_check
          %p355 = pneg %p273
        $region50: #{tpu_custom_call.1} parent=11 // pred_check_branch
          %357 = sbr.rel (%p355) target = $region52
        $region51: #{tpu_custom_call.1} parent=11 // pred_region
          _
        $region52: #{tpu_custom_call.1} parent=11 // pred_fallthru
          _
      $region12: #{tpu_custom_call.1} parent=5 // pred_fallthru
        _
      %p358 = scmp.lt.s32.totalorder %s18, 2
      // Predicated region
      $region53: #{tpu_custom_call.1} parent=5 // pred_check
        %p359 = pneg %p358
      $region54: #{tpu_custom_call.1} parent=5 // pred_check_branch
        %361 = sbr.rel (%p359) target = $region56
      $region55: #{tpu_custom_call.1} parent=5 // pred_region
        // Predicated region
        $region57: #{tpu_custom_call.1} parent=55 // pred_check
          %p362 = pneg %p78
        $region58: #{tpu_custom_call.1} parent=55 // pred_check_branch
          %364 = sbr.rel (%p362) target = $region60
        $region59: #{tpu_custom_call.1} parent=55 // pred_region
          %s365 = smul.u32 4, %s26
          %p366 = scmp.lt.s32.totalorder %s25, 0
          %s367 = scalar_select %p366, %s25, 0
          %p368 = scmp.lt.s32.totalorder %s365, 7
          %s369 = scalar_select %p368, %s365, 7
          %s370 = smul.addr %s367, 8
          %s371 = sadd.s32 %s369, %s370
          %s372 = smul.addr %s371, 4
          %s373 = scalar_lea.vmem %s1, %s372
          %s374 = smul.u32 4, %s26
        $region60: #{tpu_custom_call.1} parent=55 // pred_fallthru
          _
      $region56: #{tpu_custom_call.1} parent=5 // pred_fallthru
        _
      %p375 = scmp.le.s32.totalorder 1, %s18
      %p376 = scmp.lt.s32.totalorder %s18, 3
      %p377 = pnand %p375, %p376
      %p378 = pneg %p377
      // Predicated region
      $region61: #{tpu_custom_call.1} parent=5 // pred_check
        _
      $region62: #{tpu_custom_call.1} parent=5 // pred_check_branch
        %380 = sbr.rel (%p377) target = $region64
      $region63: #{tpu_custom_call.1} parent=5 // pred_region
        %s381 = ssub.s32 %s18, 1
        // Predicated region
        $region65: #{tpu_custom_call.1} parent=63 // pred_check
          %p382 = pneg %p126
        $region66: #{tpu_custom_call.1} parent=63 // pred_check_branch
          %384 = sbr.rel (%p382) target = $region68
        $region67: #{tpu_custom_call.1} parent=63 // pred_region
          %385 = dma.done [#allocation10], 256
        $region68: #{tpu_custom_call.1} parent=63 // pred_fallthru
          _
        %p386 = scmp.lt.s32.totalorder %s27, 0
        %s387 = scalar_select %p386, %s27, 0
        %s388 = smul.addr %s387, 8
        %s389 = scalar_lea.vmem %s0, %s388
        %p390 = pneg %p56
        %p391 = pneg %p53
        %s392 = smul.u32 4, %s28
        %p393 = scmp.lt.s32.totalorder %s27, 0
        %s394 = scalar_select %p393, %s27, 0
        %p395 = scmp.lt.s32.totalorder %s392, 7
        %s396 = scalar_select %p395, %s392, 7
        %s397 = smul.addr %s394, 8
        %s398 = sadd.s32 %s396, %s397
        %s399 = smul.addr %s398, 4
        %s400 = scalar_lea.vmem %s1, %s399
        %p401 = pneg %p84
        %p402 = pneg %p81
        %p403 = pneg %p105
        %p404 = pneg %p102
        %p405 = pneg %p126
        %p406 = pneg %p123
        %p407 = pneg %p147
        %p408 = pneg %p144
        %p409 = pneg %p168
        %p410 = pneg %p165
        %p411 = pneg %p189
        %p412 = pneg %p186
        %p413 = pneg %p210
        %p414 = pneg %p207
        %p415 = pneg %p231
        %p416 = pneg %p228
        %p417 = pneg %p252
        %p418 = pneg %p249
        %p419 = pneg %p273
        %p420 = pneg %p270
        %p421 = pneg %p299
        %p422 = pneg %p296
        %p423 = scmp.lt.s32.totalorder %s27, 0
        %s424 = scalar_select %p423, %s27, 0
        %s425 = smul.addr %s424, 8
        %s426 = scalar_lea.vmem %s11, %s425
        %p427 = scmp.lt.s32.totalorder %s27, 0
        %s428 = scalar_select %p427, %s27, 0
        %s429 = smul.addr %s428, 8
        %s430 = scalar_lea.vmem %s0, %s429
        %s431 = smul.u32 4, %s28
        %p432 = scmp.lt.s32.totalorder %s27, 0
        %s433 = scalar_select %p432, %s27, 0
        %p434 = scmp.lt.s32.totalorder %s431, 7
        %s435 = scalar_select %p434, %s431, 7
        %s436 = smul.addr %s433, 8
        %s437 = sadd.s32 %s435, %s436
        %s438 = smul.addr %s437, 4
        %s439 = scalar_lea.vmem %s1, %s438
        %s440 = smul.u32 4, %s28
        %p441 = scmp.lt.s32.totalorder %s27, 0
        %s442 = scalar_select %p441, %s27, 0
        %s443 = smul.addr %s442, 8
        %s444 = scalar_lea.vmem %s11, %s443
        %p446 = scmp.eq.s32.totalorder %s28, 0
        // Predicated region
        $region69: #{tpu_custom_call.1} parent=63 // pred_check
          %p447 = pneg %p446
        $region70: #{tpu_custom_call.1} parent=63 // pred_check_branch
          %449 = sbr.rel (%p447) target = $region72
        $region71: #{tpu_custom_call.1} parent=63 // pred_region
          %vm450 = vcmask 261120
          %451 = vst.msk [vmem:[#allocation2] sm:$0xff] %vm450, 0.0
          %452 = vst.msk [vmem:[#allocation3] sm:$0xff] %vm450, 0.0
          %453 = vst.msk [vmem:[#allocation4] sm:$0xff] %vm450, 0.0
          %454 = vst.msk [vmem:[#allocation5] sm:$0xff] %vm450, 0.0
          %455 = vst.msk [vmem:[#allocation6] sm:$0xff] %vm450, 0.0
          %456 = vst.msk [vmem:[#allocation7] sm:$0xff] %vm450, 0.0
        $region72: #{tpu_custom_call.1} parent=63 // pred_fallthru
          _
        %v457 = vld [vmem:[%s439] sm:$0xf]
        %v458 = vld [vmem:[%s439 + $0x4] sm:$0xf]
        %v459 = vld [vmem:[%s439 + $0x8] sm:$0xf]
        %v460 = vld [vmem:[%s439 + $0xc] sm:$0xf]
        %v461 = vld [vmem:[%s2] sm:$0xf]
        %v462 = vld [vmem:[%s2 + $0x4] sm:$0xf]
        %v463 = vld [vmem:[%s4] sm:$0x1]
        %v465 = vlaneseq
        %v466 = vshrl.u32 %v465, 7
        %v467 = vsub.s32 0, %v466
        %v468 = vrot.slane %v463, %v467
        %v474 = vunpack.c.l.b16 %v457
        %v475 = vunpack.c.l.b16 %v458
        %v476 = vunpack.c.l.b16 %v459
        %v477 = vunpack.c.l.b16 %v460
        %v478 = vpack.c.b16 %v475, %v474
        %v479 = vpack.c.b16 %v477, %v476
        %v482 = vunpack.c.l.b16 %v461
        %v483 = vunpack.c.l.b16 %v462
        %v484 = vpack.c.b16 %v483, %v482
        %vm486 = vcmask 130048
        %v488 = vsel %vm486, %v478, 0
        %v491 = vsel %vm486, %v479, 0
        %493 = vmatprep.subr.bf16.mxu0 0
        %494 = vmatpush1.bf16.msra.mxu0 %v484
        %495 = vmatprep.subr.bf16.mxu0 0
        %496 = vmatpush1.bf16.msra.mxu0 0
        %497 = vmatprep.subr.bf16.mxu0 0
        %498 = vmatpush1.bf16.msra.mxu0 0
        %499 = vmatprep.subr.bf16.mxu0 0
        %500 = vmatpush1.bf16.msra.mxu0 0
        %501 = vmatprep.subr.bf16.mxu0 0
        %502 = vmatpush1.bf16.msra.mxu0 0
        %503 = vmatprep.subr.bf16.mxu0 0
        %504 = vmatpush1.bf16.msra.mxu0 0
        %505 = vmatprep.subr.bf16.mxu0 0
        %506 = vmatpush1.bf16.msra.mxu0 0
        %507 = vmatprep.subr.bf16.mxu0 0
        %508 = vmatpush1.bf16.msra.mxu0 0
        %509 = vmatprep.subr.bf16.mxu0 0
        %510 = vmatpush1.bf16.msra.mxu0 0
        %511 = vmatprep.subr.bf16.mxu0 0
        %512 = vmatpush1.bf16.msra.mxu0 0
        %513 = vmatprep.subr.bf16.mxu0 0
        %514 = vmatpush1.bf16.msra.mxu0 0
        %515 = vmatprep.subr.bf16.mxu0 0
        %516 = vmatpush1.bf16.msra.mxu0 0
        %517 = vmatprep.subr.bf16.mxu0 0
        %518 = vmatpush1.bf16.msra.mxu0 0
        %519 = vmatprep.subr.bf16.mxu0 0
        %520 = vmatpush1.bf16.msra.mxu0 0
        %521 = vmatprep.subr.bf16.mxu0 0
        %522 = vmatpush1.bf16.msra.mxu0 0
        %523 = vmatprep.subr.bf16.mxu0 0
        %524 = vmatpush1.bf16.msra.mxu0 0
        %525 = vmatprep.mubr.bf16.mxu0 0
        %526 = vmatmul.mubr.bf16.gmra.mrb[0].mxu0 %v488
        %v527 = vpop.f32.mrb[0].mxu0
        %v528 = vadd.f32 %v468, %v527
        %v529 = vpop.f32.mrb[0].mxu0
        %v530 = vpop.f32.mrb[0].mxu0
        %v531 = vadd.f32 %v468, %v530
        %v532 = vpop.f32.mrb[0].mxu0
        %533 = vmatprep.mubr.bf16.mxu0 0
        %534 = vmatmul.mubr.bf16.gmra.mrb[0].mxu0 %v491
        %v535 = vpop.f32.mrb[0].mxu0
        %v536 = vadd.f32 %v468, %v535
        %v537 = vpop.f32.mrb[0].mxu0
        %v538 = vpop.f32.mrb[0].mxu0
        %v539 = vadd.f32 %v468, %v538
        %v540 = vpop.f32.mrb[0].mxu0
        %541 = vdwg.mxu0
        %542 = vst [vmem:[#allocation8] sm:$0xff] %v528
        %543 = vst [vmem:[#allocation8 + $0x8] sm:$0xff] %v531
        %544 = vst [vmem:[#allocation8 + $0x10] sm:$0xff] %v536
        %545 = vst [vmem:[#allocation8 + $0x18] sm:$0xff] %v539
        %v546 = vlaneseq
        %v547 = vand.u32 %v546, 127
        %vm548 = vcmp.ge.s32.totalorder %v547, 64
        %vm549 = vcmp.lt.s32.totalorder %v547, 96
        %vm550 = vmand %vm548, %vm549
        %v551 = vsel %vm550, 1.0, 0.5
        %v552 = vsel %vm550, 0.0, 0.5
        %v553 = vld [vmem:[%s430] sm:$0xff]
        %v554 = vld [vmem:[#allocation2] sm:$0xff]
        %v555 = vld [vmem:[#allocation3] sm:$0xff]
        %v556 = vld [vmem:[#allocation4] sm:$0xff]
        %v557 = vld [vmem:[#allocation5] sm:$0xff]
        %v558 = vld [vmem:[#allocation6] sm:$0xff]
        %v559 = vld [vmem:[#allocation7] sm:$0xff]
        %s560 = smul.u32 %s28, 4
        %v561 = vstv %s560
        %vm562 = vcmp.lt.s32.totalorder %v561, %v553
        %v563 = vld [vmem:[#allocation8] sm:$0xff]
        %v564 = vpack.c.bf16 %v554, %v554
        %v565 = vld [vmem:[#allocation9] sm:$0xf]
        %v566 = vld [vmem:[#allocation9 + $0x4] sm:$0xf]
        %v567 = vld [vmem:[#allocation9 + $0x8] sm:$0xf]
        %v568 = vld [vmem:[#allocation9 + $0xc] sm:$0xf]
        %v573 = vunpack.c.l.b16 %v565
        %v574 = vunpack.c.l.b16 %v566
        %v575 = vunpack.c.l.b16 %v567
        %v576 = vunpack.c.l.b16 %v568
        %v577 = vpack.c.b16 %v574, %v573
        %v578 = vpack.c.b16 %v576, %v575
        %vm581 = vcmask 261120
        %v583 = vsel %vm581, %v564, 0
        %585 = vmatprep.subr.bf16.mxu0 0
        %586 = vmatpush1.bf16.msra.mxu0 %v577
        %587 = vmatprep.subr.bf16.mxu0 0
        %588 = vmatpush1.bf16.msra.mxu0 %v578
        %589 = vmatprep.subr.bf16.mxu0 0
        %590 = vmatpush1.bf16.msra.mxu0 0
        %591 = vmatprep.subr.bf16.mxu0 0
        %592 = vmatpush1.bf16.msra.mxu0 0
        %593 = vmatprep.subr.bf16.mxu0 0
        %594 = vmatpush1.bf16.msra.mxu0 0
        %595 = vmatprep.subr.bf16.mxu0 0
        %596 = vmatpush1.bf16.msra.mxu0 0
        %597 = vmatprep.subr.bf16.mxu0 0
        %598 = vmatpush1.bf16.msra.mxu0 0
        %599 = vmatprep.subr.bf16.mxu0 0
        %600 = vmatpush1.bf16.msra.mxu0 0
        %601 = vmatprep.subr.bf16.mxu0 0
        %602 = vmatpush1.bf16.msra.mxu0 0
        %603 = vmatprep.subr.bf16.mxu0 0
        %604 = vmatpush1.bf16.msra.mxu0 0
        %605 = vmatprep.subr.bf16.mxu0 0
        %606 = vmatpush1.bf16.msra.mxu0 0
        %607 = vmatprep.subr.bf16.mxu0 0
        %608 = vmatpush1.bf16.msra.mxu0 0
        %609 = vmatprep.subr.bf16.mxu0 0
        %610 = vmatpush1.bf16.msra.mxu0 0
        %611 = vmatprep.subr.bf16.mxu0 0
        %612 = vmatpush1.bf16.msra.mxu0 0
        %613 = vmatprep.subr.bf16.mxu0 0
        %614 = vmatpush1.bf16.msra.mxu0 0
        %615 = vmatprep.subr.bf16.mxu0 0
        %616 = vmatpush1.bf16.msra.mxu0 0
        %617 = vmatprep.mubr.bf16.mxu0 0
        %618 = vmatmul.mubr.bf16.gmra.mrb[0].mxu0 %v583
        %v619 = vpop.f32.mrb[0].mxu0
        %v620 = vadd.f32 0.0, %v619
        %v621 = vpop.f32.mrb[0].mxu0
        %v622 = vpop.f32.mrb[0].mxu0
        %v623 = vpop.f32.mrb[0].mxu0
        %624 = vdwg.mxu0
        %v625 = vadd.f32 %v563, %v620
        %v626 = vmul.f32 %v551, %v625
        %v627 = vtanh.pop %v626
        %v628 = vmul.f32 %v551, %v627
        %v629 = vadd.f32 %v628, %v552
        %631 = vrot.lane.b32.xlu0 %v555, 32
        %v632 = vpop.permute.xlu0 %631
        %v634 = vmul.f32 %v629, %v632
        %636 = vrot.lane.b32.xlu0 %v629, 64
        %v637 = vpop.permute.xlu0 %636
        %v639 = vmul.f32 %v629, %v637
        %641 = vrot.lane.b32.xlu0 %v639, 32
        %v642 = vpop.permute.xlu0 %641
        %v644 = vadd.f32 %v634, %v642
        %v645 = vtanh.pop %v644
        %647 = vrot.lane.b32.xlu0 %v645, 64
        %v648 = vpop.permute.xlu0 %647
        %v650 = vmul.f32 %v629, %v648
        %v651 = vsel %vm562, 1, 0
        %652 = vset.pattern.permute.xlu0 0
        %653 = vperm.xlu0 %652, %v651
        %v654 = vpop.permute.xlu0 %653
        %vm655 = vcmp.eq.s32.totalorder %v654, 1
        %657 = vrot.lane.b32.xlu0 %v554, 96
        %v658 = vpop.permute.xlu0 %657
        %v660 = vsel %vm655, %v650, %v658
        %v661 = vsel %vm655, %v644, %v632
        %663 = vrot.lane.b32.xlu0 %v660, 32
        %v664 = vpop.permute.xlu0 %663
        %667 = vrot.lane.b32.xlu0 %v556, 32
        %v668 = vpop.permute.xlu0 %667
        %v670 = vsel %vm581, %v664, %v668
        %v671 = vpack.c.bf16 %v670, %v670
        %v672 = vld [vmem:[%s5] sm:$0xf]
        %v673 = vld [vmem:[%s5 + $0x4] sm:$0xf]
        %v674 = vld [vmem:[%s5 + $0x8] sm:$0xf]
        %v675 = vld [vmem:[%s5 + $0xc] sm:$0xf]
        %v676 = vld [vmem:[%s5 + $0x10] sm:$0xf]
        %v677 = vld [vmem:[%s5 + $0x14] sm:$0xf]
        %v678 = vld [vmem:[%s5 + $0x18] sm:$0xf]
        %v679 = vld [vmem:[%s5 + $0x1c] sm:$0xf]
        %v680 = vld [vmem:[%s6] sm:$0x1]
        %v682 = vlaneseq
        %v683 = vshrl.u32 %v682, 7
        %v684 = vsub.s32 0, %v683
        %v685 = vrot.slane %v680, %v684
        %v695 = vunpack.c.l.b16 %v672
        %v696 = vunpack.c.l.b16 %v673
        %v697 = vunpack.c.l.b16 %v674
        %v698 = vunpack.c.l.b16 %v675
        %v699 = vunpack.c.l.b16 %v676
        %v700 = vunpack.c.l.b16 %v677
        %v701 = vunpack.c.l.b16 %v678
        %v702 = vunpack.c.l.b16 %v679
        %v703 = vpack.c.b16 %v696, %v695
        %v704 = vpack.c.b16 %v698, %v697
        %v705 = vpack.c.b16 %v700, %v699
        %v706 = vpack.c.b16 %v702, %v701
        %vm711 = vcmask 523264
        %v713 = vsel %vm711, %v671, 0
        %715 = vmatprep.subr.bf16.mxu0 0
        %716 = vmatpush1.bf16.msra.mxu0 %v703
        %717 = vmatprep.subr.bf16.mxu0 0
        %718 = vmatpush1.bf16.msra.mxu0 %v704
        %719 = vmatprep.subr.bf16.mxu0 0
        %720 = vmatpush1.bf16.msra.mxu0 %v705
        %721 = vmatprep.subr.bf16.mxu0 0
        %722 = vmatpush1.bf16.msra.mxu0 %v706
        %723 = vmatprep.subr.bf16.mxu0 0
        %724 = vmatpush1.bf16.msra.mxu0 0
        %725 = vmatprep.subr.bf16.mxu0 0
        %726 = vmatpush1.bf16.msra.mxu0 0
        %727 = vmatprep.subr.bf16.mxu0 0
        %728 = vmatpush1.bf16.msra.mxu0 0
        %729 = vmatprep.subr.bf16.mxu0 0
        %730 = vmatpush1.bf16.msra.mxu0 0
        %731 = vmatprep.subr.bf16.mxu0 0
        %732 = vmatpush1.bf16.msra.mxu0 0
        %733 = vmatprep.subr.bf16.mxu0 0
        %734 = vmatpush1.bf16.msra.mxu0 0
        %735 = vmatprep.subr.bf16.mxu0 0
        %736 = vmatpush1.bf16.msra.mxu0 0
        %737 = vmatprep.subr.bf16.mxu0 0
        %738 = vmatpush1.bf16.msra.mxu0 0
        %739 = vmatprep.subr.bf16.mxu0 0
        %740 = vmatpush1.bf16.msra.mxu0 0
        %741 = vmatprep.subr.bf16.mxu0 0
        %742 = vmatpush1.bf16.msra.mxu0 0
        %743 = vmatprep.subr.bf16.mxu0 0
        %744 = vmatpush1.bf16.msra.mxu0 0
        %745 = vmatprep.subr.bf16.mxu0 0
        %746 = vmatpush1.bf16.msra.mxu0 0
        %747 = vmatprep.mubr.bf16.mxu0 0
        %748 = vmatmul.mubr.bf16.gmra.mrb[0].mxu0 %v713
        %v749 = vpop.f32.mrb[0].mxu0
        %v750 = vadd.f32 %v685, %v749
        %v751 = vpop.f32.mrb[0].mxu0
        %v752 = vpop.f32.mrb[0].mxu0
        %v753 = vpop.f32.mrb[0].mxu0
        %754 = vdwg.mxu0
        %v755 = vmul.f32 %v551, %v750
        %v756 = vtanh.pop %v755
        %v757 = vmul.f32 %v551, %v756
        %v758 = vadd.f32 %v757, %v552
        %760 = vrot.lane.b32.xlu0 %v557, 32
        %v761 = vpop.permute.xlu0 %760
        %v763 = vmul.f32 %v758, %v761
        %765 = vrot.lane.b32.xlu0 %v758, 64
        %v766 = vpop.permute.xlu0 %765
        %v768 = vmul.f32 %v758, %v766
        %770 = vrot.lane.b32.xlu0 %v768, 32
        %v771 = vpop.permute.xlu0 %770
        %v773 = vadd.f32 %v763, %v771
        %v774 = vtanh.pop %v773
        %776 = vrot.lane.b32.xlu0 %v774, 64
        %v777 = vpop.permute.xlu0 %776
        %v779 = vmul.f32 %v758, %v777
        %780 = vrot.lane.b32.xlu0 %v556, 96
        %v781 = vpop.permute.xlu0 %780
        %v783 = vsel %vm655, %v779, %v781
        %v784 = vsel %vm655, %v773, %v761
        %786 = vrot.lane.b32.xlu0 %v783, 32
        %v787 = vpop.permute.xlu0 %786
        %790 = vrot.lane.b32.xlu0 %v558, 32
        %v791 = vpop.permute.xlu0 %790
        %v793 = vsel %vm581, %v787, %v791
        %v794 = vpack.c.bf16 %v793, %v793
        %v795 = vld [vmem:[%s7] sm:$0xf]
        %v796 = vld [vmem:[%s7 + $0x4] sm:$0xf]
        %v797 = vld [vmem:[%s7 + $0x8] sm:$0xf]
        %v798 = vld [vmem:[%s7 + $0xc] sm:$0xf]
        %v799 = vld [vmem:[%s7 + $0x10] sm:$0xf]
        %v800 = vld [vmem:[%s7 + $0x14] sm:$0xf]
        %v801 = vld [vmem:[%s7 + $0x18] sm:$0xf]
        %v802 = vld [vmem:[%s7 + $0x1c] sm:$0xf]
        %v803 = vld [vmem:[%s8] sm:$0x1]
        %v805 = vlaneseq
        %v806 = vshrl.u32 %v805, 7
        %v807 = vsub.s32 0, %v806
        %v808 = vrot.slane %v803, %v807
        %v818 = vunpack.c.l.b16 %v795
        %v819 = vunpack.c.l.b16 %v796
        %v820 = vunpack.c.l.b16 %v797
        %v821 = vunpack.c.l.b16 %v798
        %v822 = vunpack.c.l.b16 %v799
        %v823 = vunpack.c.l.b16 %v800
        %v824 = vunpack.c.l.b16 %v801
        %v825 = vunpack.c.l.b16 %v802
        %v826 = vpack.c.b16 %v819, %v818
        %v827 = vpack.c.b16 %v821, %v820
        %v828 = vpack.c.b16 %v823, %v822
        %v829 = vpack.c.b16 %v825, %v824
        %v835 = vsel %vm711, %v794, 0
        %837 = vmatprep.subr.bf16.mxu0 0
        %838 = vmatpush1.bf16.msra.mxu0 %v826
        %839 = vmatprep.subr.bf16.mxu0 0
        %840 = vmatpush1.bf16.msra.mxu0 %v827
        %841 = vmatprep.subr.bf16.mxu0 0
        %842 = vmatpush1.bf16.msra.mxu0 %v828
        %843 = vmatprep.subr.bf16.mxu0 0
        %844 = vmatpush1.bf16.msra.mxu0 %v829
        %845 = vmatprep.subr.bf16.mxu0 0
        %846 = vmatpush1.bf16.msra.mxu0 0
        %847 = vmatprep.subr.bf16.mxu0 0
        %848 = vmatpush1.bf16.msra.mxu0 0
        %849 = vmatprep.subr.bf16.mxu0 0
        %850 = vmatpush1.bf16.msra.mxu0 0
        %851 = vmatprep.subr.bf16.mxu0 0
        %852 = vmatpush1.bf16.msra.mxu0 0
        %853 = vmatprep.subr.bf16.mxu0 0
        %854 = vmatpush1.bf16.msra.mxu0 0
        %855 = vmatprep.subr.bf16.mxu0 0
        %856 = vmatpush1.bf16.msra.mxu0 0
        %857 = vmatprep.subr.bf16.mxu0 0
        %858 = vmatpush1.bf16.msra.mxu0 0
        %859 = vmatprep.subr.bf16.mxu0 0
        %860 = vmatpush1.bf16.msra.mxu0 0
        %861 = vmatprep.subr.bf16.mxu0 0
        %862 = vmatpush1.bf16.msra.mxu0 0
        %863 = vmatprep.subr.bf16.mxu0 0
        %864 = vmatpush1.bf16.msra.mxu0 0
        %865 = vmatprep.subr.bf16.mxu0 0
        %866 = vmatpush1.bf16.msra.mxu0 0
        %867 = vmatprep.subr.bf16.mxu0 0
        %868 = vmatpush1.bf16.msra.mxu0 0
        %869 = vmatprep.mubr.bf16.mxu0 0
        %870 = vmatmul.mubr.bf16.gmra.mrb[0].mxu0 %v835
        %v871 = vpop.f32.mrb[0].mxu0
        %v872 = vadd.f32 %v808, %v871
        %v873 = vpop.f32.mrb[0].mxu0
        %v874 = vpop.f32.mrb[0].mxu0
        %v875 = vpop.f32.mrb[0].mxu0
        %876 = vdwg.mxu0
        %v877 = vmul.f32 %v551, %v872
        %v878 = vtanh.pop %v877
        %v879 = vmul.f32 %v551, %v878
        %v880 = vadd.f32 %v879, %v552
        %882 = vrot.lane.b32.xlu0 %v559, 32
        %v883 = vpop.permute.xlu0 %882
        %v885 = vmul.f32 %v880, %v883
        %887 = vrot.lane.b32.xlu0 %v880, 64
        %v888 = vpop.permute.xlu0 %887
        %v890 = vmul.f32 %v880, %v888
        %892 = vrot.lane.b32.xlu0 %v890, 32
        %v893 = vpop.permute.xlu0 %892
        %v895 = vadd.f32 %v885, %v893
        %v896 = vtanh.pop %v895
        %898 = vrot.lane.b32.xlu0 %v896, 64
        %v899 = vpop.permute.xlu0 %898
        %v901 = vmul.f32 %v880, %v899
        %902 = vrot.lane.b32.xlu0 %v558, 96
        %v903 = vpop.permute.xlu0 %902
        %v905 = vsel %vm655, %v901, %v903
        %v906 = vsel %vm655, %v895, %v883
        %s907 = sadd.s32 %s560, 1
        %v908 = vstv %s907
        %vm909 = vcmp.lt.s32.totalorder %v908, %v553
        %s910 = scalar_lea.vmem [#allocation8], 8
        %v911 = vld [vmem:[%s910] sm:$0xff]
        %v912 = vpack.c.bf16 %v660, %v660
        %914 = vrot.lane.b32.xlu0 %v912, 32
        %v915 = vpop.permute.xlu0 %914
        %v917 = vsel %vm581, %v915, 0
        %919 = vmatprep.subr.bf16.mxu0 0
        %920 = vmatpush1.bf16.msra.mxu0 %v577
        %921 = vmatprep.subr.bf16.mxu0 0
        %922 = vmatpush1.bf16.msra.mxu0 %v578
        %923 = vmatprep.subr.bf16.mxu0 0
        %924 = vmatpush1.bf16.msra.mxu0 0
        %925 = vmatprep.subr.bf16.mxu0 0
        %926 = vmatpush1.bf16.msra.mxu0 0
        %927 = vmatprep.subr.bf16.mxu0 0
        %928 = vmatpush1.bf16.msra.mxu0 0
        %929 = vmatprep.subr.bf16.mxu0 0
        %930 = vmatpush1.bf16.msra.mxu0 0
        %931 = vmatprep.subr.bf16.mxu0 0
        %932 = vmatpush1.bf16.msra.mxu0 0
        %933 = vmatprep.subr.bf16.mxu0 0
        %934 = vmatpush1.bf16.msra.mxu0 0
        %935 = vmatprep.subr.bf16.mxu0 0
        %936 = vmatpush1.bf16.msra.mxu0 0
        %937 = vmatprep.subr.bf16.mxu0 0
        %938 = vmatpush1.bf16.msra.mxu0 0
        %939 = vmatprep.subr.bf16.mxu0 0
        %940 = vmatpush1.bf16.msra.mxu0 0
        %941 = vmatprep.subr.bf16.mxu0 0
        %942 = vmatpush1.bf16.msra.mxu0 0
        %943 = vmatprep.subr.bf16.mxu0 0
        %944 = vmatpush1.bf16.msra.mxu0 0
        %945 = vmatprep.subr.bf16.mxu0 0
        %946 = vmatpush1.bf16.msra.mxu0 0
        %947 = vmatprep.subr.bf16.mxu0 0
        %948 = vmatpush1.bf16.msra.mxu0 0
        %949 = vmatprep.subr.bf16.mxu0 0
        %950 = vmatpush1.bf16.msra.mxu0 0
        %951 = vmatprep.mubr.bf16.mxu0 0
        %952 = vmatmul.mubr.bf16.gmra.mrb[0].mxu0 %v917
        %v953 = vpop.f32.mrb[0].mxu0
        %v954 = vadd.f32 0.0, %v953
        %v955 = vpop.f32.mrb[0].mxu0
        %v956 = vpop.f32.mrb[0].mxu0
        %v957 = vpop.f32.mrb[0].mxu0
        %958 = vdwg.mxu0
        %v959 = vadd.f32 %v911, %v954
        %v960 = vmul.f32 %v551, %v959
        %v961 = vtanh.pop %v960
        %v962 = vmul.f32 %v551, %v961
        %v963 = vadd.f32 %v962, %v552
        %v964 = vmul.f32 %v963, %v661
        %966 = vrot.lane.b32.xlu0 %v963, 64
        %v967 = vpop.permute.xlu0 %966
        %v969 = vmul.f32 %v963, %v967
        %971 = vrot.lane.b32.xlu0 %v969, 32
        %v972 = vpop.permute.xlu0 %971
        %v974 = vadd.f32 %v964, %v972
        %v975 = vtanh.pop %v974
        %977 = vrot.lane.b32.xlu0 %v975, 64
        %v978 = vpop.permute.xlu0 %977
        %v980 = vmul.f32 %v963, %v978
        %v981 = vsel %vm909, 1, 0
        %982 = vset.pattern.permute.xlu0 0
        %983 = vperm.xlu0 %982, %v981
        %v984 = vpop.permute.xlu0 %983
        %vm985 = vcmp.eq.s32.totalorder %v984, 1
        %v986 = vsel %vm985, %v980, %v660
        %v987 = vsel %vm985, %v974, %v661
        %989 = vrot.lane.b32.xlu0 %v986, 32
        %v990 = vpop.permute.xlu0 %989
        %992 = vrot.lane.b32.xlu0 %v783, 64
        %v993 = vpop.permute.xlu0 %992
        %v995 = vsel %vm581, %v990, %v993
        %v996 = vpack.c.bf16 %v995, %v995
        %v998 = vsel %vm711, %v996, 0
        %1000 = vmatprep.subr.bf16.mxu0 0
        %1001 = vmatpush1.bf16.msra.mxu0 %v703
        %1002 = vmatprep.subr.bf16.mxu0 0
        %1003 = vmatpush1.bf16.msra.mxu0 %v704
        %1004 = vmatprep.subr.bf16.mxu0 0
        %1005 = vmatpush1.bf16.msra.mxu0 %v705
        %1006 = vmatprep.subr.bf16.mxu0 0
        %1007 = vmatpush1.bf16.msra.mxu0 %v706
        %1008 = vmatprep.subr.bf16.mxu0 0
        %1009 = vmatpush1.bf16.msra.mxu0 0
        %1010 = vmatprep.subr.bf16.mxu0 0
        %1011 = vmatpush1.bf16.msra.mxu0 0
        %1012 = vmatprep.subr.bf16.mxu0 0
        %1013 = vmatpush1.bf16.msra.mxu0 0
        %1014 = vmatprep.subr.bf16.mxu0 0
        %1015 = vmatpush1.bf16.msra.mxu0 0
        %1016 = vmatprep.subr.bf16.mxu0 0
        %1017 = vmatpush1.bf16.msra.mxu0 0
        %1018 = vmatprep.subr.bf16.mxu0 0
        %1019 = vmatpush1.bf16.msra.mxu0 0
        %1020 = vmatprep.subr.bf16.mxu0 0
        %1021 = vmatpush1.bf16.msra.mxu0 0
        %1022 = vmatprep.subr.bf16.mxu0 0
        %1023 = vmatpush1.bf16.msra.mxu0 0
        %1024 = vmatprep.subr.bf16.mxu0 0
        %1025 = vmatpush1.bf16.msra.mxu0 0
        %1026 = vmatprep.subr.bf16.mxu0 0
        %1027 = vmatpush1.bf16.msra.mxu0 0
        %1028 = vmatprep.subr.bf16.mxu0 0
        %1029 = vmatpush1.bf16.msra.mxu0 0
        %1030 = vmatprep.subr.bf16.mxu0 0
        %1031 = vmatpush1.bf16.msra.mxu0 0
        %1032 = vmatprep.mubr.bf16.mxu0 0
        %1033 = vmatmul.mubr.bf16.gmra.mrb[0].mxu0 %v998
        %v1034 = vpop.f32.mrb[0].mxu0
        %v1035 = vadd.f32 %v685, %v1034
        %v1036 = vpop.f32.mrb[0].mxu0
        %v1037 = vpop.f32.mrb[0].mxu0
        %v1038 = vpop.f32.mrb[0].mxu0
        %1039 = vdwg.mxu0
        %v1040 = vmul.f32 %v551, %v1035
        %v1041 = vtanh.pop %v1040
        %v1042 = vmul.f32 %v551, %v1041
        %v1043 = vadd.f32 %v1042, %v552
        %v1044 = vmul.f32 %v1043, %v784
        %1046 = vrot.lane.b32.xlu0 %v1043, 64
        %v1047 = vpop.permute.xlu0 %1046
        %v1049 = vmul.f32 %v1043, %v1047
        %1051 = vrot.lane.b32.xlu0 %v1049, 32
        %v1052 = vpop.permute.xlu0 %1051
        %v1054 = vadd.f32 %v1044, %v1052
        %v1055 = vtanh.pop %v1054
        %1057 = vrot.lane.b32.xlu0 %v1055, 64
        %v1058 = vpop.permute.xlu0 %1057
        %v1060 = vmul.f32 %v1043, %v1058
        %v1061 = vsel %vm985, %v1060, %v783
        %v1062 = vsel %vm985, %v1054, %v784
        %1064 = vrot.lane.b32.xlu0 %v1061, 32
        %v1065 = vpop.permute.xlu0 %1064
        %1068 = vrot.lane.b32.xlu0 %v905, 64
        %v1069 = vpop.permute.xlu0 %1068
        %v1071 = vsel %vm581, %v1065, %v1069
        %v1072 = vpack.c.bf16 %v1071, %v1071
        %v1074 = vsel %vm711, %v1072, 0
        %1076 = vmatprep.subr.bf16.mxu0 0
        %1077 = vmatpush1.bf16.msra.mxu0 %v826
        %1078 = vmatprep.subr.bf16.mxu0 0
        %1079 = vmatpush1.bf16.msra.mxu0 %v827
        %1080 = vmatprep.subr.bf16.mxu0 0
        %1081 = vmatpush1.bf16.msra.mxu0 %v828
        %1082 = vmatprep.subr.bf16.mxu0 0
        %1083 = vmatpush1.bf16.msra.mxu0 %v829
        %1084 = vmatprep.subr.bf16.mxu0 0
        %1085 = vmatpush1.bf16.msra.mxu0 0
        %1086 = vmatprep.subr.bf16.mxu0 0
        %1087 = vmatpush1.bf16.msra.mxu0 0
        %1088 = vmatprep.subr.bf16.mxu0 0
        %1089 = vmatpush1.bf16.msra.mxu0 0
        %1090 = vmatprep.subr.bf16.mxu0 0
        %1091 = vmatpush1.bf16.msra.mxu0 0
        %1092 = vmatprep.subr.bf16.mxu0 0
        %1093 = vmatpush1.bf16.msra.mxu0 0
        %1094 = vmatprep.subr.bf16.mxu0 0
        %1095 = vmatpush1.bf16.msra.mxu0 0
        %1096 = vmatprep.subr.bf16.mxu0 0
        %1097 = vmatpush1.bf16.msra.mxu0 0
        %1098 = vmatprep.subr.bf16.mxu0 0
        %1099 = vmatpush1.bf16.msra.mxu0 0
        %1100 = vmatprep.subr.bf16.mxu0 0
        %1101 = vmatpush1.bf16.msra.mxu0 0
        %1102 = vmatprep.subr.bf16.mxu0 0
        %1103 = vmatpush1.bf16.msra.mxu0 0
        %1104 = vmatprep.subr.bf16.mxu0 0
        %1105 = vmatpush1.bf16.msra.mxu0 0
        %1106 = vmatprep.subr.bf16.mxu0 0
        %1107 = vmatpush1.bf16.msra.mxu0 0
        %1108 = vmatprep.mubr.bf16.mxu0 0
        %1109 = vmatmul.mubr.bf16.gmra.mrb[0].mxu0 %v1074
        %v1110 = vpop.f32.mrb[0].mxu0
        %v1111 = vadd.f32 %v808, %v1110
        %v1112 = vpop.f32.mrb[0].mxu0
        %v1113 = vpop.f32.mrb[0].mxu0
        %v1114 = vpop.f32.mrb[0].mxu0
        %1115 = vdwg.mxu0
        %v1116 = vmul.f32 %v551, %v1111
        %v1117 = vtanh.pop %v1116
        %v1118 = vmul.f32 %v551, %v1117
        %v1119 = vadd.f32 %v1118, %v552
        %v1120 = vmul.f32 %v1119, %v906
        %1122 = vrot.lane.b32.xlu0 %v1119, 64
        %v1123 = vpop.permute.xlu0 %1122
        %v1125 = vmul.f32 %v1119, %v1123
        %1127 = vrot.lane.b32.xlu0 %v1125, 32
        %v1128 = vpop.permute.xlu0 %1127
        %v1130 = vadd.f32 %v1120, %v1128
        %v1131 = vtanh.pop %v1130
        %1133 = vrot.lane.b32.xlu0 %v1131, 64
        %v1134 = vpop.permute.xlu0 %1133
        %v1136 = vmul.f32 %v1119, %v1134
        %v1137 = vsel %vm985, %v1136, %v905
        %v1138 = vsel %vm985, %v1130, %v906
        %s1139 = sadd.s32 %s560, 2
        %v1140 = vstv %s1139
        %vm1141 = vcmp.lt.s32.totalorder %v1140, %v553
        %s1142 = scalar_lea.vmem [#allocation8], 16
        %v1143 = vld [vmem:[%s1142] sm:$0xff]
        %v1144 = vpack.c.bf16 %v986, %v986
        %1146 = vrot.lane.b32.xlu0 %v1144, 32
        %v1147 = vpop.permute.xlu0 %1146
        %v1149 = vsel %vm581, %v1147, 0
        %1151 = vmatprep.subr.bf16.mxu0 0
        %1152 = vmatpush1.bf16.msra.mxu0 %v577
        %1153 = vmatprep.subr.bf16.mxu0 0
        %1154 = vmatpush1.bf16.msra.mxu0 %v578
        %1155 = vmatprep.subr.bf16.mxu0 0
        %1156 = vmatpush1.bf16.msra.mxu0 0
        %1157 = vmatprep.subr.bf16.mxu0 0
        %1158 = vmatpush1.bf16.msra.mxu0 0
        %1159 = vmatprep.subr.bf16.mxu0 0
        %1160 = vmatpush1.bf16.msra.mxu0 0
        %1161 = vmatprep.subr.bf16.mxu0 0
        %1162 = vmatpush1.bf16.msra.mxu0 0
        %1163 = vmatprep.subr.bf16.mxu0 0
        %1164 = vmatpush1.bf16.msra.mxu0 0
        %1165 = vmatprep.subr.bf16.mxu0 0
        %1166 = vmatpush1.bf16.msra.mxu0 0
        %1167 = vmatprep.subr.bf16.mxu0 0
        %1168 = vmatpush1.bf16.msra.mxu0 0
        %1169 = vmatprep.subr.bf16.mxu0 0
        %1170 = vmatpush1.bf16.msra.mxu0 0
        %1171 = vmatprep.subr.bf16.mxu0 0
        %1172 = vmatpush1.bf16.msra.mxu0 0
        %1173 = vmatprep.subr.bf16.mxu0 0
        %1174 = vmatpush1.bf16.msra.mxu0 0
        %1175 = vmatprep.subr.bf16.mxu0 0
        %1176 = vmatpush1.bf16.msra.mxu0 0
        %1177 = vmatprep.subr.bf16.mxu0 0
        %1178 = vmatpush1.bf16.msra.mxu0 0
        %1179 = vmatprep.subr.bf16.mxu0 0
        %1180 = vmatpush1.bf16.msra.mxu0 0
        %1181 = vmatprep.subr.bf16.mxu0 0
        %1182 = vmatpush1.bf16.msra.mxu0 0
        %1183 = vmatprep.mubr.bf16.mxu0 0
        %1184 = vmatmul.mubr.bf16.gmra.mrb[0].mxu0 %v1149
        %v1185 = vpop.f32.mrb[0].mxu0
        %v1186 = vadd.f32 0.0, %v1185
        %v1187 = vpop.f32.mrb[0].mxu0
        %v1188 = vpop.f32.mrb[0].mxu0
        %v1189 = vpop.f32.mrb[0].mxu0
        %1190 = vdwg.mxu0
        %v1191 = vadd.f32 %v1143, %v1186
        %v1192 = vmul.f32 %v551, %v1191
        %v1193 = vtanh.pop %v1192
        %v1194 = vmul.f32 %v551, %v1193
        %v1195 = vadd.f32 %v1194, %v552
        %v1196 = vmul.f32 %v1195, %v987
        %1198 = vrot.lane.b32.xlu0 %v1195, 64
        %v1199 = vpop.permute.xlu0 %1198
        %v1201 = vmul.f32 %v1195, %v1199
        %1203 = vrot.lane.b32.xlu0 %v1201, 32
        %v1204 = vpop.permute.xlu0 %1203
        %v1206 = vadd.f32 %v1196, %v1204
        %v1207 = vtanh.pop %v1206
        %1209 = vrot.lane.b32.xlu0 %v1207, 64
        %v1210 = vpop.permute.xlu0 %1209
        %v1212 = vmul.f32 %v1195, %v1210
        %v1213 = vsel %vm1141, 1, 0
        %1214 = vset.pattern.permute.xlu0 0
        %1215 = vperm.xlu0 %1214, %v1213
        %v1216 = vpop.permute.xlu0 %1215
        %vm1217 = vcmp.eq.s32.totalorder %v1216, 1
        %v1218 = vsel %vm1217, %v1212, %v986
        %v1219 = vsel %vm1217, %v1206, %v987
        %1221 = vrot.lane.b32.xlu0 %v1218, 32
        %v1222 = vpop.permute.xlu0 %1221
        %1224 = vrot.lane.b32.xlu0 %v1061, 64
        %v1225 = vpop.permute.xlu0 %1224
        %v1227 = vsel %vm581, %v1222, %v1225
        %v1228 = vpack.c.bf16 %v1227, %v1227
        %v1230 = vsel %vm711, %v1228, 0
        %1232 = vmatprep.subr.bf16.mxu0 0
        %1233 = vmatpush1.bf16.msra.mxu0 %v703
        %1234 = vmatprep.subr.bf16.mxu0 0
        %1235 = vmatpush1.bf16.msra.mxu0 %v704
        %1236 = vmatprep.subr.bf16.mxu0 0
        %1237 = vmatpush1.bf16.msra.mxu0 %v705
        %1238 = vmatprep.subr.bf16.mxu0 0
        %1239 = vmatpush1.bf16.msra.mxu0 %v706
        %1240 = vmatprep.subr.bf16.mxu0 0
        %1241 = vmatpush1.bf16.msra.mxu0 0
        %1242 = vmatprep.subr.bf16.mxu0 0
        %1243 = vmatpush1.bf16.msra.mxu0 0
        %1244 = vmatprep.subr.bf16.mxu0 0
        %1245 = vmatpush1.bf16.msra.mxu0 0
        %1246 = vmatprep.subr.bf16.mxu0 0
        %1247 = vmatpush1.bf16.msra.mxu0 0
        %1248 = vmatprep.subr.bf16.mxu0 0
        %1249 = vmatpush1.bf16.msra.mxu0 0
        %1250 = vmatprep.subr.bf16.mxu0 0
        %1251 = vmatpush1.bf16.msra.mxu0 0
        %1252 = vmatprep.subr.bf16.mxu0 0
        %1253 = vmatpush1.bf16.msra.mxu0 0
        %1254 = vmatprep.subr.bf16.mxu0 0
        %1255 = vmatpush1.bf16.msra.mxu0 0
        %1256 = vmatprep.subr.bf16.mxu0 0
        %1257 = vmatpush1.bf16.msra.mxu0 0
        %1258 = vmatprep.subr.bf16.mxu0 0
        %1259 = vmatpush1.bf16.msra.mxu0 0
        %1260 = vmatprep.subr.bf16.mxu0 0
        %1261 = vmatpush1.bf16.msra.mxu0 0
        %1262 = vmatprep.subr.bf16.mxu0 0
        %1263 = vmatpush1.bf16.msra.mxu0 0
        %1264 = vmatprep.mubr.bf16.mxu0 0
        %1265 = vmatmul.mubr.bf16.gmra.mrb[0].mxu0 %v1230
        %v1266 = vpop.f32.mrb[0].mxu0
        %v1267 = vadd.f32 %v685, %v1266
        %v1268 = vpop.f32.mrb[0].mxu0
        %v1269 = vpop.f32.mrb[0].mxu0
        %v1270 = vpop.f32.mrb[0].mxu0
        %1271 = vdwg.mxu0
        %v1272 = vmul.f32 %v551, %v1267
        %v1273 = vtanh.pop %v1272
        %v1274 = vmul.f32 %v551, %v1273
        %v1275 = vadd.f32 %v1274, %v552
        %v1276 = vmul.f32 %v1275, %v1062
        %1278 = vrot.lane.b32.xlu0 %v1275, 64
        %v1279 = vpop.permute.xlu0 %1278
        %v1281 = vmul.f32 %v1275, %v1279
        %1283 = vrot.lane.b32.xlu0 %v1281, 32
        %v1284 = vpop.permute.xlu0 %1283
        %v1286 = vadd.f32 %v1276, %v1284
        %v1287 = vtanh.pop %v1286
        %1289 = vrot.lane.b32.xlu0 %v1287, 64
        %v1290 = vpop.permute.xlu0 %1289
        %v1292 = vmul.f32 %v1275, %v1290
        %v1293 = vsel %vm1217, %v1292, %v1061
        %v1294 = vsel %vm1217, %v1286, %v1062
        %1296 = vrot.lane.b32.xlu0 %v1293, 32
        %v1297 = vpop.permute.xlu0 %1296
        %1300 = vrot.lane.b32.xlu0 %v1137, 64
        %v1301 = vpop.permute.xlu0 %1300
        %v1303 = vsel %vm581, %v1297, %v1301
        %v1304 = vpack.c.bf16 %v1303, %v1303
        %v1306 = vsel %vm711, %v1304, 0
        %1308 = vmatprep.subr.bf16.mxu0 0
        %1309 = vmatpush1.bf16.msra.mxu0 %v826
        %1310 = vmatprep.subr.bf16.mxu0 0
        %1311 = vmatpush1.bf16.msra.mxu0 %v827
        %1312 = vmatprep.subr.bf16.mxu0 0
        %1313 = vmatpush1.bf16.msra.mxu0 %v828
        %1314 = vmatprep.subr.bf16.mxu0 0
        %1315 = vmatpush1.bf16.msra.mxu0 %v829
        %1316 = vmatprep.subr.bf16.mxu0 0
        %1317 = vmatpush1.bf16.msra.mxu0 0
        %1318 = vmatprep.subr.bf16.mxu0 0
        %1319 = vmatpush1.bf16.msra.mxu0 0
        %1320 = vmatprep.subr.bf16.mxu0 0
        %1321 = vmatpush1.bf16.msra.mxu0 0
        %1322 = vmatprep.subr.bf16.mxu0 0
        %1323 = vmatpush1.bf16.msra.mxu0 0
        %1324 = vmatprep.subr.bf16.mxu0 0
        %1325 = vmatpush1.bf16.msra.mxu0 0
        %1326 = vmatprep.subr.bf16.mxu0 0
        %1327 = vmatpush1.bf16.msra.mxu0 0
        %1328 = vmatprep.subr.bf16.mxu0 0
        %1329 = vmatpush1.bf16.msra.mxu0 0
        %1330 = vmatprep.subr.bf16.mxu0 0
        %1331 = vmatpush1.bf16.msra.mxu0 0
        %1332 = vmatprep.subr.bf16.mxu0 0
        %1333 = vmatpush1.bf16.msra.mxu0 0
        %1334 = vmatprep.subr.bf16.mxu0 0
        %1335 = vmatpush1.bf16.msra.mxu0 0
        %1336 = vmatprep.subr.bf16.mxu0 0
        %1337 = vmatpush1.bf16.msra.mxu0 0
        %1338 = vmatprep.subr.bf16.mxu0 0
        %1339 = vmatpush1.bf16.msra.mxu0 0
        %1340 = vmatprep.mubr.bf16.mxu0 0
        %1341 = vmatmul.mubr.bf16.gmra.mrb[0].mxu0 %v1306
        %v1342 = vpop.f32.mrb[0].mxu0
        %v1343 = vadd.f32 %v808, %v1342
        %v1344 = vpop.f32.mrb[0].mxu0
        %v1345 = vpop.f32.mrb[0].mxu0
        %v1346 = vpop.f32.mrb[0].mxu0
        %1347 = vdwg.mxu0
        %v1348 = vmul.f32 %v551, %v1343
        %v1349 = vtanh.pop %v1348
        %v1350 = vmul.f32 %v551, %v1349
        %v1351 = vadd.f32 %v1350, %v552
        %v1352 = vmul.f32 %v1351, %v1138
        %1354 = vrot.lane.b32.xlu0 %v1351, 64
        %v1355 = vpop.permute.xlu0 %1354
        %v1357 = vmul.f32 %v1351, %v1355
        %1359 = vrot.lane.b32.xlu0 %v1357, 32
        %v1360 = vpop.permute.xlu0 %1359
        %v1362 = vadd.f32 %v1352, %v1360
        %v1363 = vtanh.pop %v1362
        %1365 = vrot.lane.b32.xlu0 %v1363, 64
        %v1366 = vpop.permute.xlu0 %1365
        %v1368 = vmul.f32 %v1351, %v1366
        %v1369 = vsel %vm1217, %v1368, %v1137
        %v1370 = vsel %vm1217, %v1362, %v1138
        %s1371 = sadd.s32 %s560, 3
        %v1372 = vstv %s1371
        %vm1373 = vcmp.lt.s32.totalorder %v1372, %v553
        %s1374 = scalar_lea.vmem [#allocation8], 24
        %v1375 = vld [vmem:[%s1374] sm:$0xff]
        %v1376 = vpack.c.bf16 %v1218, %v1218
        %1378 = vrot.lane.b32.xlu0 %v1376, 32
        %v1379 = vpop.permute.xlu0 %1378
        %v1381 = vsel %vm581, %v1379, 0
        %1383 = vmatprep.subr.bf16.mxu0 0
        %1384 = vmatpush1.bf16.msra.mxu0 %v577
        %1385 = vmatprep.subr.bf16.mxu0 0
        %1386 = vmatpush1.bf16.msra.mxu0 %v578
        %1387 = vmatprep.subr.bf16.mxu0 0
        %1388 = vmatpush1.bf16.msra.mxu0 0
        %1389 = vmatprep.subr.bf16.mxu0 0
        %1390 = vmatpush1.bf16.msra.mxu0 0
        %1391 = vmatprep.subr.bf16.mxu0 0
        %1392 = vmatpush1.bf16.msra.mxu0 0
        %1393 = vmatprep.subr.bf16.mxu0 0
        %1394 = vmatpush1.bf16.msra.mxu0 0
        %1395 = vmatprep.subr.bf16.mxu0 0
        %1396 = vmatpush1.bf16.msra.mxu0 0
        %1397 = vmatprep.subr.bf16.mxu0 0
        %1398 = vmatpush1.bf16.msra.mxu0 0
        %1399 = vmatprep.subr.bf16.mxu0 0
        %1400 = vmatpush1.bf16.msra.mxu0 0
        %1401 = vmatprep.subr.bf16.mxu0 0
        %1402 = vmatpush1.bf16.msra.mxu0 0
        %1403 = vmatprep.subr.bf16.mxu0 0
        %1404 = vmatpush1.bf16.msra.mxu0 0
        %1405 = vmatprep.subr.bf16.mxu0 0
        %1406 = vmatpush1.bf16.msra.mxu0 0
        %1407 = vmatprep.subr.bf16.mxu0 0
        %1408 = vmatpush1.bf16.msra.mxu0 0
        %1409 = vmatprep.subr.bf16.mxu0 0
        %1410 = vmatpush1.bf16.msra.mxu0 0
        %1411 = vmatprep.subr.bf16.mxu0 0
        %1412 = vmatpush1.bf16.msra.mxu0 0
        %1413 = vmatprep.subr.bf16.mxu0 0
        %1414 = vmatpush1.bf16.msra.mxu0 0
        %1415 = vmatprep.mubr.bf16.mxu0 0
        %1416 = vmatmul.mubr.bf16.gmra.mrb[0].mxu0 %v1381
        %v1417 = vpop.f32.mrb[0].mxu0
        %v1418 = vadd.f32 0.0, %v1417
        %v1419 = vpop.f32.mrb[0].mxu0
        %v1420 = vpop.f32.mrb[0].mxu0
        %v1421 = vpop.f32.mrb[0].mxu0
        %1422 = vdwg.mxu0
        %v1423 = vadd.f32 %v1375, %v1418
        %v1424 = vmul.f32 %v551, %v1423
        %v1425 = vtanh.pop %v1424
        %v1426 = vmul.f32 %v551, %v1425
        %v1427 = vadd.f32 %v1426, %v552
        %v1428 = vmul.f32 %v1427, %v1219
        %1430 = vrot.lane.b32.xlu0 %v1427, 64
        %v1431 = vpop.permute.xlu0 %1430
        %v1433 = vmul.f32 %v1427, %v1431
        %1435 = vrot.lane.b32.xlu0 %v1433, 32
        %v1436 = vpop.permute.xlu0 %1435
        %v1438 = vadd.f32 %v1428, %v1436
        %v1439 = vtanh.pop %v1438
        %1441 = vrot.lane.b32.xlu0 %v1439, 64
        %v1442 = vpop.permute.xlu0 %1441
        %v1444 = vmul.f32 %v1427, %v1442
        %v1445 = vsel %vm1373, 1, 0
        %1446 = vset.pattern.permute.xlu0 0
        %1447 = vperm.xlu0 %1446, %v1445
        %v1448 = vpop.permute.xlu0 %1447
        %vm1449 = vcmp.eq.s32.totalorder %v1448, 1
        %v1450 = vsel %vm1449, %v1444, %v1218
        %v1451 = vsel %vm1449, %v1438, %v1219
        %1453 = vrot.lane.b32.xlu0 %v1450, 32
        %v1454 = vpop.permute.xlu0 %1453
        %1456 = vrot.lane.b32.xlu0 %v1293, 64
        %v1457 = vpop.permute.xlu0 %1456
        %v1459 = vsel %vm581, %v1454, %v1457
        %v1460 = vpack.c.bf16 %v1459, %v1459
        %v1462 = vsel %vm711, %v1460, 0
        %1464 = vmatprep.subr.bf16.mxu0 0
        %1465 = vmatpush1.bf16.msra.mxu0 %v703
        %1466 = vmatprep.subr.bf16.mxu0 0
        %1467 = vmatpush1.bf16.msra.mxu0 %v704
        %1468 = vmatprep.subr.bf16.mxu0 0
        %1469 = vmatpush1.bf16.msra.mxu0 %v705
        %1470 = vmatprep.subr.bf16.mxu0 0
        %1471 = vmatpush1.bf16.msra.mxu0 %v706
        %1472 = vmatprep.subr.bf16.mxu0 0
        %1473 = vmatpush1.bf16.msra.mxu0 0
        %1474 = vmatprep.subr.bf16.mxu0 0
        %1475 = vmatpush1.bf16.msra.mxu0 0
        %1476 = vmatprep.subr.bf16.mxu0 0
        %1477 = vmatpush1.bf16.msra.mxu0 0
        %1478 = vmatprep.subr.bf16.mxu0 0
        %1479 = vmatpush1.bf16.msra.mxu0 0
        %1480 = vmatprep.subr.bf16.mxu0 0
        %1481 = vmatpush1.bf16.msra.mxu0 0
        %1482 = vmatprep.subr.bf16.mxu0 0
        %1483 = vmatpush1.bf16.msra.mxu0 0
        %1484 = vmatprep.subr.bf16.mxu0 0
        %1485 = vmatpush1.bf16.msra.mxu0 0
        %1486 = vmatprep.subr.bf16.mxu0 0
        %1487 = vmatpush1.bf16.msra.mxu0 0
        %1488 = vmatprep.subr.bf16.mxu0 0
        %1489 = vmatpush1.bf16.msra.mxu0 0
        %1490 = vmatprep.subr.bf16.mxu0 0
        %1491 = vmatpush1.bf16.msra.mxu0 0
        %1492 = vmatprep.subr.bf16.mxu0 0
        %1493 = vmatpush1.bf16.msra.mxu0 0
        %1494 = vmatprep.subr.bf16.mxu0 0
        %1495 = vmatpush1.bf16.msra.mxu0 0
        %1496 = vmatprep.mubr.bf16.mxu0 0
        %1497 = vmatmul.mubr.bf16.gmra.mrb[0].mxu0 %v1462
        %v1498 = vpop.f32.mrb[0].mxu0
        %v1499 = vadd.f32 %v685, %v1498
        %v1500 = vpop.f32.mrb[0].mxu0
        %v1501 = vpop.f32.mrb[0].mxu0
        %v1502 = vpop.f32.mrb[0].mxu0
        %1503 = vdwg.mxu0
        %v1504 = vmul.f32 %v551, %v1499
        %v1505 = vtanh.pop %v1504
        %v1506 = vmul.f32 %v551, %v1505
        %v1507 = vadd.f32 %v1506, %v552
        %v1508 = vmul.f32 %v1507, %v1294
        %1510 = vrot.lane.b32.xlu0 %v1507, 64
        %v1511 = vpop.permute.xlu0 %1510
        %v1513 = vmul.f32 %v1507, %v1511
        %1515 = vrot.lane.b32.xlu0 %v1513, 32
        %v1516 = vpop.permute.xlu0 %1515
        %v1518 = vadd.f32 %v1508, %v1516
        %v1519 = vtanh.pop %v1518
        %1521 = vrot.lane.b32.xlu0 %v1519, 64
        %v1522 = vpop.permute.xlu0 %1521
        %v1524 = vmul.f32 %v1507, %v1522
        %v1525 = vsel %vm1449, %v1524, %v1293
        %v1526 = vsel %vm1449, %v1518, %v1294
        %1528 = vrot.lane.b32.xlu0 %v1525, 32
        %v1529 = vpop.permute.xlu0 %1528
        %1532 = vrot.lane.b32.xlu0 %v1369, 64
        %v1533 = vpop.permute.xlu0 %1532
        %v1535 = vsel %vm581, %v1529, %v1533
        %v1536 = vpack.c.bf16 %v1535, %v1535
        %v1538 = vsel %vm711, %v1536, 0
        %1540 = vmatprep.subr.bf16.mxu0 0
        %1541 = vmatpush1.bf16.msra.mxu0 %v826
        %1542 = vmatprep.subr.bf16.mxu0 0
        %1543 = vmatpush1.bf16.msra.mxu0 %v827
        %1544 = vmatprep.subr.bf16.mxu0 0
        %1545 = vmatpush1.bf16.msra.mxu0 %v828
        %1546 = vmatprep.subr.bf16.mxu0 0
        %1547 = vmatpush1.bf16.msra.mxu0 %v829
        %1548 = vmatprep.subr.bf16.mxu0 0
        %1549 = vmatpush1.bf16.msra.mxu0 0
        %1550 = vmatprep.subr.bf16.mxu0 0
        %1551 = vmatpush1.bf16.msra.mxu0 0
        %1552 = vmatprep.subr.bf16.mxu0 0
        %1553 = vmatpush1.bf16.msra.mxu0 0
        %1554 = vmatprep.subr.bf16.mxu0 0
        %1555 = vmatpush1.bf16.msra.mxu0 0
        %1556 = vmatprep.subr.bf16.mxu0 0
        %1557 = vmatpush1.bf16.msra.mxu0 0
        %1558 = vmatprep.subr.bf16.mxu0 0
        %1559 = vmatpush1.bf16.msra.mxu0 0
        %1560 = vmatprep.subr.bf16.mxu0 0
        %1561 = vmatpush1.bf16.msra.mxu0 0
        %1562 = vmatprep.subr.bf16.mxu0 0
        %1563 = vmatpush1.bf16.msra.mxu0 0
        %1564 = vmatprep.subr.bf16.mxu0 0
        %1565 = vmatpush1.bf16.msra.mxu0 0
        %1566 = vmatprep.subr.bf16.mxu0 0
        %1567 = vmatpush1.bf16.msra.mxu0 0
        %1568 = vmatprep.subr.bf16.mxu0 0
        %1569 = vmatpush1.bf16.msra.mxu0 0
        %1570 = vmatprep.subr.bf16.mxu0 0
        %1571 = vmatpush1.bf16.msra.mxu0 0
        %1572 = vmatprep.mubr.bf16.mxu0 0
        %1573 = vmatmul.mubr.bf16.gmra.mrb[0].mxu0 %v1538
        %v1574 = vpop.f32.mrb[0].mxu0
        %v1575 = vadd.f32 %v808, %v1574
        %v1576 = vpop.f32.mrb[0].mxu0
        %v1577 = vpop.f32.mrb[0].mxu0
        %v1578 = vpop.f32.mrb[0].mxu0
        %1579 = vdwg.mxu0
        %v1580 = vmul.f32 %v551, %v1575
        %v1581 = vtanh.pop %v1580
        %v1582 = vmul.f32 %v551, %v1581
        %v1583 = vadd.f32 %v1582, %v552
        %v1584 = vmul.f32 %v1583, %v1370
        %1586 = vrot.lane.b32.xlu0 %v1583, 64
        %v1587 = vpop.permute.xlu0 %1586
        %v1589 = vmul.f32 %v1583, %v1587
        %1591 = vrot.lane.b32.xlu0 %v1589, 32
        %v1592 = vpop.permute.xlu0 %1591
        %v1594 = vadd.f32 %v1584, %v1592
        %v1595 = vtanh.pop %v1594
        %1597 = vrot.lane.b32.xlu0 %v1595, 64
        %v1598 = vpop.permute.xlu0 %1597
        %v1600 = vmul.f32 %v1583, %v1598
        %v1601 = vsel %vm1449, %v1600, %v1369
        %v1602 = vsel %vm1449, %v1594, %v1370
        %1603 = vst.msk [vmem:[#allocation2] sm:$0xff] %vm581, %v1454
        %1605 = vrot.lane.b32.xlu0 %v1451, 96
        %v1606 = vpop.permute.xlu0 %1605
        %1608 = vst.msk [vmem:[#allocation3] sm:$0xff] %vm581, %v1606
        %1609 = vst.msk [vmem:[#allocation4] sm:$0xff] %vm581, %v1529
        %1611 = vrot.lane.b32.xlu0 %v1526, 96
        %v1612 = vpop.permute.xlu0 %1611
        %1614 = vst.msk [vmem:[#allocation5] sm:$0xff] %vm581, %v1612
        %1616 = vrot.lane.b32.xlu0 %v1601, 32
        %v1617 = vpop.permute.xlu0 %1616
        %1619 = vst.msk [vmem:[#allocation6] sm:$0xff] %vm581, %v1617
        %1621 = vrot.lane.b32.xlu0 %v1602, 96
        %v1622 = vpop.permute.xlu0 %1621
        %1624 = vst.msk [vmem:[#allocation7] sm:$0xff] %vm581, %v1622
        %p1625 = scmp.eq.s32.totalorder %s28, 1
        // Predicated region
        $region73: #{tpu_custom_call.1} parent=63 // pred_check
          %p1626 = pneg %p1625
        $region74: #{tpu_custom_call.1} parent=63 // pred_check_branch
          %1628 = sbr.rel (%p1626) target = $region76
        $region75: #{tpu_custom_call.1} parent=63 // pred_region
          %v1629 = vpack.c.bf16 %v1601, %v1601
          %v1630 = vld [vmem:[%s9] sm:$0xf]
          %v1631 = vld [vmem:[%s9 + $0x4] sm:$0xf]
          %v1632 = vld [vmem:[%s9 + $0x8] sm:$0xf]
          %v1633 = vld [vmem:[%s9 + $0xc] sm:$0xf]
          %v1634 = vld [vmem:[%s10] sm:$0x1]
          %v1636 = vlaneseq
          %v1637 = vshrl.u32 %v1636, 7
          %v1638 = vsub.s32 0, %v1637
          %v1639 = vrot.slane %v1634, %v1638
          %1642 = vrot.lane.b32.xlu0 %v1629, 32
          %v1643 = vpop.permute.xlu0 %1642
          %v1648 = vunpack.c.l.b16 %v1630
          %v1649 = vunpack.c.l.b16 %v1631
          %v1650 = vunpack.c.l.b16 %v1632
          %v1651 = vunpack.c.l.b16 %v1633
          %v1652 = vpack.c.b16 %v1649, %v1648
          %v1653 = vpack.c.b16 %v1651, %v1650
          %v1657 = vsel %vm581, %v1643, 0
          %1659 = vmatprep.subr.bf16.mxu0 0
          %1660 = vmatpush1.bf16.msra.mxu0 %v1652
          %1661 = vmatprep.subr.bf16.mxu0 0
          %1662 = vmatpush1.bf16.msra.mxu0 %v1653
          %1663 = vmatprep.subr.bf16.mxu0 0
          %1664 = vmatpush1.bf16.msra.mxu0 0
          %1665 = vmatprep.subr.bf16.mxu0 0
          %1666 = vmatpush1.bf16.msra.mxu0 0
          %1667 = vmatprep.subr.bf16.mxu0 0
          %1668 = vmatpush1.bf16.msra.mxu0 0
          %1669 = vmatprep.subr.bf16.mxu0 0
          %1670 = vmatpush1.bf16.msra.mxu0 0
          %1671 = vmatprep.subr.bf16.mxu0 0
          %1672 = vmatpush1.bf16.msra.mxu0 0
          %1673 = vmatprep.subr.bf16.mxu0 0
          %1674 = vmatpush1.bf16.msra.mxu0 0
          %1675 = vmatprep.subr.bf16.mxu0 0
          %1676 = vmatpush1.bf16.msra.mxu0 0
          %1677 = vmatprep.subr.bf16.mxu0 0
          %1678 = vmatpush1.bf16.msra.mxu0 0
          %1679 = vmatprep.subr.bf16.mxu0 0
          %1680 = vmatpush1.bf16.msra.mxu0 0
          %1681 = vmatprep.subr.bf16.mxu0 0
          %1682 = vmatpush1.bf16.msra.mxu0 0
          %1683 = vmatprep.subr.bf16.mxu0 0
          %1684 = vmatpush1.bf16.msra.mxu0 0
          %1685 = vmatprep.subr.bf16.mxu0 0
          %1686 = vmatpush1.bf16.msra.mxu0 0
          %1687 = vmatprep.subr.bf16.mxu0 0
          %1688 = vmatpush1.bf16.msra.mxu0 0
          %1689 = vmatprep.subr.bf16.mxu0 0
          %1690 = vmatpush1.bf16.msra.mxu0 0
          %1691 = vmatprep.mubr.bf16.mxu0 0
          %1692 = vmatmul.mubr.bf16.gmra.mrb[0].mxu0 %v1657
          %v1693 = vpop.f32.mrb[0].mxu0
          %v1694 = vadd.f32 %v1639, %v1693
          %v1695 = vpop.f32.mrb[0].mxu0
          %v1696 = vpop.f32.mrb[0].mxu0
          %v1697 = vpop.f32.mrb[0].mxu0
          %1698 = vdwg.mxu0
          %vm1699 = vcmp.ge.f32.partialorder %v1694, 0.0
          %v1700 = vmul.f32 %v1694, 0.01
          %v1701 = vsel %vm1699, %v1694, %v1700
          %vm1702 = vcmask 15360
          %1703 = vst.msk [vmem:[%s444] sm:$0xff] %vm1702, %v1701
        $region76: #{tpu_custom_call.1} parent=63 // pred_fallthru
          _
        %p1704 = scmp.lt.s32.totalorder %s27, 0
        %s1705 = scalar_select %p1704, %s27, 0
        %s1706 = smul.addr %s1705, 8
        %s1707 = scalar_lea.vmem %s11, %s1706
        // Predicated region
        $region77: #{tpu_custom_call.1} parent=63 // pred_check
          %p1708 = pneg %p296
        $region78: #{tpu_custom_call.1} parent=63 // pred_check_branch
          %1710 = sbr.rel (%p1708) target = $region80
        $region79: #{tpu_custom_call.1} parent=63 // pred_region
          _
        $region80: #{tpu_custom_call.1} parent=63 // pred_fallthru
          _
        // Predicated region
        $region81: #{tpu_custom_call.1} parent=63 // pred_check
          %p1711 = pneg %p296
        $region82: #{tpu_custom_call.1} parent=63 // pred_check_branch
          %1713 = sbr.rel (%p1711) target = $region84
        $region83: #{tpu_custom_call.1} parent=63 // pred_region
          %p1714 = scmp.lt.s32.totalorder %s27, 0
          %s1715 = scalar_select %p1714, %s27, 0
          %s1716 = smul.addr %s1715, 8
          %s1717 = scalar_lea.vmem %s11, %s1716
        $region84: #{tpu_custom_call.1} parent=63 // pred_fallthru
          _
      $region64: #{tpu_custom_call.1} parent=5 // pred_fallthru
        _
      %p1718 = scmp.le.s32.totalorder 2, %s18
      // Predicated region
      $region85: #{tpu_custom_call.1} parent=5 // pred_check
        %p1719 = pneg %p1718
      $region86: #{tpu_custom_call.1} parent=5 // pred_check_branch
        %1721 = sbr.rel (%p1719) target = $region88
      $region87: #{tpu_custom_call.1} parent=5 // pred_region
        %s1722 = ssub.s32 %s18, 2
      $region88: #{tpu_custom_call.1} parent=5 // pred_fallthru
        _
    $region6: #{tpu_custom_call.1} parent=1 // loop_footer
      %s22 = sadd.s32 1, %s18
    $region7: #{tpu_custom_call.1} parent=1 // loop_footer_branch
      %17 = sbr.rel target = $region3
    $region8: #{tpu_custom_call.1} parent=1 // loop_exit
      _
    %1723 = vsyncpa [#allocation10], 1
    %s1724 = scalar_lea.sflag [#allocation10], 1
    %1725 = vsyncpa %s1724, 1

// kernel: tpu_custom_call.1
$region0: #{tpu_custom_call.1}
  #allocation0 [shape = 'u32[]', space=smem, size = 0x4, offset = 0x4, fixed_abs, tag = 'smem constant byte address 0x4 - core index']
  #allocation1 [shape = 'u32[144,128]{1,0:T(1,128)}', space=vmem, size = 0x12000, scoped, tag = 'internal scratch']
  #allocation2 [shape = 'f32[8,32]{1,0:T(8,128)}', space=vmem, size = 0x1000, scoped, tag = 'scratch operand']
  #allocation3 [shape = 'f32[8,32]{1,0:T(8,128)}', space=vmem, size = 0x1000, scoped, tag = 'scratch operand']
  #allocation4 [shape = 'f32[8,32]{1,0:T(8,128)}', space=vmem, size = 0x1000, scoped, tag = 'scratch operand']
  #allocation5 [shape = 'f32[8,32]{1,0:T(8,128)}', space=vmem, size = 0x1000, scoped, tag = 'scratch operand']
  #allocation6 [shape = 'f32[8,32]{1,0:T(8,128)}', space=vmem, size = 0x1000, scoped, tag = 'scratch operand']
  #allocation7 [shape = 'f32[8,32]{1,0:T(8,128)}', space=vmem, size = 0x1000, scoped, tag = 'scratch operand']
  #allocation8 [shape = 'f32[32,128]{1,0:T(8,128)}', space=vmem, size = 0x4000, scoped, tag = 'scratch operand']
  %s0 = inlined_call_operand.vmem [shape: s32[8,1], index: 0, kind: input, shape index: {}]
  %s1 = inlined_call_operand.vmem [shape: bf16[1,64,16], index: 1, kind: input, shape index: {}]
  %s2 = inlined_call_operand.vmem [shape: bf16[16,128], index: 2, kind: input, shape index: {}]
  %s3 = inlined_call_operand.hbm [shape: bf16[32,128], index: 3, kind: input, shape index: {}]
  %s4 = inlined_call_operand.vmem [shape: f32[1,128], index: 4, kind: input, shape index: {}]
  %s5 = inlined_call_operand.vmem [shape: bf16[64,128], index: 5, kind: input, shape index: {}]
  %s6 = inlined_call_operand.vmem [shape: f32[1,128], index: 6, kind: input, shape index: {}]
  %s7 = inlined_call_operand.vmem [shape: bf16[64,128], index: 7, kind: input, shape index: {}]
  %s8 = inlined_call_operand.vmem [shape: f32[1,128], index: 8, kind: input, shape index: {}]
  %s9 = inlined_call_operand.vmem [shape: bf16[32,2], index: 9, kind: input, shape index: {}]
  %s10 = inlined_call_operand.vmem [shape: f32[1,2], index: 10, kind: input, shape index: {}]
  %s11 = inlined_call_operand.vmem [shape: f32[8,2], index: 11, kind: output, shape index: {}]
  %s12 = sld [smem:[#allocation0]]
  $region89: #{tpu_custom_call.1} parent=0
    _
  %s14 = ssub.s32 1, %s12
  %s15 = scalar_select 0, %s14, %s12
  $region1: #{tpu_custom_call.1} parent=0
    #allocation9 [shape = 'u8[8192]{0}', space=vmem, size = 0x2000, scoped, tag = 'input window, operand 3, single buffered']
    #allocation10 [shape = 's32[2]{0}', space=sflag, size = 0x8, scoped, tag = 'scoped memory for tpu_custom_call.1']
    %16 = vsyncpa [#allocation10], 0
    loop: start=0, step=1, limit=4
    $region2: #{tpu_custom_call.1} parent=1 // loop_pre_header
      _
    $region3: #{tpu_custom_call.1} parent=1 // loop_header
      %s18 = sphi 0, %s22
      %p19 = scmp.ge.s32.totalorder %s18, 4
      %s25 = sphi 0, %s37
      %s26 = sphi 0, %s33
      %s27 = sphi 0, %s25
      %s28 = sphi 0, %s26
      %s29 = sphi 0, %s27
      %s30 = sphi 0, %s28
      %s40 = sphi 0, %s42
      %s43 = sphi 0, %s40
      %s44 = sphi 0, %s43
      %s60 = sphi 0, %s44
      %s68 = sphi 0, %s70
      %s71 = sphi 0, %s68
      %s72 = sphi 0, %s71
      %s88 = sphi 0, %s72
      %s92 = sphi 0, %s92
      %s94 = sphi 0, %s92
      %s95 = sphi 0, %s94
      %s109 = sphi 0, %s95
      %s113 = sphi 0, %s113
      %s115 = sphi 0, %s113
      %s116 = sphi 0, %s115
      %s130 = sphi 0, %s116
      %s134 = sphi 0, %s134
      %s136 = sphi 0, %s134
      %s137 = sphi 0, %s136
      %s151 = sphi 0, %s137
      %s155 = sphi 0, %s155
      %s157 = sphi 0, %s155
      %s158 = sphi 0, %s157
      %s172 = sphi 0, %s158
      %s176 = sphi 0, %s176
      %s178 = sphi 0, %s176
      %s179 = sphi 0, %s178
      %s193 = sphi 0, %s179
      %s197 = sphi 0, %s197
      %s199 = sphi 0, %s197
      %s200 = sphi 0, %s199
      %s214 = sphi 0, %s200
      %s218 = sphi 0, %s218
      %s220 = sphi 0, %s218
      %s221 = sphi 0, %s220
      %s235 = sphi 0, %s221
      %s239 = sphi 0, %s239
      %s241 = sphi 0, %s239
      %s242 = sphi 0, %s241
      %s256 = sphi 0, %s242
      %s260 = sphi 0, %s260
      %s262 = sphi 0, %s260
      %s263 = sphi 0, %s262
      %s277 = sphi 0, %s263
      %s283 = sphi 0, %s285
      %s286 = sphi 0, %s283
      %s287 = sphi 0, %s286
      %s303 = sphi 0, %s287
    $region4: #{tpu_custom_call.1} parent=1 // loop_header_branch
      %21 = sbr.rel (%p19) target = $region8
    $region5: #{tpu_custom_call.1} parent=1 // loop_body
      %s23 = ssub.s32 %s18, 1
      %s24 = ssub.s32 %s18, 2
      %s31 = sadd.s32 1, %s26
      %p32 = scmp.ge.s32.totalorder %s31, 2
      %s33 = scalar_select %p32, 0, %s31
      %s34 = sadd.s32 1, %s25
      %s35 = scalar_select %p32, %s34, %s25
      %p36 = scmp.ge.s32.totalorder %s35, 1
      %s37 = scalar_select %p36, 0, %s35
      %s38 = ssub.s32 %s25, %s37
      %p39 = scmp.eq.s32.totalorder %s38, 0
      %s41 = sadd.s32 %s40, 1
      %s42 = scalar_select %p39, %s40, %s41
      %p45 = pneg %p39
      %p46 = scmp.eq.s32.totalorder %s18, 1
      %p47 = por %p45, %p46
      %p48 = scmp.ne.s32.totalorder %s40, %s43
      %p49 = scmp.eq.s32.totalorder %s18, 0
      %p50 = por %p48, %p49
      %p51 = scmp.ne.s32.totalorder %s40, %s43
      %p52 = scmp.eq.s32.totalorder %s23, 1
      %p53 = por %p51, %p52
      %p54 = scmp.ne.s32.totalorder %s43, %s44
      %p55 = scmp.eq.s32.totalorder %s23, 0
      %p56 = por %p54, %p55
      %p57 = scmp.ne.s32.totalorder %s43, %s44
      %p58 = scmp.eq.s32.totalorder %s24, 1
      %p59 = por %p57, %p58
      %p61 = scmp.ne.s32.totalorder %s44, %s60
      %p62 = scmp.eq.s32.totalorder %s24, 0
      %p63 = por %p61, %p62
      %s64 = ssub.s32 %s25, %s37
      %s65 = ssub.s32 %s26, %s33
      %s66 = sor.u32 %s64, %s65
      %p67 = scmp.eq.s32.totalorder %s66, 0
      %s69 = sadd.s32 %s68, 1
      %s70 = scalar_select %p67, %s68, %s69
      %p73 = pneg %p67
      %p74 = scmp.eq.s32.totalorder %s18, 1
      %p75 = por %p73, %p74
      %p76 = scmp.ne.s32.totalorder %s68, %s71
      %p77 = scmp.eq.s32.totalorder %s18, 0
      %p78 = por %p76, %p77
      %p79 = scmp.ne.s32.totalorder %s68, %s71
      %p80 = scmp.eq.s32.totalorder %s23, 1
      %p81 = por %p79, %p80
      %p82 = scmp.ne.s32.totalorder %s71, %s72
      %p83 = scmp.eq.s32.totalorder %s23, 0
      %p84 = por %p82, %p83
      %p85 = scmp.ne.s32.totalorder %s71, %s72
      %p86 = scmp.eq.s32.totalorder %s24, 1
      %p87 = por %p85, %p86
      %p89 = scmp.ne.s32.totalorder %s72, %s88
      %p90 = scmp.eq.s32.totalorder %s24, 0
      %p91 = por %p89, %p90
      %s93 = sadd.s32 %s92, 1
      %p96 = scmp.eq.s32.totalorder %s18, 1
      %p97 = scmp.ne.s32.totalorder %s92, %s94
      %p98 = scmp.eq.s32.totalorder %s18, 0
      %p99 = por %p97, %p98
      %p100 = scmp.ne.s32.totalorder %s92, %s94
      %p101 = scmp.eq.s32.totalorder %s23, 1
      %p102 = por %p100, %p101
      %p103 = scmp.ne.s32.totalorder %s94, %s95
      %p104 = scmp.eq.s32.totalorder %s23, 0
      %p105 = por %p103, %p104
      %p106 = scmp.ne.s32.totalorder %s94, %s95
      %p107 = scmp.eq.s32.totalorder %s24, 1
      %p108 = por %p106, %p107
      %p110 = scmp.ne.s32.totalorder %s95, %s109
      %p111 = scmp.eq.s32.totalorder %s24, 0
      %p112 = por %p110, %p111
      %s114 = sadd.s32 %s113, 1
      %p117 = scmp.eq.s32.totalorder %s18, 1
      %p118 = scmp.ne.s32.totalorder %s113, %s115
      %p119 = scmp.eq.s32.totalorder %s18, 0
      %p120 = por %p118, %p119
      %p121 = scmp.ne.s32.totalorder %s113, %s115
      %p122 = scmp.eq.s32.totalorder %s23, 1
      %p123 = por %p121, %p122
      %p124 = scmp.ne.s32.totalorder %s115, %s116
      %p125 = scmp.eq.s32.totalorder %s23, 0
      %p126 = por %p124, %p125
      %p127 = scmp.ne.s32.totalorder %s115, %s116
      %p128 = scmp.eq.s32.totalorder %s24, 1
      %p129 = por %p127, %p128
      %p131 = scmp.ne.s32.totalorder %s116, %s130
      %p132 = scmp.eq.s32.totalorder %s24, 0
      %p133 = por %p131, %p132
      %s135 = sadd.s32 %s134, 1
      %p138 = scmp.eq.s32.totalorder %s18, 1
      %p139 = scmp.ne.s32.totalorder %s134, %s136
      %p140 = scmp.eq.s32.totalorder %s18, 0
      %p141 = por %p139, %p140
      %p142 = scmp.ne.s32.totalorder %s134, %s136
      %p143 = scmp.eq.s32.totalorder %s23, 1
      %p144 = por %p142, %p143
      %p145 = scmp.ne.s32.totalorder %s136, %s137
      %p146 = scmp.eq.s32.totalorder %s23, 0
      %p147 = por %p145, %p146
      %p148 = scmp.ne.s32.totalorder %s136, %s137
      %p149 = scmp.eq.s32.totalorder %s24, 1
      %p150 = por %p148, %p149
      %p152 = scmp.ne.s32.totalorder %s137, %s151
      %p153 = scmp.eq.s32.totalorder %s24, 0
      %p154 = por %p152, %p153
      %s156 = sadd.s32 %s155, 1
      %p159 = scmp.eq.s32.totalorder %s18, 1
      %p160 = scmp.ne.s32.totalorder %s155, %s157
      %p161 = scmp.eq.s32.totalorder %s18, 0
      %p162 = por %p160, %p161
      %p163 = scmp.ne.s32.totalorder %s155, %s157
      %p164 = scmp.eq.s32.totalorder %s23, 1
      %p165 = por %p163, %p164
      %p166 = scmp.ne.s32.totalorder %s157, %s158
      %p167 = scmp.eq.s32.totalorder %s23, 0
      %p168 = por %p166, %p167
      %p169 = scmp.ne.s32.totalorder %s157, %s158
      %p170 = scmp.eq.s32.totalorder %s24, 1
      %p171 = por %p169, %p170
      %p173 = scmp.ne.s32.totalorder %s158, %s172
      %p174 = scmp.eq.s32.totalorder %s24, 0
      %p175 = por %p173, %p174
      %s177 = sadd.s32 %s176, 1
      %p180 = scmp.eq.s32.totalorder %s18, 1
      %p181 = scmp.ne.s32.totalorder %s176, %s178
      %p182 = scmp.eq.s32.totalorder %s18, 0
      %p183 = por %p181, %p182
      %p184 = scmp.ne.s32.totalorder %s176, %s178
      %p185 = scmp.eq.s32.totalorder %s23, 1
      %p186 = por %p184, %p185
      %p187 = scmp.ne.s32.totalorder %s178, %s179
      %p188 = scmp.eq.s32.totalorder %s23, 0
      %p189 = por %p187, %p188
      %p190 = scmp.ne.s32.totalorder %s178, %s179
      %p191 = scmp.eq.s32.totalorder %s24, 1
      %p192 = por %p190, %p191
      %p194 = scmp.ne.s32.totalorder %s179, %s193
      %p195 = scmp.eq.s32.totalorder %s24, 0
      %p196 = por %p194, %p195
      %s198 = sadd.s32 %s197, 1
      %p201 = scmp.eq.s32.totalorder %s18, 1
      %p202 = scmp.ne.s32.totalorder %s197, %s199
      %p203 = scmp.eq.s32.totalorder %s18, 0
      %p204 = por %p202, %p203
      %p205 = scmp.ne.s32.totalorder %s197, %s199
      %p206 = scmp.eq.s32.totalorder %s23, 1
      %p207 = por %p205, %p206
      %p208 = scmp.ne.s32.totalorder %s199, %s200
      %p209 = scmp.eq.s32.totalorder %s23, 0
      %p210 = por %p208, %p209
      %p211 = scmp.ne.s32.totalorder %s199, %s200
      %p212 = scmp.eq.s32.totalorder %s24, 1
      %p213 = por %p211, %p212
      %p215 = scmp.ne.s32.totalorder %s200, %s214
      %p216 = scmp.eq.s32.totalorder %s24, 0
      %p217 = por %p215, %p216
      %s219 = sadd.s32 %s218, 1
      %p222 = scmp.eq.s32.totalorder %s18, 1
      %p223 = scmp.ne.s32.totalorder %s218, %s220
      %p224 = scmp.eq.s32.totalorder %s18, 0
      %p225 = por %p223, %p224
      %p226 = scmp.ne.s32.totalorder %s218, %s220
      %p227 = scmp.eq.s32.totalorder %s23, 1
      %p228 = por %p226, %p227
      %p229 = scmp.ne.s32.totalorder %s220, %s221
      %p230 = scmp.eq.s32.totalorder %s23, 0
      %p231 = por %p229, %p230
      %p232 = scmp.ne.s32.totalorder %s220, %s221
      %p233 = scmp.eq.s32.totalorder %s24, 1
      %p234 = por %p232, %p233
      %p236 = scmp.ne.s32.totalorder %s221, %s235
      %p237 = scmp.eq.s32.totalorder %s24, 0
      %p238 = por %p236, %p237
      %s240 = sadd.s32 %s239, 1
      %p243 = scmp.eq.s32.totalorder %s18, 1
      %p244 = scmp.ne.s32.totalorder %s239, %s241
      %p245 = scmp.eq.s32.totalorder %s18, 0
      %p246 = por %p244, %p245
      %p247 = scmp.ne.s32.totalorder %s239, %s241
      %p248 = scmp.eq.s32.totalorder %s23, 1
      %p249 = por %p247, %p248
      %p250 = scmp.ne.s32.totalorder %s241, %s242
      %p251 = scmp.eq.s32.totalorder %s23, 0
      %p252 = por %p250, %p251
      %p253 = scmp.ne.s32.totalorder %s241, %s242
      %p254 = scmp.eq.s32.totalorder %s24, 1
      %p255 = por %p253, %p254
      %p257 = scmp.ne.s32.totalorder %s242, %s256
      %p258 = scmp.eq.s32.totalorder %s24, 0
      %p259 = por %p257, %p258
      %s261 = sadd.s32 %s260, 1
      %p264 = scmp.eq.s32.totalorder %s18, 1
      %p265 = scmp.ne.s32.totalorder %s260, %s262
      %p266 = scmp.eq.s32.totalorder %s18, 0
      %p267 = por %p265, %p266
      %p268 = scmp.ne.s32.totalorder %s260, %s262
      %p269 = scmp.eq.s32.totalorder %s23, 1
      %p270 = por %p268, %p269
      %p271 = scmp.ne.s32.totalorder %s262, %s263
      %p272 = scmp.eq.s32.totalorder %s23, 0
      %p273 = por %p271, %p272
      %p274 = scmp.ne.s32.totalorder %s262, %s263
      %p275 = scmp.eq.s32.totalorder %s24, 1
      %p276 = por %p274, %p275
      %p278 = scmp.ne.s32.totalorder %s263, %s277
      %p279 = scmp.eq.s32.totalorder %s24, 0
      %p280 = por %p278, %p279
      %s281 = ssub.s32 %s25, %s37
      %p282 = scmp.eq.s32.totalorder %s281, 0
      %s284 = sadd.s32 %s283, 1
      %s285 = scalar_select %p282, %s283, %s284
      %p288 = pneg %p282
      %p289 = scmp.eq.s32.totalorder %s18, 1
      %p290 = por %p288, %p289
      %p291 = scmp.ne.s32.totalorder %s283, %s286
      %p292 = scmp.eq.s32.totalorder %s18, 0
      %p293 = por %p291, %p292
      %p294 = scmp.ne.s32.totalorder %s283, %s286
      %p295 = scmp.eq.s32.totalorder %s23, 1
      %p296 = por %p294, %p295
      %p297 = scmp.ne.s32.totalorder %s286, %s287
      %p298 = scmp.eq.s32.totalorder %s23, 0
      %p299 = por %p297, %p298
      %p300 = scmp.ne.s32.totalorder %s286, %s287
      %p301 = scmp.eq.s32.totalorder %s24, 1
      %p302 = por %p300, %p301
      %p304 = scmp.ne.s32.totalorder %s287, %s303
      %p305 = scmp.eq.s32.totalorder %s24, 0
      %p306 = por %p304, %p305
      %p307 = scmp.le.s32.totalorder 1, %s18
      %p308 = scmp.lt.s32.totalorder %s18, 3
      %p309 = pnand %p307, %p308
      %p310 = pneg %p309
      // Predicated region
      $region9: #{tpu_custom_call.1} parent=5 // pred_check
        _
      $region10: #{tpu_custom_call.1} parent=5 // pred_check_branch
        %312 = sbr.rel (%p309) target = $region12
      $region11: #{tpu_custom_call.1} parent=5 // pred_region
        %s313 = ssub.s32 %s18, 1
        // Predicated region
        $region13: #{tpu_custom_call.1} parent=11 // pred_check
          %p314 = pneg %p56
        $region14: #{tpu_custom_call.1} parent=11 // pred_check_branch
          %316 = sbr.rel (%p314) target = $region16
        $region15: #{tpu_custom_call.1} parent=11 // pred_region
          %p317 = scmp.lt.s32.totalorder %s27, 0
          %s318 = scalar_select %p317, %s27, 0
          %s319 = smul.addr %s318, 8
          %s320 = scalar_lea.vmem %s0, %s319
        $region16: #{tpu_custom_call.1} parent=11 // pred_fallthru
          _
        // Predicated region
        $region17: #{tpu_custom_call.1} parent=11 // pred_check
          %p321 = pneg %p105
        $region18: #{tpu_custom_call.1} parent=11 // pred_check_branch
          %323 = sbr.rel (%p321) target = $region20
        $region19: #{tpu_custom_call.1} parent=11 // pred_region
          _
        $region20: #{tpu_custom_call.1} parent=11 // pred_fallthru
          _
        // Predicated region
        $region21: #{tpu_custom_call.1} parent=11 // pred_check
          %p324 = pneg %p126
        $region22: #{tpu_custom_call.1} parent=11 // pred_check_branch
          %326 = sbr.rel (%p324) target = $region24
        $region23: #{tpu_custom_call.1} parent=11 // pred_region
          %s328 = ssub.s32 256, 256
          %329 = vsyncadd [#allocation10], %s328
          %s330 = sshll.u32 [#allocation9], 4
          %s331 = int_to_ptr.vmem [resolvable:$true] %s330
          %336 = dma.hbm_to_vmem [thread:$0]  %s3, 256, %s331, [#allocation10], 64, 64, 4
        $region24: #{tpu_custom_call.1} parent=11 // pred_fallthru
          _
        // Predicated region
        $region25: #{tpu_custom_call.1} parent=11 // pred_check
          %p337 = pneg %p147
        $region26: #{tpu_custom_call.1} parent=11 // pred_check_branch
          %339 = sbr.rel (%p337) target = $region28
        $region27: #{tpu_custom_call.1} parent=11 // pred_region
          _
        $region28: #{tpu_custom_call.1} parent=11 // pred_fallthru
          _
        // Predicated region
        $region29: #{tpu_custom_call.1} parent=11 // pred_check
          %p340 = pneg %p168
        $region30: #{tpu_custom_call.1} parent=11 // pred_check_branch
          %342 = sbr.rel (%p340) target = $region32
        $region31: #{tpu_custom_call.1} parent=11 // pred_region
          _
        $region32: #{tpu_custom_call.1} parent=11 // pred_fallthru
          _
        // Predicated region
        $region33: #{tpu_custom_call.1} parent=11 // pred_check
          %p343 = pneg %p189
        $region34: #{tpu_custom_call.1} parent=11 // pred_check_branch
          %345 = sbr.rel (%p343) target = $region36
        $region35: #{tpu_custom_call.1} parent=11 // pred_region
          _
        $region36: #{tpu_custom_call.1} parent=11 // pred_fallthru
          _
        // Predicated region
        $region37: #{tpu_custom_call.1} parent=11 // pred_check
          %p346 = pneg %p210
        $region38: #{tpu_custom_call.1} parent=11 // pred_check_branch
          %348 = sbr.rel (%p346) target = $region40
        $region39: #{tpu_custom_call.1} parent=11 // pred_region
          _
        $region40: #{tpu_custom_call.1} parent=11 // pred_fallthru
          _
        // Predicated region
        $region41: #{tpu_custom_call.1} parent=11 // pred_check
          %p349 = pneg %p231
        $region42: #{tpu_custom_call.1} parent=11 // pred_check_branch
          %351 = sbr.rel (%p349) target = $region44
        $region43: #{tpu_custom_call.1} parent=11 // pred_region
          _
        $region44: #{tpu_custom_call.1} parent=11 // pred_fallthru
          _
        // Predicated region
        $region45: #{tpu_custom_call.1} parent=11 // pred_check
          %p352 = pneg %p252
        $region46: #{tpu_custom_call.1} parent=11 // pred_check_branch
          %354 = sbr.rel (%p352) target = $region48
        $region47: #{tpu_custom_call.1} parent=11 // pred_region
          _
        $region48: #{tpu_custom_call.1} parent=11 // pred_fallthru
          _
        // Predicated region
        $region49: #{tpu_custom_call.1} parent=11 // pred_check
          %p355 = pneg %p273
        $region50: #{tpu_custom_call.1} parent=11 // pred_check_branch
          %357 = sbr.rel (%p355) target = $region52
        $region51: #{tpu_custom_call.1} parent=11 // pred_region
          _
        $region52: #{tpu_custom_call.1} parent=11 // pred_fallthru
          _
      $region12: #{tpu_custom_call.1} parent=5 // pred_fallthru
        _
      %p358 = scmp.lt.s32.totalorder %s18, 2
      // Predicated region
      $region53: #{tpu_custom_call.1} parent=5 // pred_check
        %p359 = pneg %p358
      $region54: #{tpu_custom_call.1} parent=5 // pred_check_branch
        %361 = sbr.rel (%p359) target = $region56
      $region55: #{tpu_custom_call.1} parent=5 // pred_region
        // Predicated region
        $region57: #{tpu_custom_call.1} parent=55 // pred_check
          %p362 = pneg %p78
        $region58: #{tpu_custom_call.1} parent=55 // pred_check_branch
          %364 = sbr.rel (%p362) target = $region60
        $region59: #{tpu_custom_call.1} parent=55 // pred_region
          %s365 = smul.u32 4, %s26
          %p366 = scmp.lt.s32.totalorder %s25, 0
          %s367 = scalar_select %p366, %s25, 0
          %p368 = scmp.lt.s32.totalorder %s365, 7
          %s369 = scalar_select %p368, %s365, 7
          %s370 = smul.addr %s367, 8
          %s371 = sadd.s32 %s369, %s370
          %s372 = smul.addr %s371, 4
          %s373 = scalar_lea.vmem %s1, %s372
          %s374 = smul.u32 4, %s26
        $region60: #{tpu_custom_call.1} parent=55 // pred_fallthru
          _
      $region56: #{tpu_custom_call.1} parent=5 // pred_fallthru
        _
      %p375 = scmp.le.s32.totalorder 1, %s18
      %p376 = scmp.lt.s32.totalorder %s18, 3
      %p377 = pnand %p375, %p376
      %p378 = pneg %p377
      // Predicated region
      $region61: #{tpu_custom_call.1} parent=5 // pred_check
        _
      $region62: #{tpu_custom_call.1} parent=5 // pred_check_branch
        %380 = sbr.rel (%p377) target = $region64
      $region63: #{tpu_custom_call.1} parent=5 // pred_region
        %s381 = ssub.s32 %s18, 1
        // Predicated region
        $region65: #{tpu_custom_call.1} parent=63 // pred_check
          %p382 = pneg %p126
        $region66: #{tpu_custom_call.1} parent=63 // pred_check_branch
          %384 = sbr.rel (%p382) target = $region68
        $region67: #{tpu_custom_call.1} parent=63 // pred_region
          %385 = dma.done [#allocation10], 256
        $region68: #{tpu_custom_call.1} parent=63 // pred_fallthru
          _
        %p386 = scmp.lt.s32.totalorder %s27, 0
        %s387 = scalar_select %p386, %s27, 0
        %s388 = smul.addr %s387, 8
        %s389 = scalar_lea.vmem %s0, %s388
        %p390 = pneg %p56
        %p391 = pneg %p53
        %s392 = smul.u32 4, %s28
        %p393 = scmp.lt.s32.totalorder %s27, 0
        %s394 = scalar_select %p393, %s27, 0
        %p395 = scmp.lt.s32.totalorder %s392, 7
        %s396 = scalar_select %p395, %s392, 7
        %s397 = smul.addr %s394, 8
        %s398 = sadd.s32 %s396, %s397
        %s399 = smul.addr %s398, 4
        %s400 = scalar_lea.vmem %s1, %s399
        %p401 = pneg %p84
        %p402 = pneg %p81
        %p403 = pneg %p105
        %p404 = pneg %p102
        %p405 = pneg %p126
        %p406 = pneg %p123
        %p407 = pneg %p147
        %p408 = pneg %p144
        %p409 = pneg %p168
        %p410 = pneg %p165
        %p411 = pneg %p189
        %p412 = pneg %p186
        %p413 = pneg %p210
        %p414 = pneg %p207
        %p415 = pneg %p231
        %p416 = pneg %p228
        %p417 = pneg %p252
        %p418 = pneg %p249
        %p419 = pneg %p273
        %p420 = pneg %p270
        %p421 = pneg %p299
        %p422 = pneg %p296
        %p423 = scmp.lt.s32.totalorder %s27, 0
        %s424 = scalar_select %p423, %s27, 0
        %s425 = smul.addr %s424, 8
        %s426 = scalar_lea.vmem %s11, %s425
        %p427 = scmp.lt.s32.totalorder %s27, 0
        %s428 = scalar_select %p427, %s27, 0
        %s429 = smul.addr %s428, 8
        %s430 = scalar_lea.vmem %s0, %s429
        %s431 = smul.u32 4, %s28
        %p432 = scmp.lt.s32.totalorder %s27, 0
        %s433 = scalar_select %p432, %s27, 0
        %p434 = scmp.lt.s32.totalorder %s431, 7
        %s435 = scalar_select %p434, %s431, 7
        %s436 = smul.addr %s433, 8
        %s437 = sadd.s32 %s435, %s436
        %s438 = smul.addr %s437, 4
        %s439 = scalar_lea.vmem %s1, %s438
        %s440 = smul.u32 4, %s28
        %p441 = scmp.lt.s32.totalorder %s27, 0
        %s442 = scalar_select %p441, %s27, 0
        %s443 = smul.addr %s442, 8
        %s444 = scalar_lea.vmem %s11, %s443
        %p446 = scmp.eq.s32.totalorder %s28, 0
        // Predicated region
        $region69: #{tpu_custom_call.1} parent=63 // pred_check
          %p447 = pneg %p446
        $region70: #{tpu_custom_call.1} parent=63 // pred_check_branch
          %449 = sbr.rel (%p447) target = $region72
        $region71: #{tpu_custom_call.1} parent=63 // pred_region
          %vm450 = vcmask 261120
          %451 = vst.msk [vmem:[#allocation2] sm:$0xff] %vm450, 0.0
          %452 = vst.msk [vmem:[#allocation3] sm:$0xff] %vm450, 0.0
          %453 = vst.msk [vmem:[#allocation4] sm:$0xff] %vm450, 0.0
          %454 = vst.msk [vmem:[#allocation5] sm:$0xff] %vm450, 0.0
          %455 = vst.msk [vmem:[#allocation6] sm:$0xff] %vm450, 0.0
          %456 = vst.msk [vmem:[#allocation7] sm:$0xff] %vm450, 0.0
        $region72: #{tpu_custom_call.1} parent=63 // pred_fallthru
          _
        %v457 = vld [vmem:[%s439] sm:$0xf]
        %v458 = vld [vmem:[%s439 + $0x4] sm:$0xf]
        %v459 = vld [vmem:[%s439 + $0x8] sm:$0xf]
        %v460 = vld [vmem:[%s439 + $0xc] sm:$0xf]
        %v461 = vld [vmem:[%s2] sm:$0xf]
        %v462 = vld [vmem:[%s2 + $0x4] sm:$0xf]
        %v463 = vld [vmem:[%s4] sm:$0x1]
        %v465 = vlaneseq
        %v466 = vshrl.u32 %v465, 7
        %v467 = vsub.s32 0, %v466
        %v468 = vrot.slane %v463, %v467
        %v474 = vunpack.c.l.b16 %v457
        %v475 = vunpack.c.l.b16 %v458
        %v476 = vunpack.c.l.b16 %v459
        %v477 = vunpack.c.l.b16 %v460
        %v478 = vpack.c.b16 %v475, %v474
        %v479 = vpack.c.b16 %v477, %v476
        %v482 = vunpack.c.l.b16 %v461
        %v483 = vunpack.c.l.b16 %v462
        %v484 = vpack.c.b16 %v483, %v482
        %vm486 = vcmask 130048
        %v488 = vsel %vm486, %v478, 0
        %v491 = vsel %vm486, %v479, 0
        %493 = vmatprep.subr.bf16.mxu0 0
        %494 = vmatpush1.bf16.msra.mxu0 %v484
        %495 = vmatprep.subr.bf16.mxu0 0
        %496 = vmatpush1.bf16.msra.mxu0 0
        %497 = vmatprep.subr.bf16.mxu0 0
        %498 = vmatpush1.bf16.msra.mxu0 0
        %499 = vmatprep.subr.bf16.mxu0 0
        %500 = vmatpush1.bf16.msra.mxu0 0
        %501 = vmatprep.subr.bf16.mxu0 0
        %502 = vmatpush1.bf16.msra.mxu0 0
        %503 = vmatprep.subr.bf16.mxu0 0
        %504 = vmatpush1.bf16.msra.mxu0 0
        %505 = vmatprep.subr.bf16.mxu0 0
        %506 = vmatpush1.bf16.msra.mxu0 0
        %507 = vmatprep.subr.bf16.mxu0 0
        %508 = vmatpush1.bf16.msra.mxu0 0
        %509 = vmatprep.subr.bf16.mxu0 0
        %510 = vmatpush1.bf16.msra.mxu0 0
        %511 = vmatprep.subr.bf16.mxu0 0
        %512 = vmatpush1.bf16.msra.mxu0 0
        %513 = vmatprep.subr.bf16.mxu0 0
        %514 = vmatpush1.bf16.msra.mxu0 0
        %515 = vmatprep.subr.bf16.mxu0 0
        %516 = vmatpush1.bf16.msra.mxu0 0
        %517 = vmatprep.subr.bf16.mxu0 0
        %518 = vmatpush1.bf16.msra.mxu0 0
        %519 = vmatprep.subr.bf16.mxu0 0
        %520 = vmatpush1.bf16.msra.mxu0 0
        %521 = vmatprep.subr.bf16.mxu0 0
        %522 = vmatpush1.bf16.msra.mxu0 0
        %523 = vmatprep.subr.bf16.mxu0 0
        %524 = vmatpush1.bf16.msra.mxu0 0
        %525 = vmatprep.mubr.bf16.mxu0 0
        %526 = vmatmul.mubr.bf16.gmra.mrb[0].mxu0 %v488
        %v527 = vpop.f32.mrb[0].mxu0
        %v528 = vadd.f32 %v468, %v527
        %v529 = vpop.f32.mrb[0].mxu0
        %v530 = vpop.f32.mrb[0].mxu0
        %v531 = vadd.f32 %v468, %v530
        %v532 = vpop.f32.mrb[0].mxu0
        %533 = vmatprep.mubr.bf16.mxu0 0
        %534 = vmatmul.mubr.bf16.gmra.mrb[0].mxu0 %v491
        %v535 = vpop.f32.mrb[0].mxu0
        %v536 = vadd.f32 %v468, %v535
        %v537 = vpop.f32.mrb[0].mxu0
        %v538 = vpop.f32.mrb[0].mxu0
        %v539 = vadd.f32 %v468, %v538
        %v540 = vpop.f32.mrb[0].mxu0
        %541 = vdwg.mxu0
        %542 = vst [vmem:[#allocation8] sm:$0xff] %v528
        %543 = vst [vmem:[#allocation8 + $0x8] sm:$0xff] %v531
        %544 = vst [vmem:[#allocation8 + $0x10] sm:$0xff] %v536
        %545 = vst [vmem:[#allocation8 + $0x18] sm:$0xff] %v539
        %v546 = vlaneseq
        %v547 = vand.u32 %v546, 127
        %vm548 = vcmp.ge.s32.totalorder %v547, 64
        %vm549 = vcmp.lt.s32.totalorder %v547, 96
        %vm550 = vmand %vm548, %vm549
        %v551 = vsel %vm550, 1.0, 0.5
        %v552 = vsel %vm550, 0.0, 0.5
        %v553 = vld [vmem:[%s430] sm:$0xff]
        %v554 = vld [vmem:[#allocation2] sm:$0xff]
        %v555 = vld [vmem:[#allocation3] sm:$0xff]
        %v556 = vld [vmem:[#allocation4] sm:$0xff]
        %v557 = vld [vmem:[#allocation5] sm:$0xff]
        %v558 = vld [vmem:[#allocation6] sm:$0xff]
        %v559 = vld [vmem:[#allocation7] sm:$0xff]
        %s560 = smul.u32 %s28, 4
        %v561 = vstv %s560
        %vm562 = vcmp.lt.s32.totalorder %v561, %v553
        %v563 = vld [vmem:[#allocation8] sm:$0xff]
        %v564 = vpack.c.bf16 %v554, %v554
        %v565 = vld [vmem:[#allocation9] sm:$0xf]
        %v566 = vld [vmem:[#allocation9 + $0x4] sm:$0xf]
        %v567 = vld [vmem:[#allocation9 + $0x8] sm:$0xf]
        %v568 = vld [vmem:[#allocation9 + $0xc] sm:$0xf]
        %v573 = vunpack.c.l.b16 %v565
        %v574 = vunpack.c.l.b16 %v566
        %v575 = vunpack.c.l.b16 %v567
        %v576 = vunpack.c.l.b16 %v568
        %v577 = vpack.c.b16 %v574, %v573
        %v578 = vpack.c.b16 %v576, %v575
        %vm581 = vcmask 261120
        %v583 = vsel %vm581, %v564, 0
        %585 = vmatprep.subr.bf16.mxu0 0
        %586 = vmatpush1.bf16.msra.mxu0 %v577
        %587 = vmatprep.subr.bf16.mxu0 0
        %588 = vmatpush1.bf16.msra.mxu0 %v578
        %589 = vmatprep.subr.bf16.mxu0 0
        %590 = vmatpush1.bf16.msra.mxu0 0
        %591 = vmatprep.subr.bf16.mxu0 0
        %592 = vmatpush1.bf16.msra.mxu0 0
        %593 = vmatprep.subr.bf16.mxu0 0
        %594 = vmatpush1.bf16.msra.mxu0 0
        %595 = vmatprep.subr.bf16.mxu0 0
        %596 = vmatpush1.bf16.msra.mxu0 0
        %597 = vmatprep.subr.bf16.mxu0 0
        %598 = vmatpush1.bf16.msra.mxu0 0
        %599 = vmatprep.subr.bf16.mxu0 0
        %600 = vmatpush1.bf16.msra.mxu0 0
        %601 = vmatprep.subr.bf16.mxu0 0
        %602 = vmatpush1.bf16.msra.mxu0 0
        %603 = vmatprep.subr.bf16.mxu0 0
        %604 = vmatpush1.bf16.msra.mxu0 0
        %605 = vmatprep.subr.bf16.mxu0 0
        %606 = vmatpush1.bf16.msra.mxu0 0
        %607 = vmatprep.subr.bf16.mxu0 0
        %608 = vmatpush1.bf16.msra.mxu0 0
        %609 = vmatprep.subr.bf16.mxu0 0
        %610 = vmatpush1.bf16.msra.mxu0 0
        %611 = vmatprep.subr.bf16.mxu0 0
        %612 = vmatpush1.bf16.msra.mxu0 0
        %613 = vmatprep.subr.bf16.mxu0 0
        %614 = vmatpush1.bf16.msra.mxu0 0
        %615 = vmatprep.subr.bf16.mxu0 0
        %616 = vmatpush1.bf16.msra.mxu0 0
        %617 = vmatprep.mubr.bf16.mxu0 0
        %618 = vmatmul.mubr.bf16.gmra.mrb[0].mxu0 %v583
        %v619 = vpop.f32.mrb[0].mxu0
        %v620 = vadd.f32 0.0, %v619
        %v621 = vpop.f32.mrb[0].mxu0
        %v622 = vpop.f32.mrb[0].mxu0
        %v623 = vpop.f32.mrb[0].mxu0
        %624 = vdwg.mxu0
        %v625 = vadd.f32 %v563, %v620
        %v626 = vmul.f32 %v551, %v625
        %v627 = vtanh.pop %v626
        %v628 = vmul.f32 %v551, %v627
        %v629 = vadd.f32 %v628, %v552
        %631 = vrot.lane.b32.xlu0 %v555, 32
        %v632 = vpop.permute.xlu0 %631
        %v634 = vmul.f32 %v629, %v632
        %636 = vrot.lane.b32.xlu0 %v629, 64
        %v637 = vpop.permute.xlu0 %636
        %v639 = vmul.f32 %v629, %v637
        %641 = vrot.lane.b32.xlu0 %v639, 32
        %v642 = vpop.permute.xlu0 %641
        %v644 = vadd.f32 %v634, %v642
        %v645 = vtanh.pop %v644
        %647 = vrot.lane.b32.xlu0 %v645, 64
        %v648 = vpop.permute.xlu0 %647
        %v650 = vmul.f32 %v629, %v648
        %v651 = vsel %vm562, 1, 0
        %652 = vset.pattern.permute.xlu0 0
        %653 = vperm.xlu0 %652, %v651
        %v654 = vpop.permute.xlu0 %653
        %vm655 = vcmp.eq.s32.totalorder %v654, 1
        %657 = vrot.lane.b32.xlu0 %v554, 96
        %v658 = vpop.permute.xlu0 %657
        %v660 = vsel %vm655, %v650, %v658
        %v661 = vsel %vm655, %v644, %v632
        %663 = vrot.lane.b32.xlu0 %v660, 32
        %v664 = vpop.permute.xlu0 %663
        %667 = vrot.lane.b32.xlu0 %v556, 32
        %v668 = vpop.permute.xlu0 %667
        %v670 = vsel %vm581, %v664, %v668
        %v671 = vpack.c.bf16 %v670, %v670
        %v672 = vld [vmem:[%s5] sm:$0xf]
        %v673 = vld [vmem:[%s5 + $0x4] sm:$0xf]
        %v674 = vld [vmem:[%s5 + $0x8] sm:$0xf]
        %v675 = vld [vmem:[%s5 + $0xc] sm:$0xf]
        %v676 = vld [vmem:[%s5 + $0x10] sm:$0xf]
        %v677 = vld [vmem:[%s5 + $0x14] sm:$0xf]
        %v678 = vld [vmem:[%s5 + $0x18] sm:$0xf]
        %v679 = vld [vmem:[%s5 + $0x1c] sm:$0xf]
        %v680 = vld [vmem:[%s6] sm:$0x1]
        %v682 = vlaneseq
        %v683 = vshrl.u32 %v682, 7
        %v684 = vsub.s32 0, %v683
        %v685 = vrot.slane %v680, %v684
        %v695 = vunpack.c.l.b16 %v672
        %v696 = vunpack.c.l.b16 %v673
        %v697 = vunpack.c.l.b16 %v674
        %v698 = vunpack.c.l.b16 %v675
        %v699 = vunpack.c.l.b16 %v676
        %v700 = vunpack.c.l.b16 %v677
        %v701 = vunpack.c.l.b16 %v678
        %v702 = vunpack.c.l.b16 %v679
        %v703 = vpack.c.b16 %v696, %v695
        %v704 = vpack.c.b16 %v698, %v697
        %v705 = vpack.c.b16 %v700, %v699
        %v706 = vpack.c.b16 %v702, %v701
        %vm711 = vcmask 523264
        %v713 = vsel %vm711, %v671, 0
        %715 = vmatprep.subr.bf16.mxu0 0
        %716 = vmatpush1.bf16.msra.mxu0 %v703
        %717 = vmatprep.subr.bf16.mxu0 0
        %718 = vmatpush1.bf16.msra.mxu0 %v704
        %719 = vmatprep.subr.bf16.mxu0 0
        %720 = vmatpush1.bf16.msra.mxu0 %v705
        %721 = vmatprep.subr.bf16.mxu0 0
        %722 = vmatpush1.bf16.msra.mxu0 %v706
        %723 = vmatprep.subr.bf16.mxu0 0
        %724 = vmatpush1.bf16.msra.mxu0 0
        %725 = vmatprep.subr.bf16.mxu0 0
        %726 = vmatpush1.bf16.msra.mxu0 0
        %727 = vmatprep.subr.bf16.mxu0 0
        %728 = vmatpush1.bf16.msra.mxu0 0
        %729 = vmatprep.subr.bf16.mxu0 0
        %730 = vmatpush1.bf16.msra.mxu0 0
        %731 = vmatprep.subr.bf16.mxu0 0
        %732 = vmatpush1.bf16.msra.mxu0 0
        %733 = vmatprep.subr.bf16.mxu0 0
        %734 = vmatpush1.bf16.msra.mxu0 0
        %735 = vmatprep.subr.bf16.mxu0 0
        %736 = vmatpush1.bf16.msra.mxu0 0
        %737 = vmatprep.subr.bf16.mxu0 0
        %738 = vmatpush1.bf16.msra.mxu0 0
        %739 = vmatprep.subr.bf16.mxu0 0
        %740 = vmatpush1.bf16.msra.mxu0 0
        %741 = vmatprep.subr.bf16.mxu0 0
        %742 = vmatpush1.bf16.msra.mxu0 0
        %743 = vmatprep.subr.bf16.mxu0 0
        %744 = vmatpush1.bf16.msra.mxu0 0
        %745 = vmatprep.subr.bf16.mxu0 0
        %746 = vmatpush1.bf16.msra.mxu0 0
        %747 = vmatprep.mubr.bf16.mxu0 0
        %748 = vmatmul.mubr.bf16.gmra.mrb[0].mxu0 %v713
        %v749 = vpop.f32.mrb[0].mxu0
        %v750 = vadd.f32 %v685, %v749
        %v751 = vpop.f32.mrb[0].mxu0
        %v752 = vpop.f32.mrb[0].mxu0
        %v753 = vpop.f32.mrb[0].mxu0
        %754 = vdwg.mxu0
        %v755 = vmul.f32 %v551, %v750
        %v756 = vtanh.pop %v755
        %v757 = vmul.f32 %v551, %v756
        %v758 = vadd.f32 %v757, %v552
        %760 = vrot.lane.b32.xlu0 %v557, 32
        %v761 = vpop.permute.xlu0 %760
        %v763 = vmul.f32 %v758, %v761
        %765 = vrot.lane.b32.xlu0 %v758, 64
        %v766 = vpop.permute.xlu0 %765
        %v768 = vmul.f32 %v758, %v766
        %770 = vrot.lane.b32.xlu0 %v768, 32
        %v771 = vpop.permute.xlu0 %770
        %v773 = vadd.f32 %v763, %v771
        %v774 = vtanh.pop %v773
        %776 = vrot.lane.b32.xlu0 %v774, 64
        %v777 = vpop.permute.xlu0 %776
        %v779 = vmul.f32 %v758, %v777
        %780 = vrot.lane.b32.xlu0 %v556, 96
        %v781 = vpop.permute.xlu0 %780
        %v783 = vsel %vm655, %v779, %v781
        %v784 = vsel %vm655, %v773, %v761
        %786 = vrot.lane.b32.xlu0 %v783, 32
        %v787 = vpop.permute.xlu0 %786
        %790 = vrot.lane.b32.xlu0 %v558, 32
        %v791 = vpop.permute.xlu0 %790
        %v793 = vsel %vm581, %v787, %v791
        %v794 = vpack.c.bf16 %v793, %v793
        %v795 = vld [vmem:[%s7] sm:$0xf]
        %v796 = vld [vmem:[%s7 + $0x4] sm:$0xf]
        %v797 = vld [vmem:[%s7 + $0x8] sm:$0xf]
        %v798 = vld [vmem:[%s7 + $0xc] sm:$0xf]
        %v799 = vld [vmem:[%s7 + $0x10] sm:$0xf]
        %v800 = vld [vmem:[%s7 + $0x14] sm:$0xf]
        %v801 = vld [vmem:[%s7 + $0x18] sm:$0xf]
        %v802 = vld [vmem:[%s7 + $0x1c] sm:$0xf]
        %v803 = vld [vmem:[%s8] sm:$0x1]
        %v805 = vlaneseq
        %v806 = vshrl.u32 %v805, 7
        %v807 = vsub.s32 0, %v806
        %v808 = vrot.slane %v803, %v807
        %v818 = vunpack.c.l.b16 %v795
        %v819 = vunpack.c.l.b16 %v796
        %v820 = vunpack.c.l.b16 %v797
        %v821 = vunpack.c.l.b16 %v798
        %v822 = vunpack.c.l.b16 %v799
        %v823 = vunpack.c.l.b16 %v800
        %v824 = vunpack.c.l.b16 %v801
        %v825 = vunpack.c.l.b16 %v802
        %v826 = vpack.c.b16 %v819, %v818
        %v827 = vpack.c.b16 %v821, %v820
        %v828 = vpack.c.b16 %v823, %v822
        %v829 = vpack.c.b16 %v825, %v824
        %v835 = vsel %vm711, %v794, 0
        %837 = vmatprep.subr.bf16.mxu0 0
        %838 = vmatpush1.bf16.msra.mxu0 %v826
        %839 = vmatprep.subr.bf16.mxu0 0
        %840 = vmatpush1.bf16.msra.mxu0 %v827
        %841 = vmatprep.subr.bf16.mxu0 0
        %842 = vmatpush1.bf16.msra.mxu0 %v828
        %843 = vmatprep.subr.bf16.mxu0 0
        %844 = vmatpush1.bf16.msra.mxu0 %v829
        %845 = vmatprep.subr.bf16.mxu0 0
        %846 = vmatpush1.bf16.msra.mxu0 0
        %847 = vmatprep.subr.bf16.mxu0 0
        %848 = vmatpush1.bf16.msra.mxu0 0
        %849 = vmatprep.subr.bf16.mxu0 0
        %850 = vmatpush1.bf16.msra.mxu0 0
        %851 = vmatprep.subr.bf16.mxu0 0
        %852 = vmatpush1.bf16.msra.mxu0 0
        %853 = vmatprep.subr.bf16.mxu0 0
        %854 = vmatpush1.bf16.msra.mxu0 0
        %855 = vmatprep.subr.bf16.mxu0 0
        %856 = vmatpush1.bf16.msra.mxu0 0
        %857 = vmatprep.subr.bf16.mxu0 0
        %858 = vmatpush1.bf16.msra.mxu0 0
        %859 = vmatprep.subr.bf16.mxu0 0
        %860 = vmatpush1.bf16.msra.mxu0 0
        %861 = vmatprep.subr.bf16.mxu0 0
        %862 = vmatpush1.bf16.msra.mxu0 0
        %863 = vmatprep.subr.bf16.mxu0 0
        %864 = vmatpush1.bf16.msra.mxu0 0
        %865 = vmatprep.subr.bf16.mxu0 0
        %866 = vmatpush1.bf16.msra.mxu0 0
        %867 = vmatprep.subr.bf16.mxu0 0
        %868 = vmatpush1.bf16.msra.mxu0 0
        %869 = vmatprep.mubr.bf16.mxu0 0
        %870 = vmatmul.mubr.bf16.gmra.mrb[0].mxu0 %v835
        %v871 = vpop.f32.mrb[0].mxu0
        %v872 = vadd.f32 %v808, %v871
        %v873 = vpop.f32.mrb[0].mxu0
        %v874 = vpop.f32.mrb[0].mxu0
        %v875 = vpop.f32.mrb[0].mxu0
        %876 = vdwg.mxu0
        %v877 = vmul.f32 %v551, %v872
        %v878 = vtanh.pop %v877
        %v879 = vmul.f32 %v551, %v878
        %v880 = vadd.f32 %v879, %v552
        %882 = vrot.lane.b32.xlu0 %v559, 32
        %v883 = vpop.permute.xlu0 %882
        %v885 = vmul.f32 %v880, %v883
        %887 = vrot.lane.b32.xlu0 %v880, 64
        %v888 = vpop.permute.xlu0 %887
        %v890 = vmul.f32 %v880, %v888
        %892 = vrot.lane.b32.xlu0 %v890, 32
        %v893 = vpop.permute.xlu0 %892
        %v895 = vadd.f32 %v885, %v893
        %v896 = vtanh.pop %v895
        %898 = vrot.lane.b32.xlu0 %v896, 64
        %v899 = vpop.permute.xlu0 %898
        %v901 = vmul.f32 %v880, %v899
        %902 = vrot.lane.b32.xlu0 %v558, 96
        %v903 = vpop.permute.xlu0 %902
        %v905 = vsel %vm655, %v901, %v903
        %v906 = vsel %vm655, %v895, %v883
        %s907 = sadd.s32 %s560, 1
        %v908 = vstv %s907
        %vm909 = vcmp.lt.s32.totalorder %v908, %v553
        %s910 = scalar_lea.vmem [#allocation8], 8
        %v911 = vld [vmem:[%s910] sm:$0xff]
        %v912 = vpack.c.bf16 %v660, %v660
        %914 = vrot.lane.b32.xlu0 %v912, 32
        %v915 = vpop.permute.xlu0 %914
        %v917 = vsel %vm581, %v915, 0
        %919 = vmatprep.subr.bf16.mxu0 0
        %920 = vmatpush1.bf16.msra.mxu0 %v577
        %921 = vmatprep.subr.bf16.mxu0 0
        %922 = vmatpush1.bf16.msra.mxu0 %v578
        %923 = vmatprep.subr.bf16.mxu0 0
        %924 = vmatpush1.bf16.msra.mxu0 0
        %925 = vmatprep.subr.bf16.mxu0 0
        %926 = vmatpush1.bf16.msra.mxu0 0
        %927 = vmatprep.subr.bf16.mxu0 0
        %928 = vmatpush1.bf16.msra.mxu0 0
        %929 = vmatprep.subr.bf16.mxu0 0
        %930 = vmatpush1.bf16.msra.mxu0 0
        %931 = vmatprep.subr.bf16.mxu0 0
        %932 = vmatpush1.bf16.msra.mxu0 0
        %933 = vmatprep.subr.bf16.mxu0 0
        %934 = vmatpush1.bf16.msra.mxu0 0
        %935 = vmatprep.subr.bf16.mxu0 0
        %936 = vmatpush1.bf16.msra.mxu0 0
        %937 = vmatprep.subr.bf16.mxu0 0
        %938 = vmatpush1.bf16.msra.mxu0 0
        %939 = vmatprep.subr.bf16.mxu0 0
        %940 = vmatpush1.bf16.msra.mxu0 0
        %941 = vmatprep.subr.bf16.mxu0 0
        %942 = vmatpush1.bf16.msra.mxu0 0
        %943 = vmatprep.subr.bf16.mxu0 0
        %944 = vmatpush1.bf16.msra.mxu0 0
        %945 = vmatprep.subr.bf16.mxu0 0
        %946 = vmatpush1.bf16.msra.mxu0 0
        %947 = vmatprep.subr.bf16.mxu0 0
        %948 = vmatpush1.bf16.msra.mxu0 0
        %949 = vmatprep.subr.bf16.mxu0 0
        %950 = vmatpush1.bf16.msra.mxu0 0
        %951 = vmatprep.mubr.bf16.mxu0 0
        %952 = vmatmul.mubr.bf16.gmra.mrb[0].mxu0 %v917
        %v953 = vpop.f32.mrb[0].mxu0
        %v954 = vadd.f32 0.0, %v953
        %v955 = vpop.f32.mrb[0].mxu0
        %v956 = vpop.f32.mrb[0].mxu0
        %v957 = vpop.f32.mrb[0].mxu0
        %958 = vdwg.mxu0
        %v959 = vadd.f32 %v911, %v954
        %v960 = vmul.f32 %v551, %v959
        %v961 = vtanh.pop %v960
        %v962 = vmul.f32 %v551, %v961
        %v963 = vadd.f32 %v962, %v552
        %v964 = vmul.f32 %v963, %v661
        %966 = vrot.lane.b32.xlu0 %v963, 64
        %v967 = vpop.permute.xlu0 %966
        %v969 = vmul.f32 %v963, %v967
        %971 = vrot.lane.b32.xlu0 %v969, 32
        %v972 = vpop.permute.xlu0 %971
        %v974 = vadd.f32 %v964, %v972
        %v975 = vtanh.pop %v974
        %977 = vrot.lane.b32.xlu0 %v975, 64
        %v978 = vpop.permute.xlu0 %977
        %v980 = vmul.f32 %v963, %v978
        %v981 = vsel %vm909, 1, 0
        %982 = vset.pattern.permute.xlu0 0
        %983 = vperm.xlu0 %982, %v981
        %v984 = vpop.permute.xlu0 %983
        %vm985 = vcmp.eq.s32.totalorder %v984, 1
        %v986 = vsel %vm985, %v980, %v660
        %v987 = vsel %vm985, %v974, %v661
        %989 = vrot.lane.b32.xlu0 %v986, 32
        %v990 = vpop.permute.xlu0 %989
        %992 = vrot.lane.b32.xlu0 %v783, 64
        %v993 = vpop.permute.xlu0 %992
        %v995 = vsel %vm581, %v990, %v993
        %v996 = vpack.c.bf16 %v995, %v995
        %v998 = vsel %vm711, %v996, 0
        %1000 = vmatprep.subr.bf16.mxu0 0
        %1001 = vmatpush1.bf16.msra.mxu0 %v703
        %1002 = vmatprep.subr.bf16.mxu0 0
        %1003 = vmatpush1.bf16.msra.mxu0 %v704
        %1004 = vmatprep.subr.bf16.mxu0 0
        %1005 = vmatpush1.bf16.msra.mxu0 %v705
        %1006 = vmatprep.subr.bf16.mxu0 0
        %1007 = vmatpush1.bf16.msra.mxu0 %v706
        %1008 = vmatprep.subr.bf16.mxu0 0
        %1009 = vmatpush1.bf16.msra.mxu0 0
        %1010 = vmatprep.subr.bf16.mxu0 0
        %1011 = vmatpush1.bf16.msra.mxu0 0
        %1012 = vmatprep.subr.bf16.mxu0 0
        %1013 = vmatpush1.bf16.msra.mxu0 0
        %1014 = vmatprep.subr.bf16.mxu0 0
        %1015 = vmatpush1.bf16.msra.mxu0 0
        %1016 = vmatprep.subr.bf16.mxu0 0
        %1017 = vmatpush1.bf16.msra.mxu0 0
        %1018 = vmatprep.subr.bf16.mxu0 0
        %1019 = vmatpush1.bf16.msra.mxu0 0
        %1020 = vmatprep.subr.bf16.mxu0 0
        %1021 = vmatpush1.bf16.msra.mxu0 0
        %1022 = vmatprep.subr.bf16.mxu0 0
        %1023 = vmatpush1.bf16.msra.mxu0 0
        %1024 = vmatprep.subr.bf16.mxu0 0
        %1025 = vmatpush1.bf16.msra.mxu0 0
        %1026 = vmatprep.subr.bf16.mxu0 0
        %1027 = vmatpush1.bf16.msra.mxu0 0
        %1028 = vmatprep.subr.bf16.mxu0 0
        %1029 = vmatpush1.bf16.msra.mxu0 0
        %1030 = vmatprep.subr.bf16.mxu0 0
        %1031 = vmatpush1.bf16.msra.mxu0 0
        %1032 = vmatprep.mubr.bf16.mxu0 0
        %1033 = vmatmul.mubr.bf16.gmra.mrb[0].mxu0 %v998
        %v1034 = vpop.f32.mrb[0].mxu0
        %v1035 = vadd.f32 %v685, %v1034
        %v1036 = vpop.f32.mrb[0].mxu0
        %v1037 = vpop.f32.mrb[0].mxu0
        %v1038 = vpop.f32.mrb[0].mxu0
        %1039 = vdwg.mxu0
        %v1040 = vmul.f32 %v551, %v1035
        %v1041 = vtanh.pop %v1040
        %v1042 = vmul.f32 %v551, %v1041
        %v1043 = vadd.f32 %v1042, %v552
        %v1044 = vmul.f32 %v1043, %v784
        %1046 = vrot.lane.b32.xlu0 %v1043, 64
        %v1047 = vpop.permute.xlu0 %1046
        %v1049 = vmul.f32 %v1043, %v1047
        %1051 = vrot.lane.b32.xlu0 %v1049, 32
        %v1052 = vpop.permute.xlu0 %1051
        %v1054 = vadd.f32 %v1044, %v1052
        %v1055 = vtanh.pop %v1054
        %1057 = vrot.lane.b32.xlu0 %v1055, 64
        %v1058 = vpop.permute.xlu0 %1057
        %v1060 = vmul.f32 %v1043, %v1058
        %v1061 = vsel %vm985, %v1060, %v783
        %v1062 = vsel %vm985, %v1054, %v784
        %1064 = vrot.lane.b32.xlu0 %v1061, 32
        %v1065 = vpop.permute.xlu0 %1064
        %1068 = vrot.lane.b32.xlu0 %v905, 64
        %v1069 = vpop.permute.xlu0 %1068
        %v1071 = vsel %vm581, %v1065, %v1069
        %v1072 = vpack.c.bf16 %v1071, %v1071
        %v1074 = vsel %vm711, %v1072, 0
        %1076 = vmatprep.subr.bf16.mxu0 0
        %1077 = vmatpush1.bf16.msra.mxu0 %v826
        %1078 = vmatprep.subr.bf16.mxu0 0
        %1079 = vmatpush1.bf16.msra.mxu0 %v827
        %1080 = vmatprep.subr.bf16.mxu0 0
        %1081 = vmatpush1.bf16.msra.mxu0 %v828
        %1082 = vmatprep.subr.bf16.mxu0 0
        %1083 = vmatpush1.bf16.msra.mxu0 %v829
        %1084 = vmatprep.subr.bf16.mxu0 0
        %1085 = vmatpush1.bf16.msra.mxu0 0
        %1086 = vmatprep.subr.bf16.mxu0 0
        %1087 = vmatpush1.bf16.msra.mxu0 0
        %1088 = vmatprep.subr.bf16.mxu0 0
        %1089 = vmatpush1.bf16.msra.mxu0 0
        %1090 = vmatprep.subr.bf16.mxu0 0
        %1091 = vmatpush1.bf16.msra.mxu0 0
        %1092 = vmatprep.subr.bf16.mxu0 0
        %1093 = vmatpush1.bf16.msra.mxu0 0
        %1094 = vmatprep.subr.bf16.mxu0 0
        %1095 = vmatpush1.bf16.msra.mxu0 0
        %1096 = vmatprep.subr.bf16.mxu0 0
        %1097 = vmatpush1.bf16.msra.mxu0 0
        %1098 = vmatprep.subr.bf16.mxu0 0
        %1099 = vmatpush1.bf16.msra.mxu0 0
        %1100 = vmatprep.subr.bf16.mxu0 0
        %1101 = vmatpush1.bf16.msra.mxu0 0
        %1102 = vmatprep.subr.bf16.mxu0 0
        %1103 = vmatpush1.bf16.msra.mxu0 0
        %1104 = vmatprep.subr.bf16.mxu0 0
        %1105 = vmatpush1.bf16.msra.mxu0 0
        %1106 = vmatprep.subr.bf16.mxu0 0
        %1107 = vmatpush1.bf16.msra.mxu0 0
        %1108 = vmatprep.mubr.bf16.mxu0 0
        %1109 = vmatmul.mubr.bf16.gmra.mrb[0].mxu0 %v1074
        %v1110 = vpop.f32.mrb[0].mxu0
        %v1111 = vadd.f32 %v808, %v1110
        %v1112 = vpop.f32.mrb[0].mxu0
        %v1113 = vpop.f32.mrb[0].mxu0
        %v1114 = vpop.f32.mrb[0].mxu0
        %1115 = vdwg.mxu0
        %v1116 = vmul.f32 %v551, %v1111
        %v1117 = vtanh.pop %v1116
        %v1118 = vmul.f32 %v551, %v1117
        %v1119 = vadd.f32 %v1118, %v552
        %v1120 = vmul.f32 %v1119, %v906
        %1122 = vrot.lane.b32.xlu0 %v1119, 64
        %v1123 = vpop.permute.xlu0 %1122
        %v1125 = vmul.f32 %v1119, %v1123
        %1127 = vrot.lane.b32.xlu0 %v1125, 32
        %v1128 = vpop.permute.xlu0 %1127
        %v1130 = vadd.f32 %v1120, %v1128
        %v1131 = vtanh.pop %v1130
        %1133 = vrot.lane.b32.xlu0 %v1131, 64
        %v1134 = vpop.permute.xlu0 %1133
        %v1136 = vmul.f32 %v1119, %v1134
        %v1137 = vsel %vm985, %v1136, %v905
        %v1138 = vsel %vm985, %v1130, %v906
        %s1139 = sadd.s32 %s560, 2
        %v1140 = vstv %s1139
        %vm1141 = vcmp.lt.s32.totalorder %v1140, %v553
        %s1142 = scalar_lea.vmem [#allocation8], 16
        %v1143 = vld [vmem:[%s1142] sm:$0xff]
        %v1144 = vpack.c.bf16 %v986, %v986
        %1146 = vrot.lane.b32.xlu0 %v1144, 32
        %v1147 = vpop.permute.xlu0 %1146
        %v1149 = vsel %vm581, %v1147, 0
        %1151 = vmatprep.subr.bf16.mxu0 0
        %1152 = vmatpush1.bf16.msra.mxu0 %v577
        %1153 = vmatprep.subr.bf16.mxu0 0
        %1154 = vmatpush1.bf16.msra.mxu0 %v578
        %1155 = vmatprep.subr.bf16.mxu0 0
        %1156 = vmatpush1.bf16.msra.mxu0 0
        %1157 = vmatprep.subr.bf16.mxu0 0
        %1158 = vmatpush1.bf16.msra.mxu0 0
        %1159 = vmatprep.subr.bf16.mxu0 0
        %1160 = vmatpush1.bf16.msra.mxu0 0
        %1161 = vmatprep.subr.bf16.mxu0 0
        %1162 = vmatpush1.bf16.msra.mxu0 0
        %1163 = vmatprep.subr.bf16.mxu0 0
        %1164 = vmatpush1.bf16.msra.mxu0 0
        %1165 = vmatprep.subr.bf16.mxu0 0
        %1166 = vmatpush1.bf16.msra.mxu0 0
        %1167 = vmatprep.subr.bf16.mxu0 0
        %1168 = vmatpush1.bf16.msra.mxu0 0
        %1169 = vmatprep.subr.bf16.mxu0 0
        %1170 = vmatpush1.bf16.msra.mxu0 0
        %1171 = vmatprep.subr.bf16.mxu0 0
        %1172 = vmatpush1.bf16.msra.mxu0 0
        %1173 = vmatprep.subr.bf16.mxu0 0
        %1174 = vmatpush1.bf16.msra.mxu0 0
        %1175 = vmatprep.subr.bf16.mxu0 0
        %1176 = vmatpush1.bf16.msra.mxu0 0
        %1177 = vmatprep.subr.bf16.mxu0 0
        %1178 = vmatpush1.bf16.msra.mxu0 0
        %1179 = vmatprep.subr.bf16.mxu0 0
        %1180 = vmatpush1.bf16.msra.mxu0 0
        %1181 = vmatprep.subr.bf16.mxu0 0
        %1182 = vmatpush1.bf16.msra.mxu0 0
        %1183 = vmatprep.mubr.bf16.mxu0 0
        %1184 = vmatmul.mubr.bf16.gmra.mrb[0].mxu0 %v1149
        %v1185 = vpop.f32.mrb[0].mxu0
        %v1186 = vadd.f32 0.0, %v1185
        %v1187 = vpop.f32.mrb[0].mxu0
        %v1188 = vpop.f32.mrb[0].mxu0
        %v1189 = vpop.f32.mrb[0].mxu0
        %1190 = vdwg.mxu0
        %v1191 = vadd.f32 %v1143, %v1186
        %v1192 = vmul.f32 %v551, %v1191
        %v1193 = vtanh.pop %v1192
        %v1194 = vmul.f32 %v551, %v1193
        %v1195 = vadd.f32 %v1194, %v552
        %v1196 = vmul.f32 %v1195, %v987
        %1198 = vrot.lane.b32.xlu0 %v1195, 64
        %v1199 = vpop.permute.xlu0 %1198
        %v1201 = vmul.f32 %v1195, %v1199
        %1203 = vrot.lane.b32.xlu0 %v1201, 32
        %v1204 = vpop.permute.xlu0 %1203
        %v1206 = vadd.f32 %v1196, %v1204
        %v1207 = vtanh.pop %v1206
        %1209 = vrot.lane.b32.xlu0 %v1207, 64
        %v1210 = vpop.permute.xlu0 %1209
        %v1212 = vmul.f32 %v1195, %v1210
        %v1213 = vsel %vm1141, 1, 0
        %1214 = vset.pattern.permute.xlu0 0
        %1215 = vperm.xlu0 %1214, %v1213
        %v1216 = vpop.permute.xlu0 %1215
        %vm1217 = vcmp.eq.s32.totalorder %v1216, 1
        %v1218 = vsel %vm1217, %v1212, %v986
        %v1219 = vsel %vm1217, %v1206, %v987
        %1221 = vrot.lane.b32.xlu0 %v1218, 32
        %v1222 = vpop.permute.xlu0 %1221
        %1224 = vrot.lane.b32.xlu0 %v1061, 64
        %v1225 = vpop.permute.xlu0 %1224
        %v1227 = vsel %vm581, %v1222, %v1225
        %v1228 = vpack.c.bf16 %v1227, %v1227
        %v1230 = vsel %vm711, %v1228, 0
        %1232 = vmatprep.subr.bf16.mxu0 0
        %1233 = vmatpush1.bf16.msra.mxu0 %v703
        %1234 = vmatprep.subr.bf16.mxu0 0
        %1235 = vmatpush1.bf16.msra.mxu0 %v704
        %1236 = vmatprep.subr.bf16.mxu0 0
        %1237 = vmatpush1.bf16.msra.mxu0 %v705
        %1238 = vmatprep.subr.bf16.mxu0 0
        %1239 = vmatpush1.bf16.msra.mxu0 %v706
        %1240 = vmatprep.subr.bf16.mxu0 0
        %1241 = vmatpush1.bf16.msra.mxu0 0
        %1242 = vmatprep.subr.bf16.mxu0 0
        %1243 = vmatpush1.bf16.msra.mxu0 0
        %1244 = vmatprep.subr.bf16.mxu0 0
        %1245 = vmatpush1.bf16.msra.mxu0 0
        %1246 = vmatprep.subr.bf16.mxu0 0
        %1247 = vmatpush1.bf16.msra.mxu0 0
        %1248 = vmatprep.subr.bf16.mxu0 0
        %1249 = vmatpush1.bf16.msra.mxu0 0
        %1250 = vmatprep.subr.bf16.mxu0 0
        %1251 = vmatpush1.bf16.msra.mxu0 0
        %1252 = vmatprep.subr.bf16.mxu0 0
        %1253 = vmatpush1.bf16.msra.mxu0 0
        %1254 = vmatprep.subr.bf16.mxu0 0
        %1255 = vmatpush1.bf16.msra.mxu0 0
        %1256 = vmatprep.subr.bf16.mxu0 0
        %1257 = vmatpush1.bf16.msra.mxu0 0
        %1258 = vmatprep.subr.bf16.mxu0 0
        %1259 = vmatpush1.bf16.msra.mxu0 0
        %1260 = vmatprep.subr.bf16.mxu0 0
        %1261 = vmatpush1.bf16.msra.mxu0 0
        %1262 = vmatprep.subr.bf16.mxu0 0
        %1263 = vmatpush1.bf16.msra.mxu0 0
        %1264 = vmatprep.mubr.bf16.mxu0 0
        %1265 = vmatmul.mubr.bf16.gmra.mrb[0].mxu0 %v1230
        %v1266 = vpop.f32.mrb[0].mxu0
        %v1267 = vadd.f32 %v685, %v1266
        %v1268 = vpop.f32.mrb[0].mxu0
        %v1269 = vpop.f32.mrb[0].mxu0
        %v1270 = vpop.f32.mrb[0].mxu0
        %1271 = vdwg.mxu0
        %v1272 = vmul.f32 %v551, %v1267
        %v1273 = vtanh.pop %v1272
        %v1274 = vmul.f32 %v551, %v1273
        %v1275 = vadd.f32 %v1274, %v552
        %v1276 = vmul.f32 %v1275, %v1062
        %1278 = vrot.lane.b32.xlu0 %v1275, 64
        %v1279 = vpop.permute.xlu0 %1278
        %v1281 = vmul.f32 %v1275, %v1279
        %1283 = vrot.lane.b32.xlu0 %v1281, 32
        %v1284 = vpop.permute.xlu0 %1283
        %v1286 = vadd.f32 %v1276, %v1284
        %v1287 = vtanh.pop %v1286
        %1289 = vrot.lane.b32.xlu0 %v1287, 64
        %v1290 = vpop.permute.xlu0 %1289
        %v1292 = vmul.f32 %v1275, %v1290
        %v1293 = vsel %vm1217, %v1292, %v1061
        %v1294 = vsel %vm1217, %v1286, %v1062
        %1296 = vrot.lane.b32.xlu0 %v1293, 32
        %v1297 = vpop.permute.xlu0 %1296
        %1300 = vrot.lane.b32.xlu0 %v1137, 64
        %v1301 = vpop.permute.xlu0 %1300
        %v1303 = vsel %vm581, %v1297, %v1301
        %v1304 = vpack.c.bf16 %v1303, %v1303
        %v1306 = vsel %vm711, %v1304, 0
        %1308 = vmatprep.subr.bf16.mxu0 0
        %1309 = vmatpush1.bf16.msra.mxu0 %v826
        %1310 = vmatprep.subr.bf16.mxu0 0
        %1311 = vmatpush1.bf16.msra.mxu0 %v827
        %1312 = vmatprep.subr.bf16.mxu0 0
        %1313 = vmatpush1.bf16.msra.mxu0 %v828
        %1314 = vmatprep.subr.bf16.mxu0 0
        %1315 = vmatpush1.bf16.msra.mxu0 %v829
        %1316 = vmatprep.subr.bf16.mxu0 0
        %1317 = vmatpush1.bf16.msra.mxu0 0
        %1318 = vmatprep.subr.bf16.mxu0 0
        %1319 = vmatpush1.bf16.msra.mxu0 0
        %1320 = vmatprep.subr.bf16.mxu0 0
        %1321 = vmatpush1.bf16.msra.mxu0 0
        %1322 = vmatprep.subr.bf16.mxu0 0
        %1323 = vmatpush1.bf16.msra.mxu0 0
        %1324 = vmatprep.subr.bf16.mxu0 0
        %1325 = vmatpush1.bf16.msra.mxu0 0
        %1326 = vmatprep.subr.bf16.mxu0 0
        %1327 = vmatpush1.bf16.msra.mxu0 0
        %1328 = vmatprep.subr.bf16.mxu0 0
        %1329 = vmatpush1.bf16.msra.mxu0 0
        %1330 = vmatprep.subr.bf16.mxu0 0
        %1331 = vmatpush1.bf16.msra.mxu0 0
        %1332 = vmatprep.subr.bf16.mxu0 0
        %1333 = vmatpush1.bf16.msra.mxu0 0
        %1334 = vmatprep.subr.bf16.mxu0 0
        %1335 = vmatpush1.bf16.msra.mxu0 0
        %1336 = vmatprep.subr.bf16.mxu0 0
        %1337 = vmatpush1.bf16.msra.mxu0 0
        %1338 = vmatprep.subr.bf16.mxu0 0
        %1339 = vmatpush1.bf16.msra.mxu0 0
        %1340 = vmatprep.mubr.bf16.mxu0 0
        %1341 = vmatmul.mubr.bf16.gmra.mrb[0].mxu0 %v1306
        %v1342 = vpop.f32.mrb[0].mxu0
        %v1343 = vadd.f32 %v808, %v1342
        %v1344 = vpop.f32.mrb[0].mxu0
        %v1345 = vpop.f32.mrb[0].mxu0
        %v1346 = vpop.f32.mrb[0].mxu0
        %1347 = vdwg.mxu0
        %v1348 = vmul.f32 %v551, %v1343
        %v1349 = vtanh.pop %v1348
        %v1350 = vmul.f32 %v551, %v1349
        %v1351 = vadd.f32 %v1350, %v552
        %v1352 = vmul.f32 %v1351, %v1138
        %1354 = vrot.lane.b32.xlu0 %v1351, 64
        %v1355 = vpop.permute.xlu0 %1354
        %v1357 = vmul.f32 %v1351, %v1355
        %1359 = vrot.lane.b32.xlu0 %v1357, 32
        %v1360 = vpop.permute.xlu0 %1359
        %v1362 = vadd.f32 %v1352, %v1360
        %v1363 = vtanh.pop %v1362
        %1365 = vrot.lane.b32.xlu0 %v1363, 64
        %v1366 = vpop.permute.xlu0 %1365
        %v1368 = vmul.f32 %v1351, %v1366
        %v1369 = vsel %vm1217, %v1368, %v1137
        %v1370 = vsel %vm1217, %v1362, %v1138
        %s1371 = sadd.s32 %s560, 3
        %v1372 = vstv %s1371
        %vm1373 = vcmp.lt.s32.totalorder %v1372, %v553
        %s1374 = scalar_lea.vmem [#allocation8], 24
        %v1375 = vld [vmem:[%s1374] sm:$0xff]
        %v1376 = vpack.c.bf16 %v1218, %v1218
        %1378 = vrot.lane.b32.xlu0 %v1376, 32
        %v1379 = vpop.permute.xlu0 %1378
        %v1381 = vsel %vm581, %v1379, 0
        %1383 = vmatprep.subr.bf16.mxu0 0
        %1384 = vmatpush1.bf16.msra.mxu0 %v577
        %1385 = vmatprep.subr.bf16.mxu0 0
        %1386 = vmatpush1.bf16.msra.mxu0 %v578
        %1387 = vmatprep.subr.bf16.mxu0 0
        %1388 = vmatpush1.bf16.msra.mxu0 0
        %1389 = vmatprep.subr.bf16.mxu0 0
        %1390 = vmatpush1.bf16.msra.mxu0 0
        %1391 = vmatprep.subr.bf16.mxu0 0
        %1392 = vmatpush1.bf16.msra.mxu0 0
        %1393 = vmatprep.subr.bf16.mxu0 0
        %1394 = vmatpush1.bf16.msra.mxu0 0
        %1395 = vmatprep.subr.bf16.mxu0 0
        %1396 = vmatpush1.bf16.msra.mxu0 0
        %1397 = vmatprep.subr.bf16.mxu0 0
        %1398 = vmatpush1.bf16.msra.mxu0 0
        %1399 = vmatprep.subr.bf16.mxu0 0
        %1400 = vmatpush1.bf16.msra.mxu0 0
        %1401 = vmatprep.subr.bf16.mxu0 0
        %1402 = vmatpush1.bf16.msra.mxu0 0
        %1403 = vmatprep.subr.bf16.mxu0 0
        %1404 = vmatpush1.bf16.msra.mxu0 0
        %1405 = vmatprep.subr.bf16.mxu0 0
        %1406 = vmatpush1.bf16.msra.mxu0 0
        %1407 = vmatprep.subr.bf16.mxu0 0
        %1408 = vmatpush1.bf16.msra.mxu0 0
        %1409 = vmatprep.subr.bf16.mxu0 0
        %1410 = vmatpush1.bf16.msra.mxu0 0
        %1411 = vmatprep.subr.bf16.mxu0 0
        %1412 = vmatpush1.bf16.msra.mxu0 0
        %1413 = vmatprep.subr.bf16.mxu0 0
        %1414 = vmatpush1.bf16.msra.mxu0 0
        %1415 = vmatprep.mubr.bf16.mxu0 0
        %1416 = vmatmul.mubr.bf16.gmra.mrb[0].mxu0 %v1381
        %v1417 = vpop.f32.mrb[0].mxu0
        %v1418 = vadd.f32 0.0, %v1417
        %v1419 = vpop.f32.mrb[0].mxu0
        %v1420 = vpop.f32.mrb[0].mxu0
        %v1421 = vpop.f32.mrb[0].mxu0
        %1422 = vdwg.mxu0
        %v1423 = vadd.f32 %v1375, %v1418
        %v1424 = vmul.f32 %v551, %v1423
        %v1425 = vtanh.pop %v1424
        %v1426 = vmul.f32 %v551, %v1425
        %v1427 = vadd.f32 %v1426, %v552
        %v1428 = vmul.f32 %v1427, %v1219
        %1430 = vrot.lane.b32.xlu0 %v1427, 64
        %v1431 = vpop.permute.xlu0 %1430
        %v1433 = vmul.f32 %v1427, %v1431
        %1435 = vrot.lane.b32.xlu0 %v1433, 32
        %v1436 = vpop.permute.xlu0 %1435
        %v1438 = vadd.f32 %v1428, %v1436
        %v1439 = vtanh.pop %v1438
        %1441 = vrot.lane.b32.xlu0 %v1439, 64
        %v1442 = vpop.permute.xlu0 %1441
        %v1444 = vmul.f32 %v1427, %v1442
        %v1445 = vsel %vm1373, 1, 0
        %1446 = vset.pattern.permute.xlu0 0
        %1447 = vperm.xlu0 %1446, %v1445
        %v1448 = vpop.permute.xlu0 %1447
        %vm1449 = vcmp.eq.s32.totalorder %v1448, 1
        %v1450 = vsel %vm1449, %v1444, %v1218
        %v1451 = vsel %vm1449, %v1438, %v1219
        %1453 = vrot.lane.b32.xlu0 %v1450, 32
        %v1454 = vpop.permute.xlu0 %1453
        %1456 = vrot.lane.b32.xlu0 %v1293, 64
        %v1457 = vpop.permute.xlu0 %1456
        %v1459 = vsel %vm581, %v1454, %v1457
        %v1460 = vpack.c.bf16 %v1459, %v1459
        %v1462 = vsel %vm711, %v1460, 0
        %1464 = vmatprep.subr.bf16.mxu0 0
        %1465 = vmatpush1.bf16.msra.mxu0 %v703
        %1466 = vmatprep.subr.bf16.mxu0 0
        %1467 = vmatpush1.bf16.msra.mxu0 %v704
        %1468 = vmatprep.subr.bf16.mxu0 0
        %1469 = vmatpush1.bf16.msra.mxu0 %v705
        %1470 = vmatprep.subr.bf16.mxu0 0
        %1471 = vmatpush1.bf16.msra.mxu0 %v706
        %1472 = vmatprep.subr.bf16.mxu0 0
        %1473 = vmatpush1.bf16.msra.mxu0 0
        %1474 = vmatprep.subr.bf16.mxu0 0
        %1475 = vmatpush1.bf16.msra.mxu0 0
        %1476 = vmatprep.subr.bf16.mxu0 0
        %1477 = vmatpush1.bf16.msra.mxu0 0
        %1478 = vmatprep.subr.bf16.mxu0 0
        %1479 = vmatpush1.bf16.msra.mxu0 0
        %1480 = vmatprep.subr.bf16.mxu0 0
        %1481 = vmatpush1.bf16.msra.mxu0 0
        %1482 = vmatprep.subr.bf16.mxu0 0
        %1483 = vmatpush1.bf16.msra.mxu0 0
        %1484 = vmatprep.subr.bf16.mxu0 0
        %1485 = vmatpush1.bf16.msra.mxu0 0
        %1486 = vmatprep.subr.bf16.mxu0 0
        %1487 = vmatpush1.bf16.msra.mxu0 0
        %1488 = vmatprep.subr.bf16.mxu0 0
        %1489 = vmatpush1.bf16.msra.mxu0 0
        %1490 = vmatprep.subr.bf16.mxu0 0
        %1491 = vmatpush1.bf16.msra.mxu0 0
        %1492 = vmatprep.subr.bf16.mxu0 0
        %1493 = vmatpush1.bf16.msra.mxu0 0
        %1494 = vmatprep.subr.bf16.mxu0 0
        %1495 = vmatpush1.bf16.msra.mxu0 0
        %1496 = vmatprep.mubr.bf16.mxu0 0
        %1497 = vmatmul.mubr.bf16.gmra.mrb[0].mxu0 %v1462
        %v1498 = vpop.f32.mrb[0].mxu0
        %v1499 = vadd.f32 %v685, %v1498
        %v1500 = vpop.f32.mrb[0].mxu0
        %v1501 = vpop.f32.mrb[0].mxu0
        %v1502 = vpop.f32.mrb[0].mxu0
        %1503 = vdwg.mxu0
        %v1504 = vmul.f32 %v551, %v1499
        %v1505 = vtanh.pop %v1504
        %v1506 = vmul.f32 %v551, %v1505
        %v1507 = vadd.f32 %v1506, %v552
        %v1508 = vmul.f32 %v1507, %v1294
        %1510 = vrot.lane.b32.xlu0 %v1507, 64
        %v1511 = vpop.permute.xlu0 %1510
        %v1513 = vmul.f32 %v1507, %v1511
        %1515 = vrot.lane.b32.xlu0 %v1513, 32
        %v1516 = vpop.permute.xlu0 %1515
        %v1518 = vadd.f32 %v1508, %v1516
        %v1519 = vtanh.pop %v1518
        %1521 = vrot.lane.b32.xlu0 %v1519, 64
        %v1522 = vpop.permute.xlu0 %1521
        %v1524 = vmul.f32 %v1507, %v1522
        %v1525 = vsel %vm1449, %v1524, %v1293
        %v1526 = vsel %vm1449, %v1518, %v1294
        %1528 = vrot.lane.b32.xlu0 %v1525, 32
        %v1529 = vpop.permute.xlu0 %1528
        %1532 = vrot.lane.b32.xlu0 %v1369, 64
        %v1533 = vpop.permute.xlu0 %1532
        %v1535 = vsel %vm581, %v1529, %v1533
        %v1536 = vpack.c.bf16 %v1535, %v1535
        %v1538 = vsel %vm711, %v1536, 0
        %1540 = vmatprep.subr.bf16.mxu0 0
        %1541 = vmatpush1.bf16.msra.mxu0 %v826
        %1542 = vmatprep.subr.bf16.mxu0 0
        %1543 = vmatpush1.bf16.msra.mxu0 %v827
        %1544 = vmatprep.subr.bf16.mxu0 0
        %1545 = vmatpush1.bf16.msra.mxu0 %v828
        %1546 = vmatprep.subr.bf16.mxu0 0
        %1547 = vmatpush1.bf16.msra.mxu0 %v829
        %1548 = vmatprep.subr.bf16.mxu0 0
        %1549 = vmatpush1.bf16.msra.mxu0 0
        %1550 = vmatprep.subr.bf16.mxu0 0
        %1551 = vmatpush1.bf16.msra.mxu0 0
        %1552 = vmatprep.subr.bf16.mxu0 0
        %1553 = vmatpush1.bf16.msra.mxu0 0
        %1554 = vmatprep.subr.bf16.mxu0 0
        %1555 = vmatpush1.bf16.msra.mxu0 0
        %1556 = vmatprep.subr.bf16.mxu0 0
        %1557 = vmatpush1.bf16.msra.mxu0 0
        %1558 = vmatprep.subr.bf16.mxu0 0
        %1559 = vmatpush1.bf16.msra.mxu0 0
        %1560 = vmatprep.subr.bf16.mxu0 0
        %1561 = vmatpush1.bf16.msra.mxu0 0
        %1562 = vmatprep.subr.bf16.mxu0 0
        %1563 = vmatpush1.bf16.msra.mxu0 0
        %1564 = vmatprep.subr.bf16.mxu0 0
        %1565 = vmatpush1.bf16.msra.mxu0 0
        %1566 = vmatprep.subr.bf16.mxu0 0
        %1567 = vmatpush1.bf16.msra.mxu0 0
        %1568 = vmatprep.subr.bf16.mxu0 0
        %1569 = vmatpush1.bf16.msra.mxu0 0
        %1570 = vmatprep.subr.bf16.mxu0 0
        %1571 = vmatpush1.bf16.msra.mxu0 0
        %1572 = vmatprep.mubr.bf16.mxu0 0
        %1573 = vmatmul.mubr.bf16.gmra.mrb[0].mxu0 %v1538
        %v1574 = vpop.f32.mrb[0].mxu0
        %v1575 = vadd.f32 %v808, %v1574
        %v1576 = vpop.f32.mrb[0].mxu0
        %v1577 = vpop.f32.mrb[0].mxu0
        %v1578 = vpop.f32.mrb[0].mxu0
        %1579 = vdwg.mxu0
        %v1580 = vmul.f32 %v551, %v1575
        %v1581 = vtanh.pop %v1580
        %v1582 = vmul.f32 %v551, %v1581
        %v1583 = vadd.f32 %v1582, %v552
        %v1584 = vmul.f32 %v1583, %v1370
        %1586 = vrot.lane.b32.xlu0 %v1583, 64
        %v1587 = vpop.permute.xlu0 %1586
        %v1589 = vmul.f32 %v1583, %v1587
        %1591 = vrot.lane.b32.xlu0 %v1589, 32
        %v1592 = vpop.permute.xlu0 %1591
        %v1594 = vadd.f32 %v1584, %v1592
        %v1595 = vtanh.pop %v1594
        %1597 = vrot.lane.b32.xlu0 %v1595, 64
        %v1598 = vpop.permute.xlu0 %1597
        %v1600 = vmul.f32 %v1583, %v1598
        %v1601 = vsel %vm1449, %v1600, %v1369
        %v1602 = vsel %vm1449, %v1594, %v1370
        %1603 = vst.msk [vmem:[#allocation2] sm:$0xff] %vm581, %v1454
        %1605 = vrot.lane.b32.xlu0 %v1451, 96
        %v1606 = vpop.permute.xlu0 %1605
        %1608 = vst.msk [vmem:[#allocation3] sm:$0xff] %vm581, %v1606
        %1609 = vst.msk [vmem:[#allocation4] sm:$0xff] %vm581, %v1529
        %1611 = vrot.lane.b32.xlu0 %v1526, 96
        %v1612 = vpop.permute.xlu0 %1611
        %1614 = vst.msk [vmem:[#allocation5] sm:$0xff] %vm581, %v1612
        %1616 = vrot.lane.b32.xlu0 %v1601, 32
        %v1617 = vpop.permute.xlu0 %1616
        %1619 = vst.msk [vmem:[#allocation6] sm:$0xff] %vm581, %v1617
        %1621 = vrot.lane.b32.xlu0 %v1602, 96
        %v1622 = vpop.permute.xlu0 %1621
        %1624 = vst.msk [vmem:[#allocation7] sm:$0xff] %vm581, %v1622
        %p1625 = scmp.eq.s32.totalorder %s28, 1
        // Predicated region
        $region73: #{tpu_custom_call.1} parent=63 // pred_check
          %p1626 = pneg %p1625
        $region74: #{tpu_custom_call.1} parent=63 // pred_check_branch
          %1628 = sbr.rel (%p1626) target = $region76
        $region75: #{tpu_custom_call.1} parent=63 // pred_region
          %v1629 = vpack.c.bf16 %v1601, %v1601
          %v1630 = vld [vmem:[%s9] sm:$0xf]
          %v1631 = vld [vmem:[%s9 + $0x4] sm:$0xf]
          %v1632 = vld [vmem:[%s9 + $0x8] sm:$0xf]
          %v1633 = vld [vmem:[%s9 + $0xc] sm:$0xf]
          %v1634 = vld [vmem:[%s10] sm:$0x1]
          %v1636 = vlaneseq
          %v1637 = vshrl.u32 %v1636, 7
          %v1638 = vsub.s32 0, %v1637
          %v1639 = vrot.slane %v1634, %v1638
          %1642 = vrot.lane.b32.xlu0 %v1629, 32
          %v1643 = vpop.permute.xlu0 %1642
          %v1648 = vunpack.c.l.b16 %v1630
          %v1649 = vunpack.c.l.b16 %v1631
          %v1650 = vunpack.c.l.b16 %v1632
          %v1651 = vunpack.c.l.b16 %v1633
          %v1652 = vpack.c.b16 %v1649, %v1648
          %v1653 = vpack.c.b16 %v1651, %v1650
          %v1657 = vsel %vm581, %v1643, 0
          %1659 = vmatprep.subr.bf16.mxu0 0
          %1660 = vmatpush1.bf16.msra.mxu0 %v1652
          %1661 = vmatprep.subr.bf16.mxu0 0
          %1662 = vmatpush1.bf16.msra.mxu0 %v1653
          %1663 = vmatprep.subr.bf16.mxu0 0
          %1664 = vmatpush1.bf16.msra.mxu0 0
          %1665 = vmatprep.subr.bf16.mxu0 0
          %1666 = vmatpush1.bf16.msra.mxu0 0
          %1667 = vmatprep.subr.bf16.mxu0 0
          %1668 = vmatpush1.bf16.msra.mxu0 0
          %1669 = vmatprep.subr.bf16.mxu0 0
          %1670 = vmatpush1.bf16.msra.mxu0 0
          %1671 = vmatprep.subr.bf16.mxu0 0
          %1672 = vmatpush1.bf16.msra.mxu0 0
          %1673 = vmatprep.subr.bf16.mxu0 0
          %1674 = vmatpush1.bf16.msra.mxu0 0
          %1675 = vmatprep.subr.bf16.mxu0 0
          %1676 = vmatpush1.bf16.msra.mxu0 0
          %1677 = vmatprep.subr.bf16.mxu0 0
          %1678 = vmatpush1.bf16.msra.mxu0 0
          %1679 = vmatprep.subr.bf16.mxu0 0
          %1680 = vmatpush1.bf16.msra.mxu0 0
          %1681 = vmatprep.subr.bf16.mxu0 0
          %1682 = vmatpush1.bf16.msra.mxu0 0
          %1683 = vmatprep.subr.bf16.mxu0 0
          %1684 = vmatpush1.bf16.msra.mxu0 0
          %1685 = vmatprep.subr.bf16.mxu0 0
          %1686 = vmatpush1.bf16.msra.mxu0 0
          %1687 = vmatprep.subr.bf16.mxu0 0
          %1688 = vmatpush1.bf16.msra.mxu0 0
          %1689 = vmatprep.subr.bf16.mxu0 0
          %1690 = vmatpush1.bf16.msra.mxu0 0
          %1691 = vmatprep.mubr.bf16.mxu0 0
          %1692 = vmatmul.mubr.bf16.gmra.mrb[0].mxu0 %v1657
          %v1693 = vpop.f32.mrb[0].mxu0
          %v1694 = vadd.f32 %v1639, %v1693
          %v1695 = vpop.f32.mrb[0].mxu0
          %v1696 = vpop.f32.mrb[0].mxu0
          %v1697 = vpop.f32.mrb[0].mxu0
          %1698 = vdwg.mxu0
          %vm1699 = vcmp.ge.f32.partialorder %v1694, 0.0
          %v1700 = vmul.f32 %v1694, 0.01
          %v1701 = vsel %vm1699, %v1694, %v1700
          %vm1702 = vcmask 15360
          %1703 = vst.msk [vmem:[%s444] sm:$0xff] %vm1702, %v1701
        $region76: #{tpu_custom_call.1} parent=63 // pred_fallthru
          _
        %p1704 = scmp.lt.s32.totalorder %s27, 0
        %s1705 = scalar_select %p1704, %s27, 0
        %s1706 = smul.addr %s1705, 8
        %s1707 = scalar_lea.vmem %s11, %s1706
        // Predicated region
        $region77: #{tpu_custom_call.1} parent=63 // pred_check
          %p1708 = pneg %p296
        $region78: #{tpu_custom_call.1} parent=63 // pred_check_branch
          %1710 = sbr.rel (%p1708) target = $region80
        $region79: #{tpu_custom_call.1} parent=63 // pred_region
          _
        $region80: #{tpu_custom_call.1} parent=63 // pred_fallthru
          _
        // Predicated region
        $region81: #{tpu_custom_call.1} parent=63 // pred_check
          %p1711 = pneg %p296
        $region82: #{tpu_custom_call.1} parent=63 // pred_check_branch
          %1713 = sbr.rel (%p1711) target = $region84
        $region83: #{tpu_custom_call.1} parent=63 // pred_region
          %p1714 = scmp.lt.s32.totalorder %s27, 0
          %s1715 = scalar_select %p1714, %s27, 0
          %s1716 = smul.addr %s1715, 8
          %s1717 = scalar_lea.vmem %s11, %s1716
        $region84: #{tpu_custom_call.1} parent=63 // pred_fallthru
          _
      $region64: #{tpu_custom_call.1} parent=5 // pred_fallthru
        _
      %p1718 = scmp.le.s32.totalorder 2, %s18
      // Predicated region
      $region85: #{tpu_custom_call.1} parent=5 // pred_check
        %p1719 = pneg %p1718
      $region86: #{tpu_custom_call.1} parent=5 // pred_check_branch
        %1721 = sbr.rel (%p1719) target = $region88
      $region87: #{tpu_custom_call.1} parent=5 // pred_region
        %s1722 = ssub.s32 %s18, 2
      $region88: #{tpu_custom_call.1} parent=5 // pred_fallthru
        _
    $region6: #{tpu_custom_call.1} parent=1 // loop_footer
      %s22 = sadd.s32 1, %s18
    $region7: #{tpu_custom_call.1} parent=1 // loop_footer_branch
      %17 = sbr.rel target = $region3
    $region8: #{tpu_custom_call.1} parent=1 // loop_exit
      _
    %1723 = vsyncpa [#allocation10], 1
    %s1724 = scalar_lea.sflag [#allocation10], 1
    %1725 = vsyncpa %s1724, 1

</llo_original>
